<compile_context>
chip_gen: v7x
topology: tpu7x:2x2x1
jax: 0.10.0
libtpu: 0.0.40
codegen_flags: <defaults>
</compile_context>

<pallas_src>
import jax
import jax.numpy as jnp
from jax.experimental import pallas as pl
from jax.experimental.pallas import tpu as pltpu

NUM_FLOWS = 5


def nf_kernel(x_ref, rev_ref,
              w1_ref, b1_ref, w2_ref, b2_ref, w3_ref, b3_ref, w4_ref, b4_ref,
              zs_ref, stats_ref):
    # Transposed layout: feature dim on sublanes, batch on lanes.
    D = x_ref.shape[0]

    cur = x_ref[...]                                  # (D, Bt) f32, carried in vregs
    rev = rev_ref[...]                                # (D, D)  f32 permutation
    ld = jnp.zeros((1, cur.shape[1]), jnp.float32)    # log_det accumulator (lane-dense)

    # Static unroll of the 5 MAF flows; all flows' (bf16) weights are VMEM-resident.
    for f in range(NUM_FLOWS):
        cb = cur.astype(jnp.bfloat16)

        # MADE / ARMLP: 4 masked linears (masks pre-applied to the weights),
        # bf16 operands, f32 accumulation, f32 bias add + ReLU.
        h = jnp.dot(w1_ref[f], cb, preferred_element_type=jnp.float32) + b1_ref[f]
        h = jnp.maximum(h, 0.0)
        h = jnp.dot(w2_ref[f], h.astype(jnp.bfloat16),
                    preferred_element_type=jnp.float32) + b2_ref[f]
        h = jnp.maximum(h, 0.0)
        h = jnp.dot(w3_ref[f], h.astype(jnp.bfloat16),
                    preferred_element_type=jnp.float32) + b3_ref[f]
        h = jnp.maximum(h, 0.0)
        st = jnp.dot(w4_ref[f], h.astype(jnp.bfloat16),
                     preferred_element_type=jnp.float32) + b4_ref[f]   # (2D, Bt)

        # w4/b4 rows were pre-permuted in the wrapper, so st already holds the
        # parity-flipped s and t halves:  z = flip(x) * exp(flip(s)) + flip(t).
        s = st[:D, :]
        t = st[D:, :]

        # Parity permutation of the multiplicative input, issued right before
        # use (tiny 16x16 f32 matmul; could also be a sublane flip).
        xr = jnp.dot(rev, cur, preferred_element_type=jnp.float32)

        z = xr * jnp.exp(s) + t

        # sum(s) is invariant under the permutation (sublane reduction -> XLU).
        ld = ld + jnp.sum(s, axis=0, keepdims=True)

        zs_ref[f] = z                                  # lane-dense (D, Bt) store
        cur = z

    # Merged lane-dense stats output: row 0 = log_det, row 1 = prior log-prob.
    lp = (-0.5 * jnp.sum(cur * cur, axis=0, keepdims=True)
          - 0.5 * D * jnp.log(2.0 * jnp.pi))
    stats_ref[0:1, :] = ld
    stats_ref[1:2, :] = lp


def _pick_block_b(B):
    # Prefer >=2 lane-dense (multiple-of-128) batch tiles so v7x's two
    # TensorCores both get work; fall back to a single tile for small B.
    for cand in (512, 256, 128):
        if B % cand == 0 and B // cand >= 2:
            return cand
    for cand in (512, 256, 128):
        if B % cand == 0:
            return cand
    return B


def normalizing_flow_forward(x, params, block_b=None):
    B, D = x.shape
    F = NUM_FLOWS
    H = params["w1"].shape[-1]

    if block_b is None:
        block_b = _pick_block_b(B)
    assert B % block_b == 0, "batch must be divisible by the batch tile"
    num_b = B // block_b

    # Fold the parity reversal into the final layer:
    #   flip(x * e^s + t) = flip(x) * e^{flip(s)} + flip(t)
    # so flip the s-half and t-half output columns of w4/b4 once here.
    w4, b4 = params["w4"], params["b4"]                       # (F,H,2D), (F,1,2D)
    w4p = jnp.concatenate([w4[..., :D][..., ::-1], w4[..., D:][..., ::-1]], axis=-1)
    b4p = jnp.concatenate([b4[..., :D][..., ::-1], b4[..., D:][..., ::-1]], axis=-1)

    # Transposed ("batch on lanes") weights, cast once to bf16; biases stay f32.
    def wT(w):   # (F, in, out) -> (F, out, in) bf16
        return jnp.swapaxes(w, -1, -2).astype(jnp.bfloat16)

    def bT(b):   # (F, 1, out) -> (F, out, 1) f32
        return jnp.swapaxes(b, -1, -2).astype(jnp.float32)

    rev = jnp.eye(D, dtype=jnp.float32)[::-1]     # flip(x) = rev @ x_T
    x_t = x.T.astype(jnp.float32)                 # (D, B)

    zs_t, stats = pl.pallas_call(
        nf_kernel,
        out_shape=(
            jax.ShapeDtypeStruct((F, D, B), jnp.float32),     # zs (flows 1..5), transposed
            jax.ShapeDtypeStruct((2, B), jnp.float32),        # [log_det; prior_log_prob]
        ),
        grid_spec=pltpu.PrefetchScalarGridSpec(
            num_scalar_prefetch=0,
            grid=(num_b,),
            in_specs=[
                pl.BlockSpec((D, block_b), lambda b: (0, b)),        # x (batch-tiled)
                pl.BlockSpec((D, D), lambda b: (0, 0)),              # reversal matrix
                pl.BlockSpec((F, H, D), lambda b: (0, 0, 0)),        # w1^T (resident)
                pl.BlockSpec((F, H, 1), lambda b: (0, 0, 0)),        # b1^T
                pl.BlockSpec((F, H, H), lambda b: (0, 0, 0)),        # w2^T
                pl.BlockSpec((F, H, 1), lambda b: (0, 0, 0)),        # b2^T
                pl.BlockSpec((F, H, H), lambda b: (0, 0, 0)),        # w3^T
                pl.BlockSpec((F, H, 1), lambda b: (0, 0, 0)),        # b3^T
                pl.BlockSpec((F, 2 * D, H), lambda b: (0, 0, 0)),    # w4^T (perm folded)
                pl.BlockSpec((F, 2 * D, 1), lambda b: (0, 0, 0)),    # b4^T (perm folded)
            ],
            out_specs=(
                pl.BlockSpec((F, D, block_b), lambda b: (0, 0, b)),
                pl.BlockSpec((2, block_b), lambda b: (0, b)),
            ),
        ),
        compiler_params=pltpu.CompilerParams(
            dimension_semantics=("parallel",)),
    )(x_t, rev,
      wT(params["w1"]), bT(params["b1"]),
      wT(params["w2"]), bT(params["b2"]),
      wT(params["w3"]), bT(params["b3"]),
      wT(w4p), bT(b4p))

    zs = [x] + [zs_t[i].T for i in range(F)]
    return zs, stats[1], stats[0]


def made_masks(D, H):
    """MADE masks, natural ordering, deterministic hidden degrees."""
    m_in = jnp.arange(D)                                            # input degrees
    m_h = jnp.arange(H) % max(D - 1, 1)                             # hidden degrees
    mask_in = (m_in[:, None] <= m_h[None, :]).astype(jnp.float32)   # (D, H)
    mask_hh = (m_h[:, None] <= m_h[None, :]).astype(jnp.float32)    # (H, H)
    m_out = jnp.concatenate([m_in, m_in])                           # nout = 2*D
    mask_out = (m_h[:, None] < m_out[None, :]).astype(jnp.float32)  # (H, 2D)
    return mask_in, mask_hh, mask_out


def init_params(key, D, H, F=NUM_FLOWS):
    mask_in, mask_hh, mask_out = made_masks(D, H)
    ks = jax.random.split(key, 8)

    def rnd(k, shape, scale):
        w = jax.random.normal(k, shape, jnp.float32) * scale
        # Round to bf16-representable values so the kernel's bf16 weight copies
        # match the f32 reference weights exactly.
        return w.astype(jnp.bfloat16).astype(jnp.float32)

    return dict(
        w1=rnd(ks[0], (F, D, H), 0.2) * mask_in[None],
        b1=rnd(ks[1], (F, 1, H), 0.1),
        w2=rnd(ks[2], (F, H, H), 0.2) * mask_hh[None],
        b2=rnd(ks[3], (F, 1, H), 0.1),
        w3=rnd(ks[4], (F, H, H), 0.2) * mask_hh[None],
        b3=rnd(ks[5], (F, 1, H), 0.1),
        w4=rnd(ks[6], (F, H, 2 * D), 0.2) * mask_out[None],
        b4=rnd(ks[7], (F, 1, 2 * D), 0.1),
    )


def reference_forward(x, params):
    """Pure-JAX reference matching the PyTorch forward semantics."""
    D = x.shape[1]
    log_det = jnp.zeros(x.shape[0], jnp.float32)
    zs = [x]
    cur = x
    for i in range(NUM_FLOWS):
        h = jnp.maximum(cur @ params["w1"][i] + params["b1"][i, 0], 0.0)
        h = jnp.maximum(h @ params["w2"][i] + params["b2"][i, 0], 0.0)
        h = jnp.maximum(h @ params["w3"][i] + params["b3"][i, 0], 0.0)
        st = h @ params["w4"][i] + params["b4"][i, 0]
        s, t = st[:, :D], st[:, D:]
        z = cur * jnp.exp(s) + t
        z = z[:, ::-1]                      # parity=True flip
        log_det = log_det + jnp.sum(s, axis=1)
        zs.append(z)
        cur = z
    prior_lp = jnp.sum(-0.5 * cur * cur - 0.5 * jnp.log(2.0 * jnp.pi), axis=1)
    return zs, prior_lp, log_det


if __name__ == "__main__":
    B, D, H = 8, 16, 64  # batch, z_dim, nh (module uses nh=64)

    key = jax.random.PRNGKey(0)
    k_x, k_p = jax.random.split(key)
    x = jax.random.normal(k_x, (B, D), jnp.float32)
    params = init_params(k_p, D, H)

    zs, prior_log_prob, log_det = normalizing_flow_forward(x, params)
    jax.block_until_ready((zs, prior_log_prob, log_det))

    # Validate against the pure-JAX reference.
    zs_ref, prior_ref, ld_ref = reference_forward(x, params)
    assert len(zs) == NUM_FLOWS + 1
    for a, b in zip(zs, zs_ref):
        assert a.shape == (B, D)
        assert jnp.allclose(a, b, rtol=2e-2, atol=2e-2)
    assert prior_log_prob.shape == (B,) and log_det.shape == (B,)
    assert jnp.allclose(prior_log_prob, prior_ref, rtol=2e-2, atol=2e-2)
    assert jnp.allclose(log_det, ld_ref, rtol=2e-2, atol=2e-2)

    print("KERNEL_OK")
</pallas_src>

<mosaic_0001>
module attributes {stable_mosaic.version = 11 : i64} {
  func.func @nf_kernel(%arg0: i32, %arg1: memref<16x8xf32, #tpu.memory_space<vmem>>, %arg2: memref<16x16xf32, #tpu.memory_space<vmem>>, %arg3: memref<5x64x16xbf16, #tpu.memory_space<vmem>>, %arg4: memref<5x64x1xf32, #tpu.memory_space<vmem>>, %arg5: memref<5x64x64xbf16, #tpu.memory_space<vmem>>, %arg6: memref<5x64x1xf32, #tpu.memory_space<vmem>>, %arg7: memref<5x64x64xbf16, #tpu.memory_space<vmem>>, %arg8: memref<5x64x1xf32, #tpu.memory_space<vmem>>, %arg9: memref<5x32x64xbf16, #tpu.memory_space<vmem>>, %arg10: memref<5x32x1xf32, #tpu.memory_space<vmem>>, %arg11: memref<5x16x8xf32, #tpu.memory_space<vmem>>, %arg12: memref<2x8xf32, #tpu.memory_space<vmem>>) attributes {dimension_semantics = [#tpu.dimension_semantics<parallel>], iteration_bounds = array<i64: 1>, scalar_prefetch = 0 : i64, scratch_operands = 0 : i64, tpu.core_type = #tpu.core_type<tc>, window_params = [{transform_indices = @transform_0, window_bounds = array<i64: 16, 8>}, {pipeline_mode = #tpu.pipeline_mode<synchronous>, transform_indices = @transform_1, window_bounds = array<i64: 16, 16>}, {pipeline_mode = #tpu.pipeline_mode<synchronous>, transform_indices = @transform_2, window_bounds = array<i64: 5, 64, 16>}, {pipeline_mode = #tpu.pipeline_mode<synchronous>, transform_indices = @transform_3, window_bounds = array<i64: 5, 64, 1>}, {pipeline_mode = #tpu.pipeline_mode<synchronous>, transform_indices = @transform_4, window_bounds = array<i64: 5, 64, 64>}, {pipeline_mode = #tpu.pipeline_mode<synchronous>, transform_indices = @transform_5, window_bounds = array<i64: 5, 64, 1>}, {pipeline_mode = #tpu.pipeline_mode<synchronous>, transform_indices = @transform_6, window_bounds = array<i64: 5, 64, 64>}, {pipeline_mode = #tpu.pipeline_mode<synchronous>, transform_indices = @transform_7, window_bounds = array<i64: 5, 64, 1>}, {pipeline_mode = #tpu.pipeline_mode<synchronous>, transform_indices = @transform_8, window_bounds = array<i64: 5, 32, 64>}, {pipeline_mode = #tpu.pipeline_mode<synchronous>, transform_indices = @transform_9, window_bounds = array<i64: 5, 32, 1>}, {transform_indices = @transform_10, window_bounds = array<i64: 5, 16, 8>}, {transform_indices = @transform_11, window_bounds = array<i64: 2, 8>}]} {
    %c0 = arith.constant 0 : index
    %c0_0 = arith.constant 0 : index
    %0 = vector.load %arg1[%c0, %c0_0] : memref<16x8xf32, #tpu.memory_space<vmem>>, vector<16x8xf32>
    %c0_1 = arith.constant 0 : index
    %c0_2 = arith.constant 0 : index
    %1 = vector.load %arg2[%c0_1, %c0_2] : memref<16x16xf32, #tpu.memory_space<vmem>>, vector<16x16xf32>
    %cst = arith.constant 0.000000e+00 : f32
    %2 = vector.broadcast %cst : f32 to vector<1x8xf32>
    %3 = arith.truncf %0 : vector<16x8xf32> to vector<16x8xbf16>
    %c0_3 = arith.constant 0 : index
    %c0_4 = arith.constant 0 : index
    %c0_5 = arith.constant 0 : index
    %4 = vector.load %arg3[%c0_3, %c0_4, %c0_5] : memref<5x64x16xbf16, #tpu.memory_space<vmem>>, vector<1x64x16xbf16>
    %5 = vector.shape_cast %4 : vector<1x64x16xbf16> to vector<64x16xbf16>
    %cst_6 = arith.constant dense<0.000000e+00> : vector<64x8xf32>
    %6 = tpu.matmul %5, %3, %cst_6 {dimension_numbers = #tpu.dot_dimension_numbers<[1], [0], [0], [1], [0, 0, 1, 1], [], []>} : vector<64x16xbf16>, vector<16x8xbf16>, vector<64x8xf32> -> vector<64x8xf32>
    %c0_7 = arith.constant 0 : index
    %c0_8 = arith.constant 0 : index
    %c0_9 = arith.constant 0 : index
    %7 = vector.load %arg4[%c0_7, %c0_8, %c0_9] : memref<5x64x1xf32, #tpu.memory_space<vmem>>, vector<1x64x1xf32>
    %8 = vector.shape_cast %7 : vector<1x64x1xf32> to vector<64x1xf32>
    %9 = vector.broadcast %8 : vector<64x1xf32> to vector<64x8xf32>
    %10 = arith.addf %6, %9 : vector<64x8xf32>
    %cst_10 = arith.constant 0.000000e+00 : f32
    %11 = vector.broadcast %cst_10 : f32 to vector<64x8xf32>
    %12 = arith.maximumf %10, %11 : vector<64x8xf32>
    %c0_11 = arith.constant 0 : index
    %c0_12 = arith.constant 0 : index
    %c0_13 = arith.constant 0 : index
    %13 = vector.load %arg5[%c0_11, %c0_12, %c0_13] : memref<5x64x64xbf16, #tpu.memory_space<vmem>>, vector<1x64x64xbf16>
    %14 = vector.shape_cast %13 : vector<1x64x64xbf16> to vector<64x64xbf16>
    %15 = arith.truncf %12 : vector<64x8xf32> to vector<64x8xbf16>
    %cst_14 = arith.constant dense<0.000000e+00> : vector<64x8xf32>
    %16 = tpu.matmul %14, %15, %cst_14 {dimension_numbers = #tpu.dot_dimension_numbers<[1], [0], [0], [1], [0, 0, 1, 1], [], []>} : vector<64x64xbf16>, vector<64x8xbf16>, vector<64x8xf32> -> vector<64x8xf32>
    %c0_15 = arith.constant 0 : index
    %c0_16 = arith.constant 0 : index
    %c0_17 = arith.constant 0 : index
    %17 = vector.load %arg6[%c0_15, %c0_16, %c0_17] : memref<5x64x1xf32, #tpu.memory_space<vmem>>, vector<1x64x1xf32>
    %18 = vector.shape_cast %17 : vector<1x64x1xf32> to vector<64x1xf32>
    %19 = vector.broadcast %18 : vector<64x1xf32> to vector<64x8xf32>
    %20 = arith.addf %16, %19 : vector<64x8xf32>
    %cst_18 = arith.constant 0.000000e+00 : f32
    %21 = vector.broadcast %cst_18 : f32 to vector<64x8xf32>
    %22 = arith.maximumf %20, %21 : vector<64x8xf32>
    %c0_19 = arith.constant 0 : index
    %c0_20 = arith.constant 0 : index
    %c0_21 = arith.constant 0 : index
    %23 = vector.load %arg7[%c0_19, %c0_20, %c0_21] : memref<5x64x64xbf16, #tpu.memory_space<vmem>>, vector<1x64x64xbf16>
    %24 = vector.shape_cast %23 : vector<1x64x64xbf16> to vector<64x64xbf16>
    %25 = arith.truncf %22 : vector<64x8xf32> to vector<64x8xbf16>
    %cst_22 = arith.constant dense<0.000000e+00> : vector<64x8xf32>
    %26 = tpu.matmul %24, %25, %cst_22 {dimension_numbers = #tpu.dot_dimension_numbers<[1], [0], [0], [1], [0, 0, 1, 1], [], []>} : vector<64x64xbf16>, vector<64x8xbf16>, vector<64x8xf32> -> vector<64x8xf32>
    %c0_23 = arith.constant 0 : index
    %c0_24 = arith.constant 0 : index
    %c0_25 = arith.constant 0 : index
    %27 = vector.load %arg8[%c0_23, %c0_24, %c0_25] : memref<5x64x1xf32, #tpu.memory_space<vmem>>, vector<1x64x1xf32>
    %28 = vector.shape_cast %27 : vector<1x64x1xf32> to vector<64x1xf32>
    %29 = vector.broadcast %28 : vector<64x1xf32> to vector<64x8xf32>
    %30 = arith.addf %26, %29 : vector<64x8xf32>
    %cst_26 = arith.constant 0.000000e+00 : f32
    %31 = vector.broadcast %cst_26 : f32 to vector<64x8xf32>
    %32 = arith.maximumf %30, %31 : vector<64x8xf32>
    %c0_27 = arith.constant 0 : index
    %c0_28 = arith.constant 0 : index
    %c0_29 = arith.constant 0 : index
    %33 = vector.load %arg9[%c0_27, %c0_28, %c0_29] : memref<5x32x64xbf16, #tpu.memory_space<vmem>>, vector<1x32x64xbf16>
    %34 = vector.shape_cast %33 : vector<1x32x64xbf16> to vector<32x64xbf16>
    %35 = arith.truncf %32 : vector<64x8xf32> to vector<64x8xbf16>
    %cst_30 = arith.constant dense<0.000000e+00> : vector<32x8xf32>
    %36 = tpu.matmul %34, %35, %cst_30 {dimension_numbers = #tpu.dot_dimension_numbers<[1], [0], [0], [1], [0, 0, 1, 1], [], []>} : vector<32x64xbf16>, vector<64x8xbf16>, vector<32x8xf32> -> vector<32x8xf32>
    %c0_31 = arith.constant 0 : index
    %c0_32 = arith.constant 0 : index
    %c0_33 = arith.constant 0 : index
    %37 = vector.load %arg10[%c0_31, %c0_32, %c0_33] : memref<5x32x1xf32, #tpu.memory_space<vmem>>, vector<1x32x1xf32>
    %38 = vector.shape_cast %37 : vector<1x32x1xf32> to vector<32x1xf32>
    %39 = vector.broadcast %38 : vector<32x1xf32> to vector<32x8xf32>
    %40 = arith.addf %36, %39 : vector<32x8xf32>
    %41 = vector.extract_strided_slice %40 {offsets = [0, 0], sizes = [16, 8], strides = [1, 1]} : vector<32x8xf32> to vector<16x8xf32>
    %42 = vector.extract_strided_slice %40 {offsets = [16, 0], sizes = [16, 8], strides = [1, 1]} : vector<32x8xf32> to vector<16x8xf32>
    %cst_34 = arith.constant dense<0.000000e+00> : vector<16x8xf32>
    %43 = tpu.matmul %1, %0, %cst_34 {dimension_numbers = #tpu.dot_dimension_numbers<[1], [0], [0], [1], [0, 0, 1, 1], [], []>} : vector<16x16xf32>, vector<16x8xf32>, vector<16x8xf32> -> vector<16x8xf32>
    %44 = math.exp %41 : vector<16x8xf32>
    %45 = arith.mulf %43, %44 : vector<16x8xf32>
    %46 = arith.addf %45, %42 : vector<16x8xf32>
    %cst_35 = arith.constant dense<0.000000e+00> : vector<8xf32>
    %47 = vector.multi_reduction <add>, %41, %cst_35 [0] : vector<16x8xf32> to vector<8xf32>
    %48 = vector.shape_cast %47 : vector<8xf32> to vector<1x8xf32>
    %49 = arith.addf %2, %48 : vector<1x8xf32>
    %c0_36 = arith.constant 0 : index
    %c0_37 = arith.constant 0 : index
    %c0_38 = arith.constant 0 : index
    %50 = vector.load %arg11[%c0_36, %c0_37, %c0_38] : memref<5x16x8xf32, #tpu.memory_space<vmem>>, vector<1x16x8xf32>
    %51 = vector.shape_cast %50 : vector<1x16x8xf32> to vector<16x8xf32>
    %52 = vector.shape_cast %46 : vector<16x8xf32> to vector<1x16x8xf32>
    tpu.vector_store %arg11[%c0_36, %c0_37, %c0_38], %52 {strides = array<i32>} : memref<5x16x8xf32, #tpu.memory_space<vmem>>, vector<1x16x8xf32>,
    %53 = arith.truncf %46 : vector<16x8xf32> to vector<16x8xbf16>
    %c1 = arith.constant 1 : index
    %c0_39 = arith.constant 0 : index
    %c0_40 = arith.constant 0 : index
    %54 = vector.load %arg3[%c1, %c0_39, %c0_40] : memref<5x64x16xbf16, #tpu.memory_space<vmem>>, vector<1x64x16xbf16>
    %55 = vector.shape_cast %54 : vector<1x64x16xbf16> to vector<64x16xbf16>
    %cst_41 = arith.constant dense<0.000000e+00> : vector<64x8xf32>
    %56 = tpu.matmul %55, %53, %cst_41 {dimension_numbers = #tpu.dot_dimension_numbers<[1], [0], [0], [1], [0, 0, 1, 1], [], []>} : vector<64x16xbf16>, vector<16x8xbf16>, vector<64x8xf32> -> vector<64x8xf32>
    %c1_42 = arith.constant 1 : index
    %c0_43 = arith.constant 0 : index
    %c0_44 = arith.constant 0 : index
    %57 = vector.load %arg4[%c1_42, %c0_43, %c0_44] : memref<5x64x1xf32, #tpu.memory_space<vmem>>, vector<1x64x1xf32>
    %58 = vector.shape_cast %57 : vector<1x64x1xf32> to vector<64x1xf32>
    %59 = vector.broadcast %58 : vector<64x1xf32> to vector<64x8xf32>
    %60 = arith.addf %56, %59 : vector<64x8xf32>
    %cst_45 = arith.constant 0.000000e+00 : f32
    %61 = vector.broadcast %cst_45 : f32 to vector<64x8xf32>
    %62 = arith.maximumf %60, %61 : vector<64x8xf32>
    %c1_46 = arith.constant 1 : index
    %c0_47 = arith.constant 0 : index
    %c0_48 = arith.constant 0 : index
    %63 = vector.load %arg5[%c1_46, %c0_47, %c0_48] : memref<5x64x64xbf16, #tpu.memory_space<vmem>>, vector<1x64x64xbf16>
    %64 = vector.shape_cast %63 : vector<1x64x64xbf16> to vector<64x64xbf16>
    %65 = arith.truncf %62 : vector<64x8xf32> to vector<64x8xbf16>
    %cst_49 = arith.constant dense<0.000000e+00> : vector<64x8xf32>
    %66 = tpu.matmul %64, %65, %cst_49 {dimension_numbers = #tpu.dot_dimension_numbers<[1], [0], [0], [1], [0, 0, 1, 1], [], []>} : vector<64x64xbf16>, vector<64x8xbf16>, vector<64x8xf32> -> vector<64x8xf32>
    %c1_50 = arith.constant 1 : index
    %c0_51 = arith.constant 0 : index
    %c0_52 = arith.constant 0 : index
    %67 = vector.load %arg6[%c1_50, %c0_51, %c0_52] : memref<5x64x1xf32, #tpu.memory_space<vmem>>, vector<1x64x1xf32>
    %68 = vector.shape_cast %67 : vector<1x64x1xf32> to vector<64x1xf32>
    %69 = vector.broadcast %68 : vector<64x1xf32> to vector<64x8xf32>
    %70 = arith.addf %66, %69 : vector<64x8xf32>
    %cst_53 = arith.constant 0.000000e+00 : f32
    %71 = vector.broadcast %cst_53 : f32 to vector<64x8xf32>
    %72 = arith.maximumf %70, %71 : vector<64x8xf32>
    %c1_54 = arith.constant 1 : index
    %c0_55 = arith.constant 0 : index
    %c0_56 = arith.constant 0 : index
    %73 = vector.load %arg7[%c1_54, %c0_55, %c0_56] : memref<5x64x64xbf16, #tpu.memory_space<vmem>>, vector<1x64x64xbf16>
    %74 = vector.shape_cast %73 : vector<1x64x64xbf16> to vector<64x64xbf16>
    %75 = arith.truncf %72 : vector<64x8xf32> to vector<64x8xbf16>
    %cst_57 = arith.constant dense<0.000000e+00> : vector<64x8xf32>
    %76 = tpu.matmul %74, %75, %cst_57 {dimension_numbers = #tpu.dot_dimension_numbers<[1], [0], [0], [1], [0, 0, 1, 1], [], []>} : vector<64x64xbf16>, vector<64x8xbf16>, vector<64x8xf32> -> vector<64x8xf32>
    %c1_58 = arith.constant 1 : index
    %c0_59 = arith.constant 0 : index
    %c0_60 = arith.constant 0 : index
    %77 = vector.load %arg8[%c1_58, %c0_59, %c0_60] : memref<5x64x1xf32, #tpu.memory_space<vmem>>, vector<1x64x1xf32>
    %78 = vector.shape_cast %77 : vector<1x64x1xf32> to vector<64x1xf32>
    %79 = vector.broadcast %78 : vector<64x1xf32> to vector<64x8xf32>
    %80 = arith.addf %76, %79 : vector<64x8xf32>
    %cst_61 = arith.constant 0.000000e+00 : f32
    %81 = vector.broadcast %cst_61 : f32 to vector<64x8xf32>
    %82 = arith.maximumf %80, %81 : vector<64x8xf32>
    %c1_62 = arith.constant 1 : index
    %c0_63 = arith.constant 0 : index
    %c0_64 = arith.constant 0 : index
    %83 = vector.load %arg9[%c1_62, %c0_63, %c0_64] : memref<5x32x64xbf16, #tpu.memory_space<vmem>>, vector<1x32x64xbf16>
    %84 = vector.shape_cast %83 : vector<1x32x64xbf16> to vector<32x64xbf16>
    %85 = arith.truncf %82 : vector<64x8xf32> to vector<64x8xbf16>
    %cst_65 = arith.constant dense<0.000000e+00> : vector<32x8xf32>
    %86 = tpu.matmul %84, %85, %cst_65 {dimension_numbers = #tpu.dot_dimension_numbers<[1], [0], [0], [1], [0, 0, 1, 1], [], []>} : vector<32x64xbf16>, vector<64x8xbf16>, vector<32x8xf32> -> vector<32x8xf32>
    %c1_66 = arith.constant 1 : index
    %c0_67 = arith.constant 0 : index
    %c0_68 = arith.constant 0 : index
    %87 = vector.load %arg10[%c1_66, %c0_67, %c0_68] : memref<5x32x1xf32, #tpu.memory_space<vmem>>, vector<1x32x1xf32>
    %88 = vector.shape_cast %87 : vector<1x32x1xf32> to vector<32x1xf32>
    %89 = vector.broadcast %88 : vector<32x1xf32> to vector<32x8xf32>
    %90 = arith.addf %86, %89 : vector<32x8xf32>
    %91 = vector.extract_strided_slice %90 {offsets = [0, 0], sizes = [16, 8], strides = [1, 1]} : vector<32x8xf32> to vector<16x8xf32>
    %92 = vector.extract_strided_slice %90 {offsets = [16, 0], sizes = [16, 8], strides = [1, 1]} : vector<32x8xf32> to vector<16x8xf32>
    %cst_69 = arith.constant dense<0.000000e+00> : vector<16x8xf32>
    %93 = tpu.matmul %1, %46, %cst_69 {dimension_numbers = #tpu.dot_dimension_numbers<[1], [0], [0], [1], [0, 0, 1, 1], [], []>} : vector<16x16xf32>, vector<16x8xf32>, vector<16x8xf32> -> vector<16x8xf32>
    %94 = math.exp %91 : vector<16x8xf32>
    %95 = arith.mulf %93, %94 : vector<16x8xf32>
    %96 = arith.addf %95, %92 : vector<16x8xf32>
    %cst_70 = arith.constant dense<0.000000e+00> : vector<8xf32>
    %97 = vector.multi_reduction <add>, %91, %cst_70 [0] : vector<16x8xf32> to vector<8xf32>
    %98 = vector.shape_cast %97 : vector<8xf32> to vector<1x8xf32>
    %99 = arith.addf %49, %98 : vector<1x8xf32>
    %c1_71 = arith.constant 1 : index
    %c0_72 = arith.constant 0 : index
    %c0_73 = arith.constant 0 : index
    %100 = vector.load %arg11[%c1_71, %c0_72, %c0_73] : memref<5x16x8xf32, #tpu.memory_space<vmem>>, vector<1x16x8xf32>
    %101 = vector.shape_cast %100 : vector<1x16x8xf32> to vector<16x8xf32>
    %102 = vector.shape_cast %96 : vector<16x8xf32> to vector<1x16x8xf32>
    tpu.vector_store %arg11[%c1_71, %c0_72, %c0_73], %102 {strides = array<i32>} : memref<5x16x8xf32, #tpu.memory_space<vmem>>, vector<1x16x8xf32>,
    %103 = arith.truncf %96 : vector<16x8xf32> to vector<16x8xbf16>
    %c2 = arith.constant 2 : index
    %c0_74 = arith.constant 0 : index
    %c0_75 = arith.constant 0 : index
    %104 = vector.load %arg3[%c2, %c0_74, %c0_75] : memref<5x64x16xbf16, #tpu.memory_space<vmem>>, vector<1x64x16xbf16>
    %105 = vector.shape_cast %104 : vector<1x64x16xbf16> to vector<64x16xbf16>
    %cst_76 = arith.constant dense<0.000000e+00> : vector<64x8xf32>
    %106 = tpu.matmul %105, %103, %cst_76 {dimension_numbers = #tpu.dot_dimension_numbers<[1], [0], [0], [1], [0, 0, 1, 1], [], []>} : vector<64x16xbf16>, vector<16x8xbf16>, vector<64x8xf32> -> vector<64x8xf32>
    %c2_77 = arith.constant 2 : index
    %c0_78 = arith.constant 0 : index
    %c0_79 = arith.constant 0 : index
    %107 = vector.load %arg4[%c2_77, %c0_78, %c0_79] : memref<5x64x1xf32, #tpu.memory_space<vmem>>, vector<1x64x1xf32>
    %108 = vector.shape_cast %107 : vector<1x64x1xf32> to vector<64x1xf32>
    %109 = vector.broadcast %108 : vector<64x1xf32> to vector<64x8xf32>
    %110 = arith.addf %106, %109 : vector<64x8xf32>
    %cst_80 = arith.constant 0.000000e+00 : f32
    %111 = vector.broadcast %cst_80 : f32 to vector<64x8xf32>
    %112 = arith.maximumf %110, %111 : vector<64x8xf32>
    %c2_81 = arith.constant 2 : index
    %c0_82 = arith.constant 0 : index
    %c0_83 = arith.constant 0 : index
    %113 = vector.load %arg5[%c2_81, %c0_82, %c0_83] : memref<5x64x64xbf16, #tpu.memory_space<vmem>>, vector<1x64x64xbf16>
    %114 = vector.shape_cast %113 : vector<1x64x64xbf16> to vector<64x64xbf16>
    %115 = arith.truncf %112 : vector<64x8xf32> to vector<64x8xbf16>
    %cst_84 = arith.constant dense<0.000000e+00> : vector<64x8xf32>
    %116 = tpu.matmul %114, %115, %cst_84 {dimension_numbers = #tpu.dot_dimension_numbers<[1], [0], [0], [1], [0, 0, 1, 1], [], []>} : vector<64x64xbf16>, vector<64x8xbf16>, vector<64x8xf32> -> vector<64x8xf32>
    %c2_85 = arith.constant 2 : index
    %c0_86 = arith.constant 0 : index
    %c0_87 = arith.constant 0 : index
    %117 = vector.load %arg6[%c2_85, %c0_86, %c0_87] : memref<5x64x1xf32, #tpu.memory_space<vmem>>, vector<1x64x1xf32>
    %118 = vector.shape_cast %117 : vector<1x64x1xf32> to vector<64x1xf32>
    %119 = vector.broadcast %118 : vector<64x1xf32> to vector<64x8xf32>
    %120 = arith.addf %116, %119 : vector<64x8xf32>
    %cst_88 = arith.constant 0.000000e+00 : f32
    %121 = vector.broadcast %cst_88 : f32 to vector<64x8xf32>
    %122 = arith.maximumf %120, %121 : vector<64x8xf32>
    %c2_89 = arith.constant 2 : index
    %c0_90 = arith.constant 0 : index
    %c0_91 = arith.constant 0 : index
    %123 = vector.load %arg7[%c2_89, %c0_90, %c0_91] : memref<5x64x64xbf16, #tpu.memory_space<vmem>>, vector<1x64x64xbf16>
    %124 = vector.shape_cast %123 : vector<1x64x64xbf16> to vector<64x64xbf16>
    %125 = arith.truncf %122 : vector<64x8xf32> to vector<64x8xbf16>
    %cst_92 = arith.constant dense<0.000000e+00> : vector<64x8xf32>
    %126 = tpu.matmul %124, %125, %cst_92 {dimension_numbers = #tpu.dot_dimension_numbers<[1], [0], [0], [1], [0, 0, 1, 1], [], []>} : vector<64x64xbf16>, vector<64x8xbf16>, vector<64x8xf32> -> vector<64x8xf32>
    %c2_93 = arith.constant 2 : index
    %c0_94 = arith.constant 0 : index
    %c0_95 = arith.constant 0 : index
    %127 = vector.load %arg8[%c2_93, %c0_94, %c0_95] : memref<5x64x1xf32, #tpu.memory_space<vmem>>, vector<1x64x1xf32>
    %128 = vector.shape_cast %127 : vector<1x64x1xf32> to vector<64x1xf32>
    %129 = vector.broadcast %128 : vector<64x1xf32> to vector<64x8xf32>
    %130 = arith.addf %126, %129 : vector<64x8xf32>
    %cst_96 = arith.constant 0.000000e+00 : f32
    %131 = vector.broadcast %cst_96 : f32 to vector<64x8xf32>
    %132 = arith.maximumf %130, %131 : vector<64x8xf32>
    %c2_97 = arith.constant 2 : index
    %c0_98 = arith.constant 0 : index
    %c0_99 = arith.constant 0 : index
    %133 = vector.load %arg9[%c2_97, %c0_98, %c0_99] : memref<5x32x64xbf16, #tpu.memory_space<vmem>>, vector<1x32x64xbf16>
    %134 = vector.shape_cast %133 : vector<1x32x64xbf16> to vector<32x64xbf16>
    %135 = arith.truncf %132 : vector<64x8xf32> to vector<64x8xbf16>
    %cst_100 = arith.constant dense<0.000000e+00> : vector<32x8xf32>
    %136 = tpu.matmul %134, %135, %cst_100 {dimension_numbers = #tpu.dot_dimension_numbers<[1], [0], [0], [1], [0, 0, 1, 1], [], []>} : vector<32x64xbf16>, vector<64x8xbf16>, vector<32x8xf32> -> vector<32x8xf32>
    %c2_101 = arith.constant 2 : index
    %c0_102 = arith.constant 0 : index
    %c0_103 = arith.constant 0 : index
    %137 = vector.load %arg10[%c2_101, %c0_102, %c0_103] : memref<5x32x1xf32, #tpu.memory_space<vmem>>, vector<1x32x1xf32>
    %138 = vector.shape_cast %137 : vector<1x32x1xf32> to vector<32x1xf32>
    %139 = vector.broadcast %138 : vector<32x1xf32> to vector<32x8xf32>
    %140 = arith.addf %136, %139 : vector<32x8xf32>
    %141 = vector.extract_strided_slice %140 {offsets = [0, 0], sizes = [16, 8], strides = [1, 1]} : vector<32x8xf32> to vector<16x8xf32>
    %142 = vector.extract_strided_slice %140 {offsets = [16, 0], sizes = [16, 8], strides = [1, 1]} : vector<32x8xf32> to vector<16x8xf32>
    %cst_104 = arith.constant dense<0.000000e+00> : vector<16x8xf32>
    %143 = tpu.matmul %1, %96, %cst_104 {dimension_numbers = #tpu.dot_dimension_numbers<[1], [0], [0], [1], [0, 0, 1, 1], [], []>} : vector<16x16xf32>, vector<16x8xf32>, vector<16x8xf32> -> vector<16x8xf32>
    %144 = math.exp %141 : vector<16x8xf32>
    %145 = arith.mulf %143, %144 : vector<16x8xf32>
    %146 = arith.addf %145, %142 : vector<16x8xf32>
    %cst_105 = arith.constant dense<0.000000e+00> : vector<8xf32>
    %147 = vector.multi_reduction <add>, %141, %cst_105 [0] : vector<16x8xf32> to vector<8xf32>
    %148 = vector.shape_cast %147 : vector<8xf32> to vector<1x8xf32>
    %149 = arith.addf %99, %148 : vector<1x8xf32>
    %c2_106 = arith.constant 2 : index
    %c0_107 = arith.constant 0 : index
    %c0_108 = arith.constant 0 : index
    %150 = vector.load %arg11[%c2_106, %c0_107, %c0_108] : memref<5x16x8xf32, #tpu.memory_space<vmem>>, vector<1x16x8xf32>
    %151 = vector.shape_cast %150 : vector<1x16x8xf32> to vector<16x8xf32>
    %152 = vector.shape_cast %146 : vector<16x8xf32> to vector<1x16x8xf32>
    tpu.vector_store %arg11[%c2_106, %c0_107, %c0_108], %152 {strides = array<i32>} : memref<5x16x8xf32, #tpu.memory_space<vmem>>, vector<1x16x8xf32>,
    %153 = arith.truncf %146 : vector<16x8xf32> to vector<16x8xbf16>
    %c3 = arith.constant 3 : index
    %c0_109 = arith.constant 0 : index
    %c0_110 = arith.constant 0 : index
    %154 = vector.load %arg3[%c3, %c0_109, %c0_110] : memref<5x64x16xbf16, #tpu.memory_space<vmem>>, vector<1x64x16xbf16>
    %155 = vector.shape_cast %154 : vector<1x64x16xbf16> to vector<64x16xbf16>
    %cst_111 = arith.constant dense<0.000000e+00> : vector<64x8xf32>
    %156 = tpu.matmul %155, %153, %cst_111 {dimension_numbers = #tpu.dot_dimension_numbers<[1], [0], [0], [1], [0, 0, 1, 1], [], []>} : vector<64x16xbf16>, vector<16x8xbf16>, vector<64x8xf32> -> vector<64x8xf32>
    %c3_112 = arith.constant 3 : index
    %c0_113 = arith.constant 0 : index
    %c0_114 = arith.constant 0 : index
    %157 = vector.load %arg4[%c3_112, %c0_113, %c0_114] : memref<5x64x1xf32, #tpu.memory_space<vmem>>, vector<1x64x1xf32>
    %158 = vector.shape_cast %157 : vector<1x64x1xf32> to vector<64x1xf32>
    %159 = vector.broadcast %158 : vector<64x1xf32> to vector<64x8xf32>
    %160 = arith.addf %156, %159 : vector<64x8xf32>
    %cst_115 = arith.constant 0.000000e+00 : f32
    %161 = vector.broadcast %cst_115 : f32 to vector<64x8xf32>
    %162 = arith.maximumf %160, %161 : vector<64x8xf32>
    %c3_116 = arith.constant 3 : index
    %c0_117 = arith.constant 0 : index
    %c0_118 = arith.constant 0 : index
    %163 = vector.load %arg5[%c3_116, %c0_117, %c0_118] : memref<5x64x64xbf16, #tpu.memory_space<vmem>>, vector<1x64x64xbf16>
    %164 = vector.shape_cast %163 : vector<1x64x64xbf16> to vector<64x64xbf16>
    %165 = arith.truncf %162 : vector<64x8xf32> to vector<64x8xbf16>
    %cst_119 = arith.constant dense<0.000000e+00> : vector<64x8xf32>
    %166 = tpu.matmul %164, %165, %cst_119 {dimension_numbers = #tpu.dot_dimension_numbers<[1], [0], [0], [1], [0, 0, 1, 1], [], []>} : vector<64x64xbf16>, vector<64x8xbf16>, vector<64x8xf32> -> vector<64x8xf32>
    %c3_120 = arith.constant 3 : index
    %c0_121 = arith.constant 0 : index
    %c0_122 = arith.constant 0 : index
    %167 = vector.load %arg6[%c3_120, %c0_121, %c0_122] : memref<5x64x1xf32, #tpu.memory_space<vmem>>, vector<1x64x1xf32>
    %168 = vector.shape_cast %167 : vector<1x64x1xf32> to vector<64x1xf32>
    %169 = vector.broadcast %168 : vector<64x1xf32> to vector<64x8xf32>
    %170 = arith.addf %166, %169 : vector<64x8xf32>
    %cst_123 = arith.constant 0.000000e+00 : f32
    %171 = vector.broadcast %cst_123 : f32 to vector<64x8xf32>
    %172 = arith.maximumf %170, %171 : vector<64x8xf32>
    %c3_124 = arith.constant 3 : index
    %c0_125 = arith.constant 0 : index
    %c0_126 = arith.constant 0 : index
    %173 = vector.load %arg7[%c3_124, %c0_125, %c0_126] : memref<5x64x64xbf16, #tpu.memory_space<vmem>>, vector<1x64x64xbf16>
    %174 = vector.shape_cast %173 : vector<1x64x64xbf16> to vector<64x64xbf16>
    %175 = arith.truncf %172 : vector<64x8xf32> to vector<64x8xbf16>
    %cst_127 = arith.constant dense<0.000000e+00> : vector<64x8xf32>
    %176 = tpu.matmul %174, %175, %cst_127 {dimension_numbers = #tpu.dot_dimension_numbers<[1], [0], [0], [1], [0, 0, 1, 1], [], []>} : vector<64x64xbf16>, vector<64x8xbf16>, vector<64x8xf32> -> vector<64x8xf32>
    %c3_128 = arith.constant 3 : index
    %c0_129 = arith.constant 0 : index
    %c0_130 = arith.constant 0 : index
    %177 = vector.load %arg8[%c3_128, %c0_129, %c0_130] : memref<5x64x1xf32, #tpu.memory_space<vmem>>, vector<1x64x1xf32>
    %178 = vector.shape_cast %177 : vector<1x64x1xf32> to vector<64x1xf32>
    %179 = vector.broadcast %178 : vector<64x1xf32> to vector<64x8xf32>
    %180 = arith.addf %176, %179 : vector<64x8xf32>
    %cst_131 = arith.constant 0.000000e+00 : f32
    %181 = vector.broadcast %cst_131 : f32 to vector<64x8xf32>
    %182 = arith.maximumf %180, %181 : vector<64x8xf32>
    %c3_132 = arith.constant 3 : index
    %c0_133 = arith.constant 0 : index
    %c0_134 = arith.constant 0 : index
    %183 = vector.load %arg9[%c3_132, %c0_133, %c0_134] : memref<5x32x64xbf16, #tpu.memory_space<vmem>>, vector<1x32x64xbf16>
    %184 = vector.shape_cast %183 : vector<1x32x64xbf16> to vector<32x64xbf16>
    %185 = arith.truncf %182 : vector<64x8xf32> to vector<64x8xbf16>
    %cst_135 = arith.constant dense<0.000000e+00> : vector<32x8xf32>
    %186 = tpu.matmul %184, %185, %cst_135 {dimension_numbers = #tpu.dot_dimension_numbers<[1], [0], [0], [1], [0, 0, 1, 1], [], []>} : vector<32x64xbf16>, vector<64x8xbf16>, vector<32x8xf32> -> vector<32x8xf32>
    %c3_136 = arith.constant 3 : index
    %c0_137 = arith.constant 0 : index
    %c0_138 = arith.constant 0 : index
    %187 = vector.load %arg10[%c3_136, %c0_137, %c0_138] : memref<5x32x1xf32, #tpu.memory_space<vmem>>, vector<1x32x1xf32>
    %188 = vector.shape_cast %187 : vector<1x32x1xf32> to vector<32x1xf32>
    %189 = vector.broadcast %188 : vector<32x1xf32> to vector<32x8xf32>
    %190 = arith.addf %186, %189 : vector<32x8xf32>
    %191 = vector.extract_strided_slice %190 {offsets = [0, 0], sizes = [16, 8], strides = [1, 1]} : vector<32x8xf32> to vector<16x8xf32>
    %192 = vector.extract_strided_slice %190 {offsets = [16, 0], sizes = [16, 8], strides = [1, 1]} : vector<32x8xf32> to vector<16x8xf32>
    %cst_139 = arith.constant dense<0.000000e+00> : vector<16x8xf32>
    %193 = tpu.matmul %1, %146, %cst_139 {dimension_numbers = #tpu.dot_dimension_numbers<[1], [0], [0], [1], [0, 0, 1, 1], [], []>} : vector<16x16xf32>, vector<16x8xf32>, vector<16x8xf32> -> vector<16x8xf32>
    %194 = math.exp %191 : vector<16x8xf32>
    %195 = arith.mulf %193, %194 : vector<16x8xf32>
    %196 = arith.addf %195, %192 : vector<16x8xf32>
    %cst_140 = arith.constant dense<0.000000e+00> : vector<8xf32>
    %197 = vector.multi_reduction <add>, %191, %cst_140 [0] : vector<16x8xf32> to vector<8xf32>
    %198 = vector.shape_cast %197 : vector<8xf32> to vector<1x8xf32>
    %199 = arith.addf %149, %198 : vector<1x8xf32>
    %c3_141 = arith.constant 3 : index
    %c0_142 = arith.constant 0 : index
    %c0_143 = arith.constant 0 : index
    %200 = vector.load %arg11[%c3_141, %c0_142, %c0_143] : memref<5x16x8xf32, #tpu.memory_space<vmem>>, vector<1x16x8xf32>
    %201 = vector.shape_cast %200 : vector<1x16x8xf32> to vector<16x8xf32>
    %202 = vector.shape_cast %196 : vector<16x8xf32> to vector<1x16x8xf32>
    tpu.vector_store %arg11[%c3_141, %c0_142, %c0_143], %202 {strides = array<i32>} : memref<5x16x8xf32, #tpu.memory_space<vmem>>, vector<1x16x8xf32>,
    %203 = arith.truncf %196 : vector<16x8xf32> to vector<16x8xbf16>
    %c4 = arith.constant 4 : index
    %c0_144 = arith.constant 0 : index
    %c0_145 = arith.constant 0 : index
    %204 = vector.load %arg3[%c4, %c0_144, %c0_145] : memref<5x64x16xbf16, #tpu.memory_space<vmem>>, vector<1x64x16xbf16>
    %205 = vector.shape_cast %204 : vector<1x64x16xbf16> to vector<64x16xbf16>
    %cst_146 = arith.constant dense<0.000000e+00> : vector<64x8xf32>
    %206 = tpu.matmul %205, %203, %cst_146 {dimension_numbers = #tpu.dot_dimension_numbers<[1], [0], [0], [1], [0, 0, 1, 1], [], []>} : vector<64x16xbf16>, vector<16x8xbf16>, vector<64x8xf32> -> vector<64x8xf32>
    %c4_147 = arith.constant 4 : index
    %c0_148 = arith.constant 0 : index
    %c0_149 = arith.constant 0 : index
    %207 = vector.load %arg4[%c4_147, %c0_148, %c0_149] : memref<5x64x1xf32, #tpu.memory_space<vmem>>, vector<1x64x1xf32>
    %208 = vector.shape_cast %207 : vector<1x64x1xf32> to vector<64x1xf32>
    %209 = vector.broadcast %208 : vector<64x1xf32> to vector<64x8xf32>
    %210 = arith.addf %206, %209 : vector<64x8xf32>
    %cst_150 = arith.constant 0.000000e+00 : f32
    %211 = vector.broadcast %cst_150 : f32 to vector<64x8xf32>
    %212 = arith.maximumf %210, %211 : vector<64x8xf32>
    %c4_151 = arith.constant 4 : index
    %c0_152 = arith.constant 0 : index
    %c0_153 = arith.constant 0 : index
    %213 = vector.load %arg5[%c4_151, %c0_152, %c0_153] : memref<5x64x64xbf16, #tpu.memory_space<vmem>>, vector<1x64x64xbf16>
    %214 = vector.shape_cast %213 : vector<1x64x64xbf16> to vector<64x64xbf16>
    %215 = arith.truncf %212 : vector<64x8xf32> to vector<64x8xbf16>
    %cst_154 = arith.constant dense<0.000000e+00> : vector<64x8xf32>
    %216 = tpu.matmul %214, %215, %cst_154 {dimension_numbers = #tpu.dot_dimension_numbers<[1], [0], [0], [1], [0, 0, 1, 1], [], []>} : vector<64x64xbf16>, vector<64x8xbf16>, vector<64x8xf32> -> vector<64x8xf32>
    %c4_155 = arith.constant 4 : index
    %c0_156 = arith.constant 0 : index
    %c0_157 = arith.constant 0 : index
    %217 = vector.load %arg6[%c4_155, %c0_156, %c0_157] : memref<5x64x1xf32, #tpu.memory_space<vmem>>, vector<1x64x1xf32>
    %218 = vector.shape_cast %217 : vector<1x64x1xf32> to vector<64x1xf32>
    %219 = vector.broadcast %218 : vector<64x1xf32> to vector<64x8xf32>
    %220 = arith.addf %216, %219 : vector<64x8xf32>
    %cst_158 = arith.constant 0.000000e+00 : f32
    %221 = vector.broadcast %cst_158 : f32 to vector<64x8xf32>
    %222 = arith.maximumf %220, %221 : vector<64x8xf32>
    %c4_159 = arith.constant 4 : index
    %c0_160 = arith.constant 0 : index
    %c0_161 = arith.constant 0 : index
    %223 = vector.load %arg7[%c4_159, %c0_160, %c0_161] : memref<5x64x64xbf16, #tpu.memory_space<vmem>>, vector<1x64x64xbf16>
    %224 = vector.shape_cast %223 : vector<1x64x64xbf16> to vector<64x64xbf16>
    %225 = arith.truncf %222 : vector<64x8xf32> to vector<64x8xbf16>
    %cst_162 = arith.constant dense<0.000000e+00> : vector<64x8xf32>
    %226 = tpu.matmul %224, %225, %cst_162 {dimension_numbers = #tpu.dot_dimension_numbers<[1], [0], [0], [1], [0, 0, 1, 1], [], []>} : vector<64x64xbf16>, vector<64x8xbf16>, vector<64x8xf32> -> vector<64x8xf32>
    %c4_163 = arith.constant 4 : index
    %c0_164 = arith.constant 0 : index
    %c0_165 = arith.constant 0 : index
    %227 = vector.load %arg8[%c4_163, %c0_164, %c0_165] : memref<5x64x1xf32, #tpu.memory_space<vmem>>, vector<1x64x1xf32>
    %228 = vector.shape_cast %227 : vector<1x64x1xf32> to vector<64x1xf32>
    %229 = vector.broadcast %228 : vector<64x1xf32> to vector<64x8xf32>
    %230 = arith.addf %226, %229 : vector<64x8xf32>
    %cst_166 = arith.constant 0.000000e+00 : f32
    %231 = vector.broadcast %cst_166 : f32 to vector<64x8xf32>
    %232 = arith.maximumf %230, %231 : vector<64x8xf32>
    %c4_167 = arith.constant 4 : index
    %c0_168 = arith.constant 0 : index
    %c0_169 = arith.constant 0 : index
    %233 = vector.load %arg9[%c4_167, %c0_168, %c0_169] : memref<5x32x64xbf16, #tpu.memory_space<vmem>>, vector<1x32x64xbf16>
    %234 = vector.shape_cast %233 : vector<1x32x64xbf16> to vector<32x64xbf16>
    %235 = arith.truncf %232 : vector<64x8xf32> to vector<64x8xbf16>
    %cst_170 = arith.constant dense<0.000000e+00> : vector<32x8xf32>
    %236 = tpu.matmul %234, %235, %cst_170 {dimension_numbers = #tpu.dot_dimension_numbers<[1], [0], [0], [1], [0, 0, 1, 1], [], []>} : vector<32x64xbf16>, vector<64x8xbf16>, vector<32x8xf32> -> vector<32x8xf32>
    %c4_171 = arith.constant 4 : index
    %c0_172 = arith.constant 0 : index
    %c0_173 = arith.constant 0 : index
    %237 = vector.load %arg10[%c4_171, %c0_172, %c0_173] : memref<5x32x1xf32, #tpu.memory_space<vmem>>, vector<1x32x1xf32>
    %238 = vector.shape_cast %237 : vector<1x32x1xf32> to vector<32x1xf32>
    %239 = vector.broadcast %238 : vector<32x1xf32> to vector<32x8xf32>
    %240 = arith.addf %236, %239 : vector<32x8xf32>
    %241 = vector.extract_strided_slice %240 {offsets = [0, 0], sizes = [16, 8], strides = [1, 1]} : vector<32x8xf32> to vector<16x8xf32>
    %242 = vector.extract_strided_slice %240 {offsets = [16, 0], sizes = [16, 8], strides = [1, 1]} : vector<32x8xf32> to vector<16x8xf32>
    %cst_174 = arith.constant dense<0.000000e+00> : vector<16x8xf32>
    %243 = tpu.matmul %1, %196, %cst_174 {dimension_numbers = #tpu.dot_dimension_numbers<[1], [0], [0], [1], [0, 0, 1, 1], [], []>} : vector<16x16xf32>, vector<16x8xf32>, vector<16x8xf32> -> vector<16x8xf32>
    %244 = math.exp %241 : vector<16x8xf32>
    %245 = arith.mulf %243, %244 : vector<16x8xf32>
    %246 = arith.addf %245, %242 : vector<16x8xf32>
    %cst_175 = arith.constant dense<0.000000e+00> : vector<8xf32>
    %247 = vector.multi_reduction <add>, %241, %cst_175 [0] : vector<16x8xf32> to vector<8xf32>
    %248 = vector.shape_cast %247 : vector<8xf32> to vector<1x8xf32>
    %249 = arith.addf %199, %248 : vector<1x8xf32>
    %c4_176 = arith.constant 4 : index
    %c0_177 = arith.constant 0 : index
    %c0_178 = arith.constant 0 : index
    %250 = vector.load %arg11[%c4_176, %c0_177, %c0_178] : memref<5x16x8xf32, #tpu.memory_space<vmem>>, vector<1x16x8xf32>
    %251 = vector.shape_cast %250 : vector<1x16x8xf32> to vector<16x8xf32>
    %252 = vector.shape_cast %246 : vector<16x8xf32> to vector<1x16x8xf32>
    tpu.vector_store %arg11[%c4_176, %c0_177, %c0_178], %252 {strides = array<i32>} : memref<5x16x8xf32, #tpu.memory_space<vmem>>, vector<1x16x8xf32>,
    %253 = arith.mulf %246, %246 : vector<16x8xf32>
    %cst_179 = arith.constant dense<0.000000e+00> : vector<8xf32>
    %254 = vector.multi_reduction <add>, %253, %cst_179 [0] : vector<16x8xf32> to vector<8xf32>
    %255 = vector.shape_cast %254 : vector<8xf32> to vector<1x8xf32>
    %cst_180 = arith.constant -5.000000e-01 : f32
    %256 = vector.broadcast %cst_180 : f32 to vector<1x8xf32>
    %257 = arith.mulf %256, %255 : vector<1x8xf32>
    %cst_181 = arith.constant 6.28318548 : f32
    %258 = math.log %cst_181 : f32
    %cst_182 = arith.constant 8.000000e+00 : f32
    %259 = arith.mulf %cst_182, %258 : f32
    %260 = vector.broadcast %259 : f32 to vector<1x8xf32>
    %261 = arith.subf %257, %260 : vector<1x8xf32>
    %c0_183 = arith.constant 0 : index
    %c0_184 = arith.constant 0 : index
    %262 = vector.load %arg12[%c0_183, %c0_184] : memref<2x8xf32, #tpu.memory_space<vmem>>, vector<1x8xf32>
    tpu.vector_store %arg12[%c0_183, %c0_184], %249 {strides = array<i32>} : memref<2x8xf32, #tpu.memory_space<vmem>>, vector<1x8xf32>,
    %c1_185 = arith.constant 1 : index
    %c0_186 = arith.constant 0 : index
    %263 = vector.load %arg12[%c1_185, %c0_186] : memref<2x8xf32, #tpu.memory_space<vmem>>, vector<1x8xf32>
    tpu.vector_store %arg12[%c1_185, %c0_186], %261 {strides = array<i32>} : memref<2x8xf32, #tpu.memory_space<vmem>>, vector<1x8xf32>,
    return
  }
  func.func @transform_0(%arg0: i32) -> (i32, i32) {
    %c0_i32 = arith.constant 0 : i32
    %c0_i32_0 = arith.constant 0 : i32
    return %c0_i32, %arg0 : i32, i32
  }
  func.func @transform_1(%arg0: i32) -> (i32, i32) {
    %c0_i32 = arith.constant 0 : i32
    %c0_i32_0 = arith.constant 0 : i32
    %c0_i32_1 = arith.constant 0 : i32
    return %c0_i32, %c0_i32_0 : i32, i32
  }
  func.func @transform_2(%arg0: i32) -> (i32, i32, i32) {
    %c0_i32 = arith.constant 0 : i32
    %c0_i32_0 = arith.constant 0 : i32
    %c0_i32_1 = arith.constant 0 : i32
    %c0_i32_2 = arith.constant 0 : i32
    return %c0_i32, %c0_i32_0, %c0_i32_1 : i32, i32, i32
  }
  func.func @transform_3(%arg0: i32) -> (i32, i32, i32) {
    %c0_i32 = arith.constant 0 : i32
    %c0_i32_0 = arith.constant 0 : i32
    %c0_i32_1 = arith.constant 0 : i32
    %c0_i32_2 = arith.constant 0 : i32
    return %c0_i32, %c0_i32_0, %c0_i32_1 : i32, i32, i32
  }
  func.func @transform_4(%arg0: i32) -> (i32, i32, i32) {
    %c0_i32 = arith.constant 0 : i32
    %c0_i32_0 = arith.constant 0 : i32
    %c0_i32_1 = arith.constant 0 : i32
    %c0_i32_2 = arith.constant 0 : i32
    return %c0_i32, %c0_i32_0, %c0_i32_1 : i32, i32, i32
  }
  func.func @transform_5(%arg0: i32) -> (i32, i32, i32) {
    %c0_i32 = arith.constant 0 : i32
    %c0_i32_0 = arith.constant 0 : i32
    %c0_i32_1 = arith.constant 0 : i32
    %c0_i32_2 = arith.constant 0 : i32
    return %c0_i32, %c0_i32_0, %c0_i32_1 : i32, i32, i32
  }
  func.func @transform_6(%arg0: i32) -> (i32, i32, i32) {
    %c0_i32 = arith.constant 0 : i32
    %c0_i32_0 = arith.constant 0 : i32
    %c0_i32_1 = arith.constant 0 : i32
    %c0_i32_2 = arith.constant 0 : i32
    return %c0_i32, %c0_i32_0, %c0_i32_1 : i32, i32, i32
  }
  func.func @transform_7(%arg0: i32) -> (i32, i32, i32) {
    %c0_i32 = arith.constant 0 : i32
    %c0_i32_0 = arith.constant 0 : i32
    %c0_i32_1 = arith.constant 0 : i32
    %c0_i32_2 = arith.constant 0 : i32
    return %c0_i32, %c0_i32_0, %c0_i32_1 : i32, i32, i32
  }
  func.func @transform_8(%arg0: i32) -> (i32, i32, i32) {
    %c0_i32 = arith.constant 0 : i32
    %c0_i32_0 = arith.constant 0 : i32
    %c0_i32_1 = arith.constant 0 : i32
    %c0_i32_2 = arith.constant 0 : i32
    return %c0_i32, %c0_i32_0, %c0_i32_1 : i32, i32, i32
  }
  func.func @transform_9(%arg0: i32) -> (i32, i32, i32) {
    %c0_i32 = arith.constant 0 : i32
    %c0_i32_0 = arith.constant 0 : i32
    %c0_i32_1 = arith.constant 0 : i32
    %c0_i32_2 = arith.constant 0 : i32
    return %c0_i32, %c0_i32_0, %c0_i32_1 : i32, i32, i32
  }
  func.func @transform_10(%arg0: i32) -> (i32, i32, i32) {
    %c0_i32 = arith.constant 0 : i32
    %c0_i32_0 = arith.constant 0 : i32
    %c0_i32_1 = arith.constant 0 : i32
    return %c0_i32, %c0_i32_0, %arg0 : i32, i32, i32
  }
  func.func @transform_11(%arg0: i32) -> (i32, i32) {
    %c0_i32 = arith.constant 0 : i32
    %c0_i32_0 = arith.constant 0 : i32
    return %c0_i32, %arg0 : i32, i32
  }
}

</mosaic_0001>

<llo_original>
// kernel: tpu_custom_call.1
$region0: #{tpu_custom_call.1}
  #allocation0 [shape = 'u32[]', space=smem, size = 0x4, offset = 0x4, fixed_abs, tag = 'smem constant byte address 0x4 - core index']
  #allocation1 [shape = 'u32[144,128]{1,0:T(1,128)}', space=vmem, size = 0x12000, scoped, tag = 'internal scratch']
  %s0 = inlined_call_operand.vmem [shape: f32[16,8], index: 0, kind: input, shape index: {}]
  %s1 = inlined_call_operand.vmem [shape: f32[16,16], index: 1, kind: input, shape index: {}]
  %s2 = inlined_call_operand.vmem [shape: bf16[5,64,16], index: 2, kind: input, shape index: {}]
  %s3 = inlined_call_operand.vmem [shape: f32[5,64,1], index: 3, kind: input, shape index: {}]
  %s4 = inlined_call_operand.vmem [shape: bf16[5,64,64], index: 4, kind: input, shape index: {}]
  %s5 = inlined_call_operand.vmem [shape: f32[5,64,1], index: 5, kind: input, shape index: {}]
  %s6 = inlined_call_operand.vmem [shape: bf16[5,64,64], index: 6, kind: input, shape index: {}]
  %s7 = inlined_call_operand.vmem [shape: f32[5,64,1], index: 7, kind: input, shape index: {}]
  %s8 = inlined_call_operand.vmem [shape: bf16[5,32,64], index: 8, kind: input, shape index: {}]
  %s9 = inlined_call_operand.vmem [shape: f32[5,32,1], index: 9, kind: input, shape index: {}]
  %s10 = inlined_call_operand.vmem [shape: f32[5,16,8], index: 10, kind: output, shape index: {0}]
  %s11 = inlined_call_operand.hbm [shape: f32[2,8], index: 11, kind: output, shape index: {1}]
  %12 = xla_tuple %s10, %s11
  %s13 = sld [smem:[#allocation0]]
  $region58: #{tpu_custom_call.1} parent=0
    _
  %s15 = ssub.s32 1, %s13
  %s16 = scalar_select 0, %s15, %s13
  $region1: #{tpu_custom_call.1} parent=0
    #allocation2 [shape = 'u8[1024]{0}', space=vmem, size = 0x400, scoped, tag = 'output window, operand 1, single buffered']
    #allocation3 [shape = 's32[1]{0}', space=sflag, size = 0x4, scoped, tag = 'scoped memory for tpu_custom_call.1']
    %17 = vsyncpa [#allocation3], 0
    // Predicated region
    $region2: #{tpu_custom_call.1} parent=1 // pred_check
      _
    $region3: #{tpu_custom_call.1} parent=1 // pred_check_branch
      %19 = sbr.rel (0) target = $region5
    $region4: #{tpu_custom_call.1} parent=1 // pred_region
      _
    $region5: #{tpu_custom_call.1} parent=1 // pred_fallthru
      _
    // Predicated region
    $region6: #{tpu_custom_call.1} parent=1 // pred_check
      _
    $region7: #{tpu_custom_call.1} parent=1 // pred_check_branch
      %21 = sbr.rel (0) target = $region9
    $region8: #{tpu_custom_call.1} parent=1 // pred_region
      _
    $region9: #{tpu_custom_call.1} parent=1 // pred_fallthru
      _
    // Predicated region
    $region10: #{tpu_custom_call.1} parent=1 // pred_check
      _
    $region11: #{tpu_custom_call.1} parent=1 // pred_check_branch
      %23 = sbr.rel (0) target = $region13
    $region12: #{tpu_custom_call.1} parent=1 // pred_region
      _
    $region13: #{tpu_custom_call.1} parent=1 // pred_fallthru
      _
    // Predicated region
    $region14: #{tpu_custom_call.1} parent=1 // pred_check
      _
    $region15: #{tpu_custom_call.1} parent=1 // pred_check_branch
      %25 = sbr.rel (0) target = $region17
    $region16: #{tpu_custom_call.1} parent=1 // pred_region
      _
    $region17: #{tpu_custom_call.1} parent=1 // pred_fallthru
      _
    // Predicated region
    $region18: #{tpu_custom_call.1} parent=1 // pred_check
      _
    $region19: #{tpu_custom_call.1} parent=1 // pred_check_branch
      %27 = sbr.rel (0) target = $region21
    $region20: #{tpu_custom_call.1} parent=1 // pred_region
      _
    $region21: #{tpu_custom_call.1} parent=1 // pred_fallthru
      _
    // Predicated region
    $region22: #{tpu_custom_call.1} parent=1 // pred_check
      _
    $region23: #{tpu_custom_call.1} parent=1 // pred_check_branch
      %29 = sbr.rel (0) target = $region25
    $region24: #{tpu_custom_call.1} parent=1 // pred_region
      _
    $region25: #{tpu_custom_call.1} parent=1 // pred_fallthru
      _
    // Predicated region
    $region26: #{tpu_custom_call.1} parent=1 // pred_check
      _
    $region27: #{tpu_custom_call.1} parent=1 // pred_check_branch
      %31 = sbr.rel (0) target = $region29
    $region28: #{tpu_custom_call.1} parent=1 // pred_region
      _
    $region29: #{tpu_custom_call.1} parent=1 // pred_fallthru
      _
    // Predicated region
    $region30: #{tpu_custom_call.1} parent=1 // pred_check
      _
    $region31: #{tpu_custom_call.1} parent=1 // pred_check_branch
      %33 = sbr.rel (0) target = $region33
    $region32: #{tpu_custom_call.1} parent=1 // pred_region
      _
    $region33: #{tpu_custom_call.1} parent=1 // pred_fallthru
      _
    // Predicated region
    $region34: #{tpu_custom_call.1} parent=1 // pred_check
      _
    $region35: #{tpu_custom_call.1} parent=1 // pred_check_branch
      %35 = sbr.rel (0) target = $region37
    $region36: #{tpu_custom_call.1} parent=1 // pred_region
      _
    $region37: #{tpu_custom_call.1} parent=1 // pred_fallthru
      _
    // Predicated region
    $region38: #{tpu_custom_call.1} parent=1 // pred_check
      _
    $region39: #{tpu_custom_call.1} parent=1 // pred_check_branch
      %37 = sbr.rel (0) target = $region41
    $region40: #{tpu_custom_call.1} parent=1 // pred_region
      _
    $region41: #{tpu_custom_call.1} parent=1 // pred_fallthru
      _
    %v39 = vld [vmem:[%s0] sm:$0xff]
    %v40 = vld [vmem:[%s0 + $0x8] sm:$0xff]
    %v41 = vld [vmem:[%s1] sm:$0xff]
    %v42 = vld [vmem:[%s1 + $0x8] sm:$0xff]
    %v43 = vpack.c.bf16 %v40, %v39
    %v44 = vld [vmem:[%s2] sm:$0xf]
    %v45 = vld [vmem:[%s2 + $0x4] sm:$0xf]
    %v46 = vld [vmem:[%s2 + $0x8] sm:$0xf]
    %v47 = vld [vmem:[%s2 + $0xc] sm:$0xf]
    %v48 = vld [vmem:[%s2 + $0x10] sm:$0xf]
    %v49 = vld [vmem:[%s2 + $0x14] sm:$0xf]
    %v50 = vld [vmem:[%s2 + $0x18] sm:$0xf]
    %v51 = vld [vmem:[%s2 + $0x1c] sm:$0xf]
    %v52 = vld [vmem:[%s3] sm:$0xff]
    %v53 = vld [vmem:[%s3 + $0x8] sm:$0xff]
    %v54 = vld [vmem:[%s3 + $0x10] sm:$0xff]
    %v55 = vld [vmem:[%s3 + $0x18] sm:$0xff]
    %v56 = vld [vmem:[%s3 + $0x20] sm:$0xff]
    %v57 = vld [vmem:[%s3 + $0x28] sm:$0xff]
    %v58 = vld [vmem:[%s3 + $0x30] sm:$0xff]
    %v59 = vld [vmem:[%s3 + $0x38] sm:$0xff]
    %61 = vset.pattern.permute.xlu0 0
    %62 = vperm.xlu0 %61, %v52
    %v63 = vpop.permute.xlu0 %62
    %66 = vset.pattern.permute.xlu0 0
    %67 = vperm.xlu0 %66, %v53
    %v68 = vpop.permute.xlu0 %67
    %71 = vset.pattern.permute.xlu0 0
    %72 = vperm.xlu0 %71, %v54
    %v73 = vpop.permute.xlu0 %72
    %76 = vset.pattern.permute.xlu0 0
    %77 = vperm.xlu0 %76, %v55
    %v78 = vpop.permute.xlu0 %77
    %81 = vset.pattern.permute.xlu0 0
    %82 = vperm.xlu0 %81, %v56
    %v83 = vpop.permute.xlu0 %82
    %86 = vset.pattern.permute.xlu0 0
    %87 = vperm.xlu0 %86, %v57
    %v88 = vpop.permute.xlu0 %87
    %91 = vset.pattern.permute.xlu0 0
    %92 = vperm.xlu0 %91, %v58
    %v93 = vpop.permute.xlu0 %92
    %96 = vset.pattern.permute.xlu0 0
    %97 = vperm.xlu0 %96, %v59
    %v98 = vpop.permute.xlu0 %97
    %v108 = vunpack.c.l.b16 %v44
    %v109 = vunpack.c.l.b16 %v45
    %v110 = vunpack.c.l.b16 %v46
    %v111 = vunpack.c.l.b16 %v47
    %v112 = vunpack.c.l.b16 %v48
    %v113 = vunpack.c.l.b16 %v49
    %v114 = vunpack.c.l.b16 %v50
    %v115 = vunpack.c.l.b16 %v51
    %v116 = vpack.c.b16 %v109, %v108
    %v117 = vpack.c.b16 %v111, %v110
    %v118 = vpack.c.b16 %v113, %v112
    %v119 = vpack.c.b16 %v115, %v114
    %vm120 = vcmask 130048
    %v122 = vsel %vm120, %v116, 0
    %v125 = vsel %vm120, %v117, 0
    %v128 = vsel %vm120, %v118, 0
    %v131 = vsel %vm120, %v119, 0
    %133 = vmatprep.subr.bf16.mxu0 0
    %134 = vmatpush1.bf16.msra.mxu0 %v43
    %135 = vmatprep.subr.bf16.mxu0 0
    %136 = vmatpush1.bf16.msra.mxu0 0
    %137 = vmatprep.subr.bf16.mxu0 0
    %138 = vmatpush1.bf16.msra.mxu0 0
    %139 = vmatprep.subr.bf16.mxu0 0
    %140 = vmatpush1.bf16.msra.mxu0 0
    %141 = vmatprep.subr.bf16.mxu0 0
    %142 = vmatpush1.bf16.msra.mxu0 0
    %143 = vmatprep.subr.bf16.mxu0 0
    %144 = vmatpush1.bf16.msra.mxu0 0
    %145 = vmatprep.subr.bf16.mxu0 0
    %146 = vmatpush1.bf16.msra.mxu0 0
    %147 = vmatprep.subr.bf16.mxu0 0
    %148 = vmatpush1.bf16.msra.mxu0 0
    %149 = vmatprep.subr.bf16.mxu0 0
    %150 = vmatpush1.bf16.msra.mxu0 0
    %151 = vmatprep.subr.bf16.mxu0 0
    %152 = vmatpush1.bf16.msra.mxu0 0
    %153 = vmatprep.subr.bf16.mxu0 0
    %154 = vmatpush1.bf16.msra.mxu0 0
    %155 = vmatprep.subr.bf16.mxu0 0
    %156 = vmatpush1.bf16.msra.mxu0 0
    %157 = vmatprep.subr.bf16.mxu0 0
    %158 = vmatpush1.bf16.msra.mxu0 0
    %159 = vmatprep.subr.bf16.mxu0 0
    %160 = vmatpush1.bf16.msra.mxu0 0
    %161 = vmatprep.subr.bf16.mxu0 0
    %162 = vmatpush1.bf16.msra.mxu0 0
    %163 = vmatprep.subr.bf16.mxu0 0
    %164 = vmatpush1.bf16.msra.mxu0 0
    %165 = vmatprep.mubr.bf16.mxu0 0
    %166 = vmatmul.mubr.bf16.gmra.mrb[0].mxu0 %v122
    %v167 = vpop.f32.mrb[0].mxu0
    %v168 = vadd.f32 %v63, %v167
    %v169 = vpop.f32.mrb[0].mxu0
    %v170 = vpop.f32.mrb[0].mxu0
    %v171 = vadd.f32 %v68, %v170
    %v172 = vpop.f32.mrb[0].mxu0
    %173 = vmatprep.mubr.bf16.mxu0 0
    %174 = vmatmul.mubr.bf16.gmra.mrb[0].mxu0 %v125
    %v175 = vpop.f32.mrb[0].mxu0
    %v176 = vadd.f32 %v73, %v175
    %v177 = vpop.f32.mrb[0].mxu0
    %v178 = vpop.f32.mrb[0].mxu0
    %v179 = vadd.f32 %v78, %v178
    %v180 = vpop.f32.mrb[0].mxu0
    %181 = vmatprep.mubr.bf16.mxu0 0
    %182 = vmatmul.mubr.bf16.gmra.mrb[0].mxu0 %v128
    %v183 = vpop.f32.mrb[0].mxu0
    %v184 = vadd.f32 %v83, %v183
    %v185 = vpop.f32.mrb[0].mxu0
    %v186 = vpop.f32.mrb[0].mxu0
    %v187 = vadd.f32 %v88, %v186
    %v188 = vpop.f32.mrb[0].mxu0
    %189 = vmatprep.mubr.bf16.mxu0 0
    %190 = vmatmul.mubr.bf16.gmra.mrb[0].mxu0 %v131
    %v191 = vpop.f32.mrb[0].mxu0
    %v192 = vadd.f32 %v93, %v191
    %v193 = vpop.f32.mrb[0].mxu0
    %v194 = vpop.f32.mrb[0].mxu0
    %v195 = vadd.f32 %v98, %v194
    %v196 = vpop.f32.mrb[0].mxu0
    %197 = vdwg.mxu0
    %v198 = vmax.f32 %v168, 0.0
    %v199 = vmax.f32 %v171, 0.0
    %v200 = vmax.f32 %v176, 0.0
    %v201 = vmax.f32 %v179, 0.0
    %v202 = vmax.f32 %v184, 0.0
    %v203 = vmax.f32 %v187, 0.0
    %v204 = vmax.f32 %v192, 0.0
    %v205 = vmax.f32 %v195, 0.0
    %v206 = vld [vmem:[%s4] sm:$0xf]
    %v207 = vld [vmem:[%s4 + $0x4] sm:$0xf]
    %v208 = vld [vmem:[%s4 + $0x8] sm:$0xf]
    %v209 = vld [vmem:[%s4 + $0xc] sm:$0xf]
    %v210 = vld [vmem:[%s4 + $0x10] sm:$0xf]
    %v211 = vld [vmem:[%s4 + $0x14] sm:$0xf]
    %v212 = vld [vmem:[%s4 + $0x18] sm:$0xf]
    %v213 = vld [vmem:[%s4 + $0x1c] sm:$0xf]
    %v214 = vpack.c.bf16 %v199, %v198
    %v215 = vpack.c.bf16 %v201, %v200
    %v216 = vpack.c.bf16 %v203, %v202
    %v217 = vpack.c.bf16 %v205, %v204
    %v218 = vld [vmem:[%s5] sm:$0xff]
    %v219 = vld [vmem:[%s5 + $0x8] sm:$0xff]
    %v220 = vld [vmem:[%s5 + $0x10] sm:$0xff]
    %v221 = vld [vmem:[%s5 + $0x18] sm:$0xff]
    %v222 = vld [vmem:[%s5 + $0x20] sm:$0xff]
    %v223 = vld [vmem:[%s5 + $0x28] sm:$0xff]
    %v224 = vld [vmem:[%s5 + $0x30] sm:$0xff]
    %v225 = vld [vmem:[%s5 + $0x38] sm:$0xff]
    %227 = vset.pattern.permute.xlu0 0
    %228 = vperm.xlu0 %227, %v218
    %v229 = vpop.permute.xlu0 %228
    %232 = vset.pattern.permute.xlu0 0
    %233 = vperm.xlu0 %232, %v219
    %v234 = vpop.permute.xlu0 %233
    %237 = vset.pattern.permute.xlu0 0
    %238 = vperm.xlu0 %237, %v220
    %v239 = vpop.permute.xlu0 %238
    %242 = vset.pattern.permute.xlu0 0
    %243 = vperm.xlu0 %242, %v221
    %v244 = vpop.permute.xlu0 %243
    %247 = vset.pattern.permute.xlu0 0
    %248 = vperm.xlu0 %247, %v222
    %v249 = vpop.permute.xlu0 %248
    %252 = vset.pattern.permute.xlu0 0
    %253 = vperm.xlu0 %252, %v223
    %v254 = vpop.permute.xlu0 %253
    %257 = vset.pattern.permute.xlu0 0
    %258 = vperm.xlu0 %257, %v224
    %v259 = vpop.permute.xlu0 %258
    %262 = vset.pattern.permute.xlu0 0
    %263 = vperm.xlu0 %262, %v225
    %v264 = vpop.permute.xlu0 %263
    %v274 = vunpack.c.l.b16 %v206
    %v275 = vunpack.c.l.b16 %v207
    %v276 = vunpack.c.l.b16 %v208
    %v277 = vunpack.c.l.b16 %v209
    %v278 = vunpack.c.l.b16 %v210
    %v279 = vunpack.c.l.b16 %v211
    %v280 = vunpack.c.l.b16 %v212
    %v281 = vunpack.c.l.b16 %v213
    %v282 = vpack.c.b16 %v275, %v274
    %v283 = vpack.c.b16 %v277, %v276
    %v284 = vpack.c.b16 %v279, %v278
    %v285 = vpack.c.b16 %v281, %v280
    %vm286 = vcmask 523264
    %v288 = vsel %vm286, %v282, 0
    %v291 = vsel %vm286, %v283, 0
    %v294 = vsel %vm286, %v284, 0
    %v297 = vsel %vm286, %v285, 0
    %299 = vmatprep.subr.bf16.mxu0 0
    %300 = vmatpush1.bf16.msra.mxu0 %v214
    %301 = vmatprep.subr.bf16.mxu0 0
    %302 = vmatpush1.bf16.msra.mxu0 %v215
    %303 = vmatprep.subr.bf16.mxu0 0
    %304 = vmatpush1.bf16.msra.mxu0 %v216
    %305 = vmatprep.subr.bf16.mxu0 0
    %306 = vmatpush1.bf16.msra.mxu0 %v217
    %307 = vmatprep.subr.bf16.mxu0 0
    %308 = vmatpush1.bf16.msra.mxu0 0
    %309 = vmatprep.subr.bf16.mxu0 0
    %310 = vmatpush1.bf16.msra.mxu0 0
    %311 = vmatprep.subr.bf16.mxu0 0
    %312 = vmatpush1.bf16.msra.mxu0 0
    %313 = vmatprep.subr.bf16.mxu0 0
    %314 = vmatpush1.bf16.msra.mxu0 0
    %315 = vmatprep.subr.bf16.mxu0 0
    %316 = vmatpush1.bf16.msra.mxu0 0
    %317 = vmatprep.subr.bf16.mxu0 0
    %318 = vmatpush1.bf16.msra.mxu0 0
    %319 = vmatprep.subr.bf16.mxu0 0
    %320 = vmatpush1.bf16.msra.mxu0 0
    %321 = vmatprep.subr.bf16.mxu0 0
    %322 = vmatpush1.bf16.msra.mxu0 0
    %323 = vmatprep.subr.bf16.mxu0 0
    %324 = vmatpush1.bf16.msra.mxu0 0
    %325 = vmatprep.subr.bf16.mxu0 0
    %326 = vmatpush1.bf16.msra.mxu0 0
    %327 = vmatprep.subr.bf16.mxu0 0
    %328 = vmatpush1.bf16.msra.mxu0 0
    %329 = vmatprep.subr.bf16.mxu0 0
    %330 = vmatpush1.bf16.msra.mxu0 0
    %331 = vmatprep.mubr.bf16.mxu0 0
    %332 = vmatmul.mubr.bf16.gmra.mrb[0].mxu0 %v288
    %v333 = vpop.f32.mrb[0].mxu0
    %v334 = vadd.f32 %v229, %v333
    %v335 = vpop.f32.mrb[0].mxu0
    %v336 = vpop.f32.mrb[0].mxu0
    %v337 = vadd.f32 %v234, %v336
    %v338 = vpop.f32.mrb[0].mxu0
    %339 = vmatprep.mubr.bf16.mxu0 0
    %340 = vmatmul.mubr.bf16.gmra.mrb[0].mxu0 %v291
    %v341 = vpop.f32.mrb[0].mxu0
    %v342 = vadd.f32 %v239, %v341
    %v343 = vpop.f32.mrb[0].mxu0
    %v344 = vpop.f32.mrb[0].mxu0
    %v345 = vadd.f32 %v244, %v344
    %v346 = vpop.f32.mrb[0].mxu0
    %347 = vmatprep.mubr.bf16.mxu0 0
    %348 = vmatmul.mubr.bf16.gmra.mrb[0].mxu0 %v294
    %v349 = vpop.f32.mrb[0].mxu0
    %v350 = vadd.f32 %v249, %v349
    %v351 = vpop.f32.mrb[0].mxu0
    %v352 = vpop.f32.mrb[0].mxu0
    %v353 = vadd.f32 %v254, %v352
    %v354 = vpop.f32.mrb[0].mxu0
    %355 = vmatprep.mubr.bf16.mxu0 0
    %356 = vmatmul.mubr.bf16.gmra.mrb[0].mxu0 %v297
    %v357 = vpop.f32.mrb[0].mxu0
    %v358 = vadd.f32 %v259, %v357
    %v359 = vpop.f32.mrb[0].mxu0
    %v360 = vpop.f32.mrb[0].mxu0
    %v361 = vadd.f32 %v264, %v360
    %v362 = vpop.f32.mrb[0].mxu0
    %363 = vdwg.mxu0
    %v364 = vmax.f32 %v334, 0.0
    %v365 = vmax.f32 %v337, 0.0
    %v366 = vmax.f32 %v342, 0.0
    %v367 = vmax.f32 %v345, 0.0
    %v368 = vmax.f32 %v350, 0.0
    %v369 = vmax.f32 %v353, 0.0
    %v370 = vmax.f32 %v358, 0.0
    %v371 = vmax.f32 %v361, 0.0
    %v372 = vld [vmem:[%s6] sm:$0xf]
    %v373 = vld [vmem:[%s6 + $0x4] sm:$0xf]
    %v374 = vld [vmem:[%s6 + $0x8] sm:$0xf]
    %v375 = vld [vmem:[%s6 + $0xc] sm:$0xf]
    %v376 = vld [vmem:[%s6 + $0x10] sm:$0xf]
    %v377 = vld [vmem:[%s6 + $0x14] sm:$0xf]
    %v378 = vld [vmem:[%s6 + $0x18] sm:$0xf]
    %v379 = vld [vmem:[%s6 + $0x1c] sm:$0xf]
    %v380 = vpack.c.bf16 %v365, %v364
    %v381 = vpack.c.bf16 %v367, %v366
    %v382 = vpack.c.bf16 %v369, %v368
    %v383 = vpack.c.bf16 %v371, %v370
    %v384 = vld [vmem:[%s7] sm:$0xff]
    %v385 = vld [vmem:[%s7 + $0x8] sm:$0xff]
    %v386 = vld [vmem:[%s7 + $0x10] sm:$0xff]
    %v387 = vld [vmem:[%s7 + $0x18] sm:$0xff]
    %v388 = vld [vmem:[%s7 + $0x20] sm:$0xff]
    %v389 = vld [vmem:[%s7 + $0x28] sm:$0xff]
    %v390 = vld [vmem:[%s7 + $0x30] sm:$0xff]
    %v391 = vld [vmem:[%s7 + $0x38] sm:$0xff]
    %393 = vset.pattern.permute.xlu0 0
    %394 = vperm.xlu0 %393, %v384
    %v395 = vpop.permute.xlu0 %394
    %398 = vset.pattern.permute.xlu0 0
    %399 = vperm.xlu0 %398, %v385
    %v400 = vpop.permute.xlu0 %399
    %403 = vset.pattern.permute.xlu0 0
    %404 = vperm.xlu0 %403, %v386
    %v405 = vpop.permute.xlu0 %404
    %408 = vset.pattern.permute.xlu0 0
    %409 = vperm.xlu0 %408, %v387
    %v410 = vpop.permute.xlu0 %409
    %413 = vset.pattern.permute.xlu0 0
    %414 = vperm.xlu0 %413, %v388
    %v415 = vpop.permute.xlu0 %414
    %418 = vset.pattern.permute.xlu0 0
    %419 = vperm.xlu0 %418, %v389
    %v420 = vpop.permute.xlu0 %419
    %423 = vset.pattern.permute.xlu0 0
    %424 = vperm.xlu0 %423, %v390
    %v425 = vpop.permute.xlu0 %424
    %428 = vset.pattern.permute.xlu0 0
    %429 = vperm.xlu0 %428, %v391
    %v430 = vpop.permute.xlu0 %429
    %v440 = vunpack.c.l.b16 %v372
    %v441 = vunpack.c.l.b16 %v373
    %v442 = vunpack.c.l.b16 %v374
    %v443 = vunpack.c.l.b16 %v375
    %v444 = vunpack.c.l.b16 %v376
    %v445 = vunpack.c.l.b16 %v377
    %v446 = vunpack.c.l.b16 %v378
    %v447 = vunpack.c.l.b16 %v379
    %v448 = vpack.c.b16 %v441, %v440
    %v449 = vpack.c.b16 %v443, %v442
    %v450 = vpack.c.b16 %v445, %v444
    %v451 = vpack.c.b16 %v447, %v446
    %v453 = vsel %vm286, %v448, 0
    %v456 = vsel %vm286, %v449, 0
    %v459 = vsel %vm286, %v450, 0
    %v462 = vsel %vm286, %v451, 0
    %464 = vmatprep.subr.bf16.mxu0 0
    %465 = vmatpush1.bf16.msra.mxu0 %v380
    %466 = vmatprep.subr.bf16.mxu0 0
    %467 = vmatpush1.bf16.msra.mxu0 %v381
    %468 = vmatprep.subr.bf16.mxu0 0
    %469 = vmatpush1.bf16.msra.mxu0 %v382
    %470 = vmatprep.subr.bf16.mxu0 0
    %471 = vmatpush1.bf16.msra.mxu0 %v383
    %472 = vmatprep.subr.bf16.mxu0 0
    %473 = vmatpush1.bf16.msra.mxu0 0
    %474 = vmatprep.subr.bf16.mxu0 0
    %475 = vmatpush1.bf16.msra.mxu0 0
    %476 = vmatprep.subr.bf16.mxu0 0
    %477 = vmatpush1.bf16.msra.mxu0 0
    %478 = vmatprep.subr.bf16.mxu0 0
    %479 = vmatpush1.bf16.msra.mxu0 0
    %480 = vmatprep.subr.bf16.mxu0 0
    %481 = vmatpush1.bf16.msra.mxu0 0
    %482 = vmatprep.subr.bf16.mxu0 0
    %483 = vmatpush1.bf16.msra.mxu0 0
    %484 = vmatprep.subr.bf16.mxu0 0
    %485 = vmatpush1.bf16.msra.mxu0 0
    %486 = vmatprep.subr.bf16.mxu0 0
    %487 = vmatpush1.bf16.msra.mxu0 0
    %488 = vmatprep.subr.bf16.mxu0 0
    %489 = vmatpush1.bf16.msra.mxu0 0
    %490 = vmatprep.subr.bf16.mxu0 0
    %491 = vmatpush1.bf16.msra.mxu0 0
    %492 = vmatprep.subr.bf16.mxu0 0
    %493 = vmatpush1.bf16.msra.mxu0 0
    %494 = vmatprep.subr.bf16.mxu0 0
    %495 = vmatpush1.bf16.msra.mxu0 0
    %496 = vmatprep.mubr.bf16.mxu0 0
    %497 = vmatmul.mubr.bf16.gmra.mrb[0].mxu0 %v453
    %v498 = vpop.f32.mrb[0].mxu0
    %v499 = vadd.f32 %v395, %v498
    %v500 = vpop.f32.mrb[0].mxu0
    %v501 = vpop.f32.mrb[0].mxu0
    %v502 = vadd.f32 %v400, %v501
    %v503 = vpop.f32.mrb[0].mxu0
    %504 = vmatprep.mubr.bf16.mxu0 0
    %505 = vmatmul.mubr.bf16.gmra.mrb[0].mxu0 %v456
    %v506 = vpop.f32.mrb[0].mxu0
    %v507 = vadd.f32 %v405, %v506
    %v508 = vpop.f32.mrb[0].mxu0
    %v509 = vpop.f32.mrb[0].mxu0
    %v510 = vadd.f32 %v410, %v509
    %v511 = vpop.f32.mrb[0].mxu0
    %512 = vmatprep.mubr.bf16.mxu0 0
    %513 = vmatmul.mubr.bf16.gmra.mrb[0].mxu0 %v459
    %v514 = vpop.f32.mrb[0].mxu0
    %v515 = vadd.f32 %v415, %v514
    %v516 = vpop.f32.mrb[0].mxu0
    %v517 = vpop.f32.mrb[0].mxu0
    %v518 = vadd.f32 %v420, %v517
    %v519 = vpop.f32.mrb[0].mxu0
    %520 = vmatprep.mubr.bf16.mxu0 0
    %521 = vmatmul.mubr.bf16.gmra.mrb[0].mxu0 %v462
    %v522 = vpop.f32.mrb[0].mxu0
    %v523 = vadd.f32 %v425, %v522
    %v524 = vpop.f32.mrb[0].mxu0
    %v525 = vpop.f32.mrb[0].mxu0
    %v526 = vadd.f32 %v430, %v525
    %v527 = vpop.f32.mrb[0].mxu0
    %528 = vdwg.mxu0
    %v529 = vmax.f32 %v499, 0.0
    %v530 = vmax.f32 %v502, 0.0
    %v531 = vmax.f32 %v507, 0.0
    %v532 = vmax.f32 %v510, 0.0
    %v533 = vmax.f32 %v515, 0.0
    %v534 = vmax.f32 %v518, 0.0
    %v535 = vmax.f32 %v523, 0.0
    %v536 = vmax.f32 %v526, 0.0
    %v537 = vld [vmem:[%s8] sm:$0xf]
    %v538 = vld [vmem:[%s8 + $0x4] sm:$0xf]
    %v539 = vld [vmem:[%s8 + $0x8] sm:$0xf]
    %v540 = vld [vmem:[%s8 + $0xc] sm:$0xf]
    %v541 = vpack.c.bf16 %v530, %v529
    %v542 = vpack.c.bf16 %v532, %v531
    %v543 = vpack.c.bf16 %v534, %v533
    %v544 = vpack.c.bf16 %v536, %v535
    %v545 = vld [vmem:[%s9] sm:$0xff]
    %v546 = vld [vmem:[%s9 + $0x8] sm:$0xff]
    %v547 = vld [vmem:[%s9 + $0x10] sm:$0xff]
    %v548 = vld [vmem:[%s9 + $0x18] sm:$0xff]
    %550 = vset.pattern.permute.xlu0 0
    %551 = vperm.xlu0 %550, %v545
    %v552 = vpop.permute.xlu0 %551
    %555 = vset.pattern.permute.xlu0 0
    %556 = vperm.xlu0 %555, %v546
    %v557 = vpop.permute.xlu0 %556
    %560 = vset.pattern.permute.xlu0 0
    %561 = vperm.xlu0 %560, %v547
    %v562 = vpop.permute.xlu0 %561
    %565 = vset.pattern.permute.xlu0 0
    %566 = vperm.xlu0 %565, %v548
    %v567 = vpop.permute.xlu0 %566
    %v573 = vunpack.c.l.b16 %v537
    %v574 = vunpack.c.l.b16 %v538
    %v575 = vunpack.c.l.b16 %v539
    %v576 = vunpack.c.l.b16 %v540
    %v577 = vpack.c.b16 %v574, %v573
    %v578 = vpack.c.b16 %v576, %v575
    %v580 = vsel %vm286, %v577, 0
    %v583 = vsel %vm286, %v578, 0
    %585 = vmatprep.subr.bf16.mxu0 0
    %586 = vmatpush1.bf16.msra.mxu0 %v541
    %587 = vmatprep.subr.bf16.mxu0 0
    %588 = vmatpush1.bf16.msra.mxu0 %v542
    %589 = vmatprep.subr.bf16.mxu0 0
    %590 = vmatpush1.bf16.msra.mxu0 %v543
    %591 = vmatprep.subr.bf16.mxu0 0
    %592 = vmatpush1.bf16.msra.mxu0 %v544
    %593 = vmatprep.subr.bf16.mxu0 0
    %594 = vmatpush1.bf16.msra.mxu0 0
    %595 = vmatprep.subr.bf16.mxu0 0
    %596 = vmatpush1.bf16.msra.mxu0 0
    %597 = vmatprep.subr.bf16.mxu0 0
    %598 = vmatpush1.bf16.msra.mxu0 0
    %599 = vmatprep.subr.bf16.mxu0 0
    %600 = vmatpush1.bf16.msra.mxu0 0
    %601 = vmatprep.subr.bf16.mxu0 0
    %602 = vmatpush1.bf16.msra.mxu0 0
    %603 = vmatprep.subr.bf16.mxu0 0
    %604 = vmatpush1.bf16.msra.mxu0 0
    %605 = vmatprep.subr.bf16.mxu0 0
    %606 = vmatpush1.bf16.msra.mxu0 0
    %607 = vmatprep.subr.bf16.mxu0 0
    %608 = vmatpush1.bf16.msra.mxu0 0
    %609 = vmatprep.subr.bf16.mxu0 0
    %610 = vmatpush1.bf16.msra.mxu0 0
    %611 = vmatprep.subr.bf16.mxu0 0
    %612 = vmatpush1.bf16.msra.mxu0 0
    %613 = vmatprep.subr.bf16.mxu0 0
    %614 = vmatpush1.bf16.msra.mxu0 0
    %615 = vmatprep.subr.bf16.mxu0 0
    %616 = vmatpush1.bf16.msra.mxu0 0
    %617 = vmatprep.mubr.bf16.mxu0 0
    %618 = vmatmul.mubr.bf16.gmra.mrb[0].mxu0 %v580
    %v619 = vpop.f32.mrb[0].mxu0
    %v620 = vadd.f32 %v552, %v619
    %v621 = vpop.f32.mrb[0].mxu0
    %v622 = vpop.f32.mrb[0].mxu0
    %v623 = vadd.f32 %v557, %v622
    %v624 = vpop.f32.mrb[0].mxu0
    %625 = vmatprep.mubr.bf16.mxu0 0
    %626 = vmatmul.mubr.bf16.gmra.mrb[0].mxu0 %v583
    %v627 = vpop.f32.mrb[0].mxu0
    %v628 = vadd.f32 %v562, %v627
    %v629 = vpop.f32.mrb[0].mxu0
    %v630 = vpop.f32.mrb[0].mxu0
    %v631 = vadd.f32 %v567, %v630
    %v632 = vpop.f32.mrb[0].mxu0
    %633 = vdwg.mxu0
    %v635 = vsel %vm120, %v41, 0
    %v638 = vsel %vm120, %v42, 0
    %640 = vmatprep.subr.mxu0 0.0
    %641 = vmatpush1.msra.mxu0 %v39
    %642 = vmatprep.subr.mxu0 0.0
    %643 = vmatpush1.msra.mxu0 %v40
    %644 = vmatprep.subr.mxu0 0.0
    %645 = vmatpush1.msra.mxu0 0.0
    %646 = vmatprep.subr.mxu0 0.0
    %647 = vmatpush1.msra.mxu0 0.0
    %648 = vmatprep.subr.mxu0 0.0
    %649 = vmatpush1.msra.mxu0 0.0
    %650 = vmatprep.subr.mxu0 0.0
    %651 = vmatpush1.msra.mxu0 0.0
    %652 = vmatprep.subr.mxu0 0.0
    %653 = vmatpush1.msra.mxu0 0.0
    %654 = vmatprep.subr.mxu0 0.0
    %655 = vmatpush1.msra.mxu0 0.0
    %656 = vmatprep.subr.mxu0 0.0
    %657 = vmatpush1.msra.mxu0 0.0
    %658 = vmatprep.subr.mxu0 0.0
    %659 = vmatpush1.msra.mxu0 0.0
    %660 = vmatprep.subr.mxu0 0.0
    %661 = vmatpush1.msra.mxu0 0.0
    %662 = vmatprep.subr.mxu0 0.0
    %663 = vmatpush1.msra.mxu0 0.0
    %664 = vmatprep.subr.mxu0 0.0
    %665 = vmatpush1.msra.mxu0 0.0
    %666 = vmatprep.subr.mxu0 0.0
    %667 = vmatpush1.msra.mxu0 0.0
    %668 = vmatprep.subr.mxu0 0.0
    %669 = vmatpush1.msra.mxu0 0.0
    %670 = vmatprep.subr.mxu0 0.0
    %671 = vmatpush1.msra.mxu0 0.0
    %672 = vmatprep.subr.mxu0 0.0
    %673 = vmatpush1.msra.mxu0 0.0
    %674 = vmatprep.subr.mxu0 0.0
    %675 = vmatpush1.msra.mxu0 0.0
    %676 = vmatprep.subr.mxu0 0.0
    %677 = vmatpush1.msra.mxu0 0.0
    %678 = vmatprep.subr.mxu0 0.0
    %679 = vmatpush1.msra.mxu0 0.0
    %680 = vmatprep.subr.mxu0 0.0
    %681 = vmatpush1.msra.mxu0 0.0
    %682 = vmatprep.subr.mxu0 0.0
    %683 = vmatpush1.msra.mxu0 0.0
    %684 = vmatprep.subr.mxu0 0.0
    %685 = vmatpush1.msra.mxu0 0.0
    %686 = vmatprep.subr.mxu0 0.0
    %687 = vmatpush1.msra.mxu0 0.0
    %688 = vmatprep.subr.mxu0 0.0
    %689 = vmatpush1.msra.mxu0 0.0
    %690 = vmatprep.subr.mxu0 0.0
    %691 = vmatpush1.msra.mxu0 0.0
    %692 = vmatprep.subr.mxu0 0.0
    %693 = vmatpush1.msra.mxu0 0.0
    %694 = vmatprep.subr.mxu0 0.0
    %695 = vmatpush1.msra.mxu0 0.0
    %696 = vmatprep.subr.mxu0 0.0
    %697 = vmatpush1.msra.mxu0 0.0
    %698 = vmatprep.subr.mxu0 0.0
    %699 = vmatpush1.msra.mxu0 0.0
    %700 = vmatprep.subr.mxu0 0.0
    %701 = vmatpush1.msra.mxu0 0.0
    %702 = vmatprep.subr.mxu0 0.0
    %703 = vmatpush1.msra.mxu0 0.0
    %704 = vmatprep.mubr.f32.mxu0 0.0
    %705 = vmatmul.mubr.f32.gmra.mrb[0].mxu0 %v635
    %v706 = vpop.f32.mrb[0].mxu0
    %v707 = vadd.f32 0.0, %v706
    %v708 = vpop.f32.mrb[0].mxu0
    %709 = vmatprep.mubr.f32.mxu0 0.0
    %710 = vmatmul.mubr.f32.gmra.mrb[0].mxu0 %v638
    %v711 = vpop.f32.mrb[0].mxu0
    %v712 = vadd.f32 0.0, %v711
    %v713 = vpop.f32.mrb[0].mxu0
    %714 = vdwg.mxu0
    %v715 = vmul.f32 %v620, 1.442695
    %v716 = vpow.pop %v715
    %v717 = vmul.f32 %v623, 1.442695
    %v718 = vpow.pop %v717
    %v719 = vmul.f32 %v707, %v716
    %v720 = vmul.f32 %v712, %v718
    %v721 = vadd.f32 %v719, %v628
    %v722 = vadd.f32 %v720, %v631
    %vm723 = vcmask 64512
    %v724 = vsel %vm723, %v620, 0.0
    %v725 = vsel %vm723, %v623, 0.0
    %v726 = vadd.f32 %v724, %v725
    %v727 = vrot.slane %v726, 4
    %v728 = vadd.f32 %v726, %v727
    %v729 = vrot.slane %v728, 2
    %v730 = vadd.f32 %v728, %v729
    %v731 = vrot.slane %v730, 1
    %v732 = vadd.f32 %v730, %v731
    %v733 = vadd.f32 %v732, 0.0
    %734 = vst.msk [vmem:[%s10] sm:$0xff] %vm723, %v721
    %735 = vst.msk [vmem:[%s10 + $0x8] sm:$0xff] %vm723, %v722
    %v736 = vpack.c.bf16 %v722, %v721
    %s737 = scalar_lea.vmem %s2, 32
    %v738 = vld [vmem:[%s737] sm:$0xf]
    %v739 = vld [vmem:[%s737 + $0x4] sm:$0xf]
    %v740 = vld [vmem:[%s737 + $0x8] sm:$0xf]
    %v741 = vld [vmem:[%s737 + $0xc] sm:$0xf]
    %v742 = vld [vmem:[%s737 + $0x10] sm:$0xf]
    %v743 = vld [vmem:[%s737 + $0x14] sm:$0xf]
    %v744 = vld [vmem:[%s737 + $0x18] sm:$0xf]
    %v745 = vld [vmem:[%s737 + $0x1c] sm:$0xf]
    %s746 = scalar_lea.vmem %s3, 64
    %v747 = vld [vmem:[%s746] sm:$0xff]
    %v748 = vld [vmem:[%s746 + $0x8] sm:$0xff]
    %v749 = vld [vmem:[%s746 + $0x10] sm:$0xff]
    %v750 = vld [vmem:[%s746 + $0x18] sm:$0xff]
    %v751 = vld [vmem:[%s746 + $0x20] sm:$0xff]
    %v752 = vld [vmem:[%s746 + $0x28] sm:$0xff]
    %v753 = vld [vmem:[%s746 + $0x30] sm:$0xff]
    %v754 = vld [vmem:[%s746 + $0x38] sm:$0xff]
    %756 = vset.pattern.permute.xlu0 0
    %757 = vperm.xlu0 %756, %v747
    %v758 = vpop.permute.xlu0 %757
    %761 = vset.pattern.permute.xlu0 0
    %762 = vperm.xlu0 %761, %v748
    %v763 = vpop.permute.xlu0 %762
    %766 = vset.pattern.permute.xlu0 0
    %767 = vperm.xlu0 %766, %v749
    %v768 = vpop.permute.xlu0 %767
    %771 = vset.pattern.permute.xlu0 0
    %772 = vperm.xlu0 %771, %v750
    %v773 = vpop.permute.xlu0 %772
    %776 = vset.pattern.permute.xlu0 0
    %777 = vperm.xlu0 %776, %v751
    %v778 = vpop.permute.xlu0 %777
    %781 = vset.pattern.permute.xlu0 0
    %782 = vperm.xlu0 %781, %v752
    %v783 = vpop.permute.xlu0 %782
    %786 = vset.pattern.permute.xlu0 0
    %787 = vperm.xlu0 %786, %v753
    %v788 = vpop.permute.xlu0 %787
    %791 = vset.pattern.permute.xlu0 0
    %792 = vperm.xlu0 %791, %v754
    %v793 = vpop.permute.xlu0 %792
    %v803 = vunpack.c.l.b16 %v738
    %v804 = vunpack.c.l.b16 %v739
    %v805 = vunpack.c.l.b16 %v740
    %v806 = vunpack.c.l.b16 %v741
    %v807 = vunpack.c.l.b16 %v742
    %v808 = vunpack.c.l.b16 %v743
    %v809 = vunpack.c.l.b16 %v744
    %v810 = vunpack.c.l.b16 %v745
    %v811 = vpack.c.b16 %v804, %v803
    %v812 = vpack.c.b16 %v806, %v805
    %v813 = vpack.c.b16 %v808, %v807
    %v814 = vpack.c.b16 %v810, %v809
    %v816 = vsel %vm120, %v811, 0
    %v819 = vsel %vm120, %v812, 0
    %v822 = vsel %vm120, %v813, 0
    %v825 = vsel %vm120, %v814, 0
    %827 = vmatprep.subr.bf16.mxu0 0
    %828 = vmatpush1.bf16.msra.mxu0 %v736
    %829 = vmatprep.subr.bf16.mxu0 0
    %830 = vmatpush1.bf16.msra.mxu0 0
    %831 = vmatprep.subr.bf16.mxu0 0
    %832 = vmatpush1.bf16.msra.mxu0 0
    %833 = vmatprep.subr.bf16.mxu0 0
    %834 = vmatpush1.bf16.msra.mxu0 0
    %835 = vmatprep.subr.bf16.mxu0 0
    %836 = vmatpush1.bf16.msra.mxu0 0
    %837 = vmatprep.subr.bf16.mxu0 0
    %838 = vmatpush1.bf16.msra.mxu0 0
    %839 = vmatprep.subr.bf16.mxu0 0
    %840 = vmatpush1.bf16.msra.mxu0 0
    %841 = vmatprep.subr.bf16.mxu0 0
    %842 = vmatpush1.bf16.msra.mxu0 0
    %843 = vmatprep.subr.bf16.mxu0 0
    %844 = vmatpush1.bf16.msra.mxu0 0
    %845 = vmatprep.subr.bf16.mxu0 0
    %846 = vmatpush1.bf16.msra.mxu0 0
    %847 = vmatprep.subr.bf16.mxu0 0
    %848 = vmatpush1.bf16.msra.mxu0 0
    %849 = vmatprep.subr.bf16.mxu0 0
    %850 = vmatpush1.bf16.msra.mxu0 0
    %851 = vmatprep.subr.bf16.mxu0 0
    %852 = vmatpush1.bf16.msra.mxu0 0
    %853 = vmatprep.subr.bf16.mxu0 0
    %854 = vmatpush1.bf16.msra.mxu0 0
    %855 = vmatprep.subr.bf16.mxu0 0
    %856 = vmatpush1.bf16.msra.mxu0 0
    %857 = vmatprep.subr.bf16.mxu0 0
    %858 = vmatpush1.bf16.msra.mxu0 0
    %859 = vmatprep.mubr.bf16.mxu0 0
    %860 = vmatmul.mubr.bf16.gmra.mrb[0].mxu0 %v816
    %v861 = vpop.f32.mrb[0].mxu0
    %v862 = vadd.f32 %v758, %v861
    %v863 = vpop.f32.mrb[0].mxu0
    %v864 = vpop.f32.mrb[0].mxu0
    %v865 = vadd.f32 %v763, %v864
    %v866 = vpop.f32.mrb[0].mxu0
    %867 = vmatprep.mubr.bf16.mxu0 0
    %868 = vmatmul.mubr.bf16.gmra.mrb[0].mxu0 %v819
    %v869 = vpop.f32.mrb[0].mxu0
    %v870 = vadd.f32 %v768, %v869
    %v871 = vpop.f32.mrb[0].mxu0
    %v872 = vpop.f32.mrb[0].mxu0
    %v873 = vadd.f32 %v773, %v872
    %v874 = vpop.f32.mrb[0].mxu0
    %875 = vmatprep.mubr.bf16.mxu0 0
    %876 = vmatmul.mubr.bf16.gmra.mrb[0].mxu0 %v822
    %v877 = vpop.f32.mrb[0].mxu0
    %v878 = vadd.f32 %v778, %v877
    %v879 = vpop.f32.mrb[0].mxu0
    %v880 = vpop.f32.mrb[0].mxu0
    %v881 = vadd.f32 %v783, %v880
    %v882 = vpop.f32.mrb[0].mxu0
    %883 = vmatprep.mubr.bf16.mxu0 0
    %884 = vmatmul.mubr.bf16.gmra.mrb[0].mxu0 %v825
    %v885 = vpop.f32.mrb[0].mxu0
    %v886 = vadd.f32 %v788, %v885
    %v887 = vpop.f32.mrb[0].mxu0
    %v888 = vpop.f32.mrb[0].mxu0
    %v889 = vadd.f32 %v793, %v888
    %v890 = vpop.f32.mrb[0].mxu0
    %891 = vdwg.mxu0
    %v892 = vmax.f32 %v862, 0.0
    %v893 = vmax.f32 %v865, 0.0
    %v894 = vmax.f32 %v870, 0.0
    %v895 = vmax.f32 %v873, 0.0
    %v896 = vmax.f32 %v878, 0.0
    %v897 = vmax.f32 %v881, 0.0
    %v898 = vmax.f32 %v886, 0.0
    %v899 = vmax.f32 %v889, 0.0
    %s900 = scalar_lea.vmem %s4, 32
    %v901 = vld [vmem:[%s900] sm:$0xf]
    %v902 = vld [vmem:[%s900 + $0x4] sm:$0xf]
    %v903 = vld [vmem:[%s900 + $0x8] sm:$0xf]
    %v904 = vld [vmem:[%s900 + $0xc] sm:$0xf]
    %v905 = vld [vmem:[%s900 + $0x10] sm:$0xf]
    %v906 = vld [vmem:[%s900 + $0x14] sm:$0xf]
    %v907 = vld [vmem:[%s900 + $0x18] sm:$0xf]
    %v908 = vld [vmem:[%s900 + $0x1c] sm:$0xf]
    %v909 = vpack.c.bf16 %v893, %v892
    %v910 = vpack.c.bf16 %v895, %v894
    %v911 = vpack.c.bf16 %v897, %v896
    %v912 = vpack.c.bf16 %v899, %v898
    %s913 = scalar_lea.vmem %s5, 64
    %v914 = vld [vmem:[%s913] sm:$0xff]
    %v915 = vld [vmem:[%s913 + $0x8] sm:$0xff]
    %v916 = vld [vmem:[%s913 + $0x10] sm:$0xff]
    %v917 = vld [vmem:[%s913 + $0x18] sm:$0xff]
    %v918 = vld [vmem:[%s913 + $0x20] sm:$0xff]
    %v919 = vld [vmem:[%s913 + $0x28] sm:$0xff]
    %v920 = vld [vmem:[%s913 + $0x30] sm:$0xff]
    %v921 = vld [vmem:[%s913 + $0x38] sm:$0xff]
    %923 = vset.pattern.permute.xlu0 0
    %924 = vperm.xlu0 %923, %v914
    %v925 = vpop.permute.xlu0 %924
    %928 = vset.pattern.permute.xlu0 0
    %929 = vperm.xlu0 %928, %v915
    %v930 = vpop.permute.xlu0 %929
    %933 = vset.pattern.permute.xlu0 0
    %934 = vperm.xlu0 %933, %v916
    %v935 = vpop.permute.xlu0 %934
    %938 = vset.pattern.permute.xlu0 0
    %939 = vperm.xlu0 %938, %v917
    %v940 = vpop.permute.xlu0 %939
    %943 = vset.pattern.permute.xlu0 0
    %944 = vperm.xlu0 %943, %v918
    %v945 = vpop.permute.xlu0 %944
    %948 = vset.pattern.permute.xlu0 0
    %949 = vperm.xlu0 %948, %v919
    %v950 = vpop.permute.xlu0 %949
    %953 = vset.pattern.permute.xlu0 0
    %954 = vperm.xlu0 %953, %v920
    %v955 = vpop.permute.xlu0 %954
    %958 = vset.pattern.permute.xlu0 0
    %959 = vperm.xlu0 %958, %v921
    %v960 = vpop.permute.xlu0 %959
    %v970 = vunpack.c.l.b16 %v901
    %v971 = vunpack.c.l.b16 %v902
    %v972 = vunpack.c.l.b16 %v903
    %v973 = vunpack.c.l.b16 %v904
    %v974 = vunpack.c.l.b16 %v905
    %v975 = vunpack.c.l.b16 %v906
    %v976 = vunpack.c.l.b16 %v907
    %v977 = vunpack.c.l.b16 %v908
    %v978 = vpack.c.b16 %v971, %v970
    %v979 = vpack.c.b16 %v973, %v972
    %v980 = vpack.c.b16 %v975, %v974
    %v981 = vpack.c.b16 %v977, %v976
    %v983 = vsel %vm286, %v978, 0
    %v986 = vsel %vm286, %v979, 0
    %v989 = vsel %vm286, %v980, 0
    %v992 = vsel %vm286, %v981, 0
    %994 = vmatprep.subr.bf16.mxu0 0
    %995 = vmatpush1.bf16.msra.mxu0 %v909
    %996 = vmatprep.subr.bf16.mxu0 0
    %997 = vmatpush1.bf16.msra.mxu0 %v910
    %998 = vmatprep.subr.bf16.mxu0 0
    %999 = vmatpush1.bf16.msra.mxu0 %v911
    %1000 = vmatprep.subr.bf16.mxu0 0
    %1001 = vmatpush1.bf16.msra.mxu0 %v912
    %1002 = vmatprep.subr.bf16.mxu0 0
    %1003 = vmatpush1.bf16.msra.mxu0 0
    %1004 = vmatprep.subr.bf16.mxu0 0
    %1005 = vmatpush1.bf16.msra.mxu0 0
    %1006 = vmatprep.subr.bf16.mxu0 0
    %1007 = vmatpush1.bf16.msra.mxu0 0
    %1008 = vmatprep.subr.bf16.mxu0 0
    %1009 = vmatpush1.bf16.msra.mxu0 0
    %1010 = vmatprep.subr.bf16.mxu0 0
    %1011 = vmatpush1.bf16.msra.mxu0 0
    %1012 = vmatprep.subr.bf16.mxu0 0
    %1013 = vmatpush1.bf16.msra.mxu0 0
    %1014 = vmatprep.subr.bf16.mxu0 0
    %1015 = vmatpush1.bf16.msra.mxu0 0
    %1016 = vmatprep.subr.bf16.mxu0 0
    %1017 = vmatpush1.bf16.msra.mxu0 0
    %1018 = vmatprep.subr.bf16.mxu0 0
    %1019 = vmatpush1.bf16.msra.mxu0 0
    %1020 = vmatprep.subr.bf16.mxu0 0
    %1021 = vmatpush1.bf16.msra.mxu0 0
    %1022 = vmatprep.subr.bf16.mxu0 0
    %1023 = vmatpush1.bf16.msra.mxu0 0
    %1024 = vmatprep.subr.bf16.mxu0 0
    %1025 = vmatpush1.bf16.msra.mxu0 0
    %1026 = vmatprep.mubr.bf16.mxu0 0
    %1027 = vmatmul.mubr.bf16.gmra.mrb[0].mxu0 %v983
    %v1028 = vpop.f32.mrb[0].mxu0
    %v1029 = vadd.f32 %v925, %v1028
    %v1030 = vpop.f32.mrb[0].mxu0
    %v1031 = vpop.f32.mrb[0].mxu0
    %v1032 = vadd.f32 %v930, %v1031
    %v1033 = vpop.f32.mrb[0].mxu0
    %1034 = vmatprep.mubr.bf16.mxu0 0
    %1035 = vmatmul.mubr.bf16.gmra.mrb[0].mxu0 %v986
    %v1036 = vpop.f32.mrb[0].mxu0
    %v1037 = vadd.f32 %v935, %v1036
    %v1038 = vpop.f32.mrb[0].mxu0
    %v1039 = vpop.f32.mrb[0].mxu0
    %v1040 = vadd.f32 %v940, %v1039
    %v1041 = vpop.f32.mrb[0].mxu0
    %1042 = vmatprep.mubr.bf16.mxu0 0
    %1043 = vmatmul.mubr.bf16.gmra.mrb[0].mxu0 %v989
    %v1044 = vpop.f32.mrb[0].mxu0
    %v1045 = vadd.f32 %v945, %v1044
    %v1046 = vpop.f32.mrb[0].mxu0
    %v1047 = vpop.f32.mrb[0].mxu0
    %v1048 = vadd.f32 %v950, %v1047
    %v1049 = vpop.f32.mrb[0].mxu0
    %1050 = vmatprep.mubr.bf16.mxu0 0
    %1051 = vmatmul.mubr.bf16.gmra.mrb[0].mxu0 %v992
    %v1052 = vpop.f32.mrb[0].mxu0
    %v1053 = vadd.f32 %v955, %v1052
    %v1054 = vpop.f32.mrb[0].mxu0
    %v1055 = vpop.f32.mrb[0].mxu0
    %v1056 = vadd.f32 %v960, %v1055
    %v1057 = vpop.f32.mrb[0].mxu0
    %1058 = vdwg.mxu0
    %v1059 = vmax.f32 %v1029, 0.0
    %v1060 = vmax.f32 %v1032, 0.0
    %v1061 = vmax.f32 %v1037, 0.0
    %v1062 = vmax.f32 %v1040, 0.0
    %v1063 = vmax.f32 %v1045, 0.0
    %v1064 = vmax.f32 %v1048, 0.0
    %v1065 = vmax.f32 %v1053, 0.0
    %v1066 = vmax.f32 %v1056, 0.0
    %s1067 = scalar_lea.vmem %s6, 32
    %v1068 = vld [vmem:[%s1067] sm:$0xf]
    %v1069 = vld [vmem:[%s1067 + $0x4] sm:$0xf]
    %v1070 = vld [vmem:[%s1067 + $0x8] sm:$0xf]
    %v1071 = vld [vmem:[%s1067 + $0xc] sm:$0xf]
    %v1072 = vld [vmem:[%s1067 + $0x10] sm:$0xf]
    %v1073 = vld [vmem:[%s1067 + $0x14] sm:$0xf]
    %v1074 = vld [vmem:[%s1067 + $0x18] sm:$0xf]
    %v1075 = vld [vmem:[%s1067 + $0x1c] sm:$0xf]
    %v1076 = vpack.c.bf16 %v1060, %v1059
    %v1077 = vpack.c.bf16 %v1062, %v1061
    %v1078 = vpack.c.bf16 %v1064, %v1063
    %v1079 = vpack.c.bf16 %v1066, %v1065
    %s1080 = scalar_lea.vmem %s7, 64
    %v1081 = vld [vmem:[%s1080] sm:$0xff]
    %v1082 = vld [vmem:[%s1080 + $0x8] sm:$0xff]
    %v1083 = vld [vmem:[%s1080 + $0x10] sm:$0xff]
    %v1084 = vld [vmem:[%s1080 + $0x18] sm:$0xff]
    %v1085 = vld [vmem:[%s1080 + $0x20] sm:$0xff]
    %v1086 = vld [vmem:[%s1080 + $0x28] sm:$0xff]
    %v1087 = vld [vmem:[%s1080 + $0x30] sm:$0xff]
    %v1088 = vld [vmem:[%s1080 + $0x38] sm:$0xff]
    %1090 = vset.pattern.permute.xlu0 0
    %1091 = vperm.xlu0 %1090, %v1081
    %v1092 = vpop.permute.xlu0 %1091
    %1095 = vset.pattern.permute.xlu0 0
    %1096 = vperm.xlu0 %1095, %v1082
    %v1097 = vpop.permute.xlu0 %1096
    %1100 = vset.pattern.permute.xlu0 0
    %1101 = vperm.xlu0 %1100, %v1083
    %v1102 = vpop.permute.xlu0 %1101
    %1105 = vset.pattern.permute.xlu0 0
    %1106 = vperm.xlu0 %1105, %v1084
    %v1107 = vpop.permute.xlu0 %1106
    %1110 = vset.pattern.permute.xlu0 0
    %1111 = vperm.xlu0 %1110, %v1085
    %v1112 = vpop.permute.xlu0 %1111
    %1115 = vset.pattern.permute.xlu0 0
    %1116 = vperm.xlu0 %1115, %v1086
    %v1117 = vpop.permute.xlu0 %1116
    %1120 = vset.pattern.permute.xlu0 0
    %1121 = vperm.xlu0 %1120, %v1087
    %v1122 = vpop.permute.xlu0 %1121
    %1125 = vset.pattern.permute.xlu0 0
    %1126 = vperm.xlu0 %1125, %v1088
    %v1127 = vpop.permute.xlu0 %1126
    %v1137 = vunpack.c.l.b16 %v1068
    %v1138 = vunpack.c.l.b16 %v1069
    %v1139 = vunpack.c.l.b16 %v1070
    %v1140 = vunpack.c.l.b16 %v1071
    %v1141 = vunpack.c.l.b16 %v1072
    %v1142 = vunpack.c.l.b16 %v1073
    %v1143 = vunpack.c.l.b16 %v1074
    %v1144 = vunpack.c.l.b16 %v1075
    %v1145 = vpack.c.b16 %v1138, %v1137
    %v1146 = vpack.c.b16 %v1140, %v1139
    %v1147 = vpack.c.b16 %v1142, %v1141
    %v1148 = vpack.c.b16 %v1144, %v1143
    %v1150 = vsel %vm286, %v1145, 0
    %v1153 = vsel %vm286, %v1146, 0
    %v1156 = vsel %vm286, %v1147, 0
    %v1159 = vsel %vm286, %v1148, 0
    %1161 = vmatprep.subr.bf16.mxu0 0
    %1162 = vmatpush1.bf16.msra.mxu0 %v1076
    %1163 = vmatprep.subr.bf16.mxu0 0
    %1164 = vmatpush1.bf16.msra.mxu0 %v1077
    %1165 = vmatprep.subr.bf16.mxu0 0
    %1166 = vmatpush1.bf16.msra.mxu0 %v1078
    %1167 = vmatprep.subr.bf16.mxu0 0
    %1168 = vmatpush1.bf16.msra.mxu0 %v1079
    %1169 = vmatprep.subr.bf16.mxu0 0
    %1170 = vmatpush1.bf16.msra.mxu0 0
    %1171 = vmatprep.subr.bf16.mxu0 0
    %1172 = vmatpush1.bf16.msra.mxu0 0
    %1173 = vmatprep.subr.bf16.mxu0 0
    %1174 = vmatpush1.bf16.msra.mxu0 0
    %1175 = vmatprep.subr.bf16.mxu0 0
    %1176 = vmatpush1.bf16.msra.mxu0 0
    %1177 = vmatprep.subr.bf16.mxu0 0
    %1178 = vmatpush1.bf16.msra.mxu0 0
    %1179 = vmatprep.subr.bf16.mxu0 0
    %1180 = vmatpush1.bf16.msra.mxu0 0
    %1181 = vmatprep.subr.bf16.mxu0 0
    %1182 = vmatpush1.bf16.msra.mxu0 0
    %1183 = vmatprep.subr.bf16.mxu0 0
    %1184 = vmatpush1.bf16.msra.mxu0 0
    %1185 = vmatprep.subr.bf16.mxu0 0
    %1186 = vmatpush1.bf16.msra.mxu0 0
    %1187 = vmatprep.subr.bf16.mxu0 0
    %1188 = vmatpush1.bf16.msra.mxu0 0
    %1189 = vmatprep.subr.bf16.mxu0 0
    %1190 = vmatpush1.bf16.msra.mxu0 0
    %1191 = vmatprep.subr.bf16.mxu0 0
    %1192 = vmatpush1.bf16.msra.mxu0 0
    %1193 = vmatprep.mubr.bf16.mxu0 0
    %1194 = vmatmul.mubr.bf16.gmra.mrb[0].mxu0 %v1150
    %v1195 = vpop.f32.mrb[0].mxu0
    %v1196 = vadd.f32 %v1092, %v1195
    %v1197 = vpop.f32.mrb[0].mxu0
    %v1198 = vpop.f32.mrb[0].mxu0
    %v1199 = vadd.f32 %v1097, %v1198
    %v1200 = vpop.f32.mrb[0].mxu0
    %1201 = vmatprep.mubr.bf16.mxu0 0
    %1202 = vmatmul.mubr.bf16.gmra.mrb[0].mxu0 %v1153
    %v1203 = vpop.f32.mrb[0].mxu0
    %v1204 = vadd.f32 %v1102, %v1203
    %v1205 = vpop.f32.mrb[0].mxu0
    %v1206 = vpop.f32.mrb[0].mxu0
    %v1207 = vadd.f32 %v1107, %v1206
    %v1208 = vpop.f32.mrb[0].mxu0
    %1209 = vmatprep.mubr.bf16.mxu0 0
    %1210 = vmatmul.mubr.bf16.gmra.mrb[0].mxu0 %v1156
    %v1211 = vpop.f32.mrb[0].mxu0
    %v1212 = vadd.f32 %v1112, %v1211
    %v1213 = vpop.f32.mrb[0].mxu0
    %v1214 = vpop.f32.mrb[0].mxu0
    %v1215 = vadd.f32 %v1117, %v1214
    %v1216 = vpop.f32.mrb[0].mxu0
    %1217 = vmatprep.mubr.bf16.mxu0 0
    %1218 = vmatmul.mubr.bf16.gmra.mrb[0].mxu0 %v1159
    %v1219 = vpop.f32.mrb[0].mxu0
    %v1220 = vadd.f32 %v1122, %v1219
    %v1221 = vpop.f32.mrb[0].mxu0
    %v1222 = vpop.f32.mrb[0].mxu0
    %v1223 = vadd.f32 %v1127, %v1222
    %v1224 = vpop.f32.mrb[0].mxu0
    %1225 = vdwg.mxu0
    %v1226 = vmax.f32 %v1196, 0.0
    %v1227 = vmax.f32 %v1199, 0.0
    %v1228 = vmax.f32 %v1204, 0.0
    %v1229 = vmax.f32 %v1207, 0.0
    %v1230 = vmax.f32 %v1212, 0.0
    %v1231 = vmax.f32 %v1215, 0.0
    %v1232 = vmax.f32 %v1220, 0.0
    %v1233 = vmax.f32 %v1223, 0.0
    %s1234 = scalar_lea.vmem %s8, 16
    %v1235 = vld [vmem:[%s1234] sm:$0xf]
    %v1236 = vld [vmem:[%s1234 + $0x4] sm:$0xf]
    %v1237 = vld [vmem:[%s1234 + $0x8] sm:$0xf]
    %v1238 = vld [vmem:[%s1234 + $0xc] sm:$0xf]
    %v1239 = vpack.c.bf16 %v1227, %v1226
    %v1240 = vpack.c.bf16 %v1229, %v1228
    %v1241 = vpack.c.bf16 %v1231, %v1230
    %v1242 = vpack.c.bf16 %v1233, %v1232
    %s1243 = scalar_lea.vmem %s9, 32
    %v1244 = vld [vmem:[%s1243] sm:$0xff]
    %v1245 = vld [vmem:[%s1243 + $0x8] sm:$0xff]
    %v1246 = vld [vmem:[%s1243 + $0x10] sm:$0xff]
    %v1247 = vld [vmem:[%s1243 + $0x18] sm:$0xff]
    %1249 = vset.pattern.permute.xlu0 0
    %1250 = vperm.xlu0 %1249, %v1244
    %v1251 = vpop.permute.xlu0 %1250
    %1254 = vset.pattern.permute.xlu0 0
    %1255 = vperm.xlu0 %1254, %v1245
    %v1256 = vpop.permute.xlu0 %1255
    %1259 = vset.pattern.permute.xlu0 0
    %1260 = vperm.xlu0 %1259, %v1246
    %v1261 = vpop.permute.xlu0 %1260
    %1264 = vset.pattern.permute.xlu0 0
    %1265 = vperm.xlu0 %1264, %v1247
    %v1266 = vpop.permute.xlu0 %1265
    %v1272 = vunpack.c.l.b16 %v1235
    %v1273 = vunpack.c.l.b16 %v1236
    %v1274 = vunpack.c.l.b16 %v1237
    %v1275 = vunpack.c.l.b16 %v1238
    %v1276 = vpack.c.b16 %v1273, %v1272
    %v1277 = vpack.c.b16 %v1275, %v1274
    %v1279 = vsel %vm286, %v1276, 0
    %v1282 = vsel %vm286, %v1277, 0
    %1284 = vmatprep.subr.bf16.mxu0 0
    %1285 = vmatpush1.bf16.msra.mxu0 %v1239
    %1286 = vmatprep.subr.bf16.mxu0 0
    %1287 = vmatpush1.bf16.msra.mxu0 %v1240
    %1288 = vmatprep.subr.bf16.mxu0 0
    %1289 = vmatpush1.bf16.msra.mxu0 %v1241
    %1290 = vmatprep.subr.bf16.mxu0 0
    %1291 = vmatpush1.bf16.msra.mxu0 %v1242
    %1292 = vmatprep.subr.bf16.mxu0 0
    %1293 = vmatpush1.bf16.msra.mxu0 0
    %1294 = vmatprep.subr.bf16.mxu0 0
    %1295 = vmatpush1.bf16.msra.mxu0 0
    %1296 = vmatprep.subr.bf16.mxu0 0
    %1297 = vmatpush1.bf16.msra.mxu0 0
    %1298 = vmatprep.subr.bf16.mxu0 0
    %1299 = vmatpush1.bf16.msra.mxu0 0
    %1300 = vmatprep.subr.bf16.mxu0 0
    %1301 = vmatpush1.bf16.msra.mxu0 0
    %1302 = vmatprep.subr.bf16.mxu0 0
    %1303 = vmatpush1.bf16.msra.mxu0 0
    %1304 = vmatprep.subr.bf16.mxu0 0
    %1305 = vmatpush1.bf16.msra.mxu0 0
    %1306 = vmatprep.subr.bf16.mxu0 0
    %1307 = vmatpush1.bf16.msra.mxu0 0
    %1308 = vmatprep.subr.bf16.mxu0 0
    %1309 = vmatpush1.bf16.msra.mxu0 0
    %1310 = vmatprep.subr.bf16.mxu0 0
    %1311 = vmatpush1.bf16.msra.mxu0 0
    %1312 = vmatprep.subr.bf16.mxu0 0
    %1313 = vmatpush1.bf16.msra.mxu0 0
    %1314 = vmatprep.subr.bf16.mxu0 0
    %1315 = vmatpush1.bf16.msra.mxu0 0
    %1316 = vmatprep.mubr.bf16.mxu0 0
    %1317 = vmatmul.mubr.bf16.gmra.mrb[0].mxu0 %v1279
    %v1318 = vpop.f32.mrb[0].mxu0
    %v1319 = vadd.f32 %v1251, %v1318
    %v1320 = vpop.f32.mrb[0].mxu0
    %v1321 = vpop.f32.mrb[0].mxu0
    %v1322 = vadd.f32 %v1256, %v1321
    %v1323 = vpop.f32.mrb[0].mxu0
    %1324 = vmatprep.mubr.bf16.mxu0 0
    %1325 = vmatmul.mubr.bf16.gmra.mrb[0].mxu0 %v1282
    %v1326 = vpop.f32.mrb[0].mxu0
    %v1327 = vadd.f32 %v1261, %v1326
    %v1328 = vpop.f32.mrb[0].mxu0
    %v1329 = vpop.f32.mrb[0].mxu0
    %v1330 = vadd.f32 %v1266, %v1329
    %v1331 = vpop.f32.mrb[0].mxu0
    %1332 = vdwg.mxu0
    %1333 = vmatprep.subr.mxu0 0.0
    %1334 = vmatpush1.msra.mxu0 %v721
    %1335 = vmatprep.subr.mxu0 0.0
    %1336 = vmatpush1.msra.mxu0 %v722
    %1337 = vmatprep.subr.mxu0 0.0
    %1338 = vmatpush1.msra.mxu0 0.0
    %1339 = vmatprep.subr.mxu0 0.0
    %1340 = vmatpush1.msra.mxu0 0.0
    %1341 = vmatprep.subr.mxu0 0.0
    %1342 = vmatpush1.msra.mxu0 0.0
    %1343 = vmatprep.subr.mxu0 0.0
    %1344 = vmatpush1.msra.mxu0 0.0
    %1345 = vmatprep.subr.mxu0 0.0
    %1346 = vmatpush1.msra.mxu0 0.0
    %1347 = vmatprep.subr.mxu0 0.0
    %1348 = vmatpush1.msra.mxu0 0.0
    %1349 = vmatprep.subr.mxu0 0.0
    %1350 = vmatpush1.msra.mxu0 0.0
    %1351 = vmatprep.subr.mxu0 0.0
    %1352 = vmatpush1.msra.mxu0 0.0
    %1353 = vmatprep.subr.mxu0 0.0
    %1354 = vmatpush1.msra.mxu0 0.0
    %1355 = vmatprep.subr.mxu0 0.0
    %1356 = vmatpush1.msra.mxu0 0.0
    %1357 = vmatprep.subr.mxu0 0.0
    %1358 = vmatpush1.msra.mxu0 0.0
    %1359 = vmatprep.subr.mxu0 0.0
    %1360 = vmatpush1.msra.mxu0 0.0
    %1361 = vmatprep.subr.mxu0 0.0
    %1362 = vmatpush1.msra.mxu0 0.0
    %1363 = vmatprep.subr.mxu0 0.0
    %1364 = vmatpush1.msra.mxu0 0.0
    %1365 = vmatprep.subr.mxu0 0.0
    %1366 = vmatpush1.msra.mxu0 0.0
    %1367 = vmatprep.subr.mxu0 0.0
    %1368 = vmatpush1.msra.mxu0 0.0
    %1369 = vmatprep.subr.mxu0 0.0
    %1370 = vmatpush1.msra.mxu0 0.0
    %1371 = vmatprep.subr.mxu0 0.0
    %1372 = vmatpush1.msra.mxu0 0.0
    %1373 = vmatprep.subr.mxu0 0.0
    %1374 = vmatpush1.msra.mxu0 0.0
    %1375 = vmatprep.subr.mxu0 0.0
    %1376 = vmatpush1.msra.mxu0 0.0
    %1377 = vmatprep.subr.mxu0 0.0
    %1378 = vmatpush1.msra.mxu0 0.0
    %1379 = vmatprep.subr.mxu0 0.0
    %1380 = vmatpush1.msra.mxu0 0.0
    %1381 = vmatprep.subr.mxu0 0.0
    %1382 = vmatpush1.msra.mxu0 0.0
    %1383 = vmatprep.subr.mxu0 0.0
    %1384 = vmatpush1.msra.mxu0 0.0
    %1385 = vmatprep.subr.mxu0 0.0
    %1386 = vmatpush1.msra.mxu0 0.0
    %1387 = vmatprep.subr.mxu0 0.0
    %1388 = vmatpush1.msra.mxu0 0.0
    %1389 = vmatprep.subr.mxu0 0.0
    %1390 = vmatpush1.msra.mxu0 0.0
    %1391 = vmatprep.subr.mxu0 0.0
    %1392 = vmatpush1.msra.mxu0 0.0
    %1393 = vmatprep.subr.mxu0 0.0
    %1394 = vmatpush1.msra.mxu0 0.0
    %1395 = vmatprep.subr.mxu0 0.0
    %1396 = vmatpush1.msra.mxu0 0.0
    %1397 = vmatprep.mubr.f32.mxu0 0.0
    %1398 = vmatmul.mubr.f32.gmra.mrb[0].mxu0 %v635
    %v1399 = vpop.f32.mrb[0].mxu0
    %v1400 = vadd.f32 0.0, %v1399
    %v1401 = vpop.f32.mrb[0].mxu0
    %1402 = vmatprep.mubr.f32.mxu0 0.0
    %1403 = vmatmul.mubr.f32.gmra.mrb[0].mxu0 %v638
    %v1404 = vpop.f32.mrb[0].mxu0
    %v1405 = vadd.f32 0.0, %v1404
    %v1406 = vpop.f32.mrb[0].mxu0
    %1407 = vdwg.mxu0
    %v1408 = vmul.f32 %v1319, 1.442695
    %v1409 = vpow.pop %v1408
    %v1410 = vmul.f32 %v1322, 1.442695
    %v1411 = vpow.pop %v1410
    %v1412 = vmul.f32 %v1400, %v1409
    %v1413 = vmul.f32 %v1405, %v1411
    %v1414 = vadd.f32 %v1412, %v1327
    %v1415 = vadd.f32 %v1413, %v1330
    %v1416 = vsel %vm723, %v1319, 0.0
    %v1417 = vsel %vm723, %v1322, 0.0
    %v1418 = vadd.f32 %v1416, %v1417
    %v1419 = vrot.slane %v1418, 4
    %v1420 = vadd.f32 %v1418, %v1419
    %v1421 = vrot.slane %v1420, 2
    %v1422 = vadd.f32 %v1420, %v1421
    %v1423 = vrot.slane %v1422, 1
    %v1424 = vadd.f32 %v1422, %v1423
    %v1425 = vadd.f32 %v733, %v1424
    %s1426 = scalar_lea.vmem %s10, 16
    %1427 = vst.msk [vmem:[%s1426] sm:$0xff] %vm723, %v1414
    %1428 = vst.msk [vmem:[%s1426 + $0x8] sm:$0xff] %vm723, %v1415
    %v1429 = vpack.c.bf16 %v1415, %v1414
    %s1430 = scalar_lea.vmem %s2, 64
    %v1431 = vld [vmem:[%s1430] sm:$0xf]
    %v1432 = vld [vmem:[%s1430 + $0x4] sm:$0xf]
    %v1433 = vld [vmem:[%s1430 + $0x8] sm:$0xf]
    %v1434 = vld [vmem:[%s1430 + $0xc] sm:$0xf]
    %v1435 = vld [vmem:[%s1430 + $0x10] sm:$0xf]
    %v1436 = vld [vmem:[%s1430 + $0x14] sm:$0xf]
    %v1437 = vld [vmem:[%s1430 + $0x18] sm:$0xf]
    %v1438 = vld [vmem:[%s1430 + $0x1c] sm:$0xf]
    %s1439 = scalar_lea.vmem %s3, 128
    %v1440 = vld [vmem:[%s1439] sm:$0xff]
    %v1441 = vld [vmem:[%s1439 + $0x8] sm:$0xff]
    %v1442 = vld [vmem:[%s1439 + $0x10] sm:$0xff]
    %v1443 = vld [vmem:[%s1439 + $0x18] sm:$0xff]
    %v1444 = vld [vmem:[%s1439 + $0x20] sm:$0xff]
    %v1445 = vld [vmem:[%s1439 + $0x28] sm:$0xff]
    %v1446 = vld [vmem:[%s1439 + $0x30] sm:$0xff]
    %v1447 = vld [vmem:[%s1439 + $0x38] sm:$0xff]
    %1449 = vset.pattern.permute.xlu0 0
    %1450 = vperm.xlu0 %1449, %v1440
    %v1451 = vpop.permute.xlu0 %1450
    %1454 = vset.pattern.permute.xlu0 0
    %1455 = vperm.xlu0 %1454, %v1441
    %v1456 = vpop.permute.xlu0 %1455
    %1459 = vset.pattern.permute.xlu0 0
    %1460 = vperm.xlu0 %1459, %v1442
    %v1461 = vpop.permute.xlu0 %1460
    %1464 = vset.pattern.permute.xlu0 0
    %1465 = vperm.xlu0 %1464, %v1443
    %v1466 = vpop.permute.xlu0 %1465
    %1469 = vset.pattern.permute.xlu0 0
    %1470 = vperm.xlu0 %1469, %v1444
    %v1471 = vpop.permute.xlu0 %1470
    %1474 = vset.pattern.permute.xlu0 0
    %1475 = vperm.xlu0 %1474, %v1445
    %v1476 = vpop.permute.xlu0 %1475
    %1479 = vset.pattern.permute.xlu0 0
    %1480 = vperm.xlu0 %1479, %v1446
    %v1481 = vpop.permute.xlu0 %1480
    %1484 = vset.pattern.permute.xlu0 0
    %1485 = vperm.xlu0 %1484, %v1447
    %v1486 = vpop.permute.xlu0 %1485
    %v1496 = vunpack.c.l.b16 %v1431
    %v1497 = vunpack.c.l.b16 %v1432
    %v1498 = vunpack.c.l.b16 %v1433
    %v1499 = vunpack.c.l.b16 %v1434
    %v1500 = vunpack.c.l.b16 %v1435
    %v1501 = vunpack.c.l.b16 %v1436
    %v1502 = vunpack.c.l.b16 %v1437
    %v1503 = vunpack.c.l.b16 %v1438
    %v1504 = vpack.c.b16 %v1497, %v1496
    %v1505 = vpack.c.b16 %v1499, %v1498
    %v1506 = vpack.c.b16 %v1501, %v1500
    %v1507 = vpack.c.b16 %v1503, %v1502
    %v1509 = vsel %vm120, %v1504, 0
    %v1512 = vsel %vm120, %v1505, 0
    %v1515 = vsel %vm120, %v1506, 0
    %v1518 = vsel %vm120, %v1507, 0
    %1520 = vmatprep.subr.bf16.mxu0 0
    %1521 = vmatpush1.bf16.msra.mxu0 %v1429
    %1522 = vmatprep.subr.bf16.mxu0 0
    %1523 = vmatpush1.bf16.msra.mxu0 0
    %1524 = vmatprep.subr.bf16.mxu0 0
    %1525 = vmatpush1.bf16.msra.mxu0 0
    %1526 = vmatprep.subr.bf16.mxu0 0
    %1527 = vmatpush1.bf16.msra.mxu0 0
    %1528 = vmatprep.subr.bf16.mxu0 0
    %1529 = vmatpush1.bf16.msra.mxu0 0
    %1530 = vmatprep.subr.bf16.mxu0 0
    %1531 = vmatpush1.bf16.msra.mxu0 0
    %1532 = vmatprep.subr.bf16.mxu0 0
    %1533 = vmatpush1.bf16.msra.mxu0 0
    %1534 = vmatprep.subr.bf16.mxu0 0
    %1535 = vmatpush1.bf16.msra.mxu0 0
    %1536 = vmatprep.subr.bf16.mxu0 0
    %1537 = vmatpush1.bf16.msra.mxu0 0
    %1538 = vmatprep.subr.bf16.mxu0 0
    %1539 = vmatpush1.bf16.msra.mxu0 0
    %1540 = vmatprep.subr.bf16.mxu0 0
    %1541 = vmatpush1.bf16.msra.mxu0 0
    %1542 = vmatprep.subr.bf16.mxu0 0
    %1543 = vmatpush1.bf16.msra.mxu0 0
    %1544 = vmatprep.subr.bf16.mxu0 0
    %1545 = vmatpush1.bf16.msra.mxu0 0
    %1546 = vmatprep.subr.bf16.mxu0 0
    %1547 = vmatpush1.bf16.msra.mxu0 0
    %1548 = vmatprep.subr.bf16.mxu0 0
    %1549 = vmatpush1.bf16.msra.mxu0 0
    %1550 = vmatprep.subr.bf16.mxu0 0
    %1551 = vmatpush1.bf16.msra.mxu0 0
    %1552 = vmatprep.mubr.bf16.mxu0 0
    %1553 = vmatmul.mubr.bf16.gmra.mrb[0].mxu0 %v1509
    %v1554 = vpop.f32.mrb[0].mxu0
    %v1555 = vadd.f32 %v1451, %v1554
    %v1556 = vpop.f32.mrb[0].mxu0
    %v1557 = vpop.f32.mrb[0].mxu0
    %v1558 = vadd.f32 %v1456, %v1557
    %v1559 = vpop.f32.mrb[0].mxu0
    %1560 = vmatprep.mubr.bf16.mxu0 0
    %1561 = vmatmul.mubr.bf16.gmra.mrb[0].mxu0 %v1512
    %v1562 = vpop.f32.mrb[0].mxu0
    %v1563 = vadd.f32 %v1461, %v1562
    %v1564 = vpop.f32.mrb[0].mxu0
    %v1565 = vpop.f32.mrb[0].mxu0
    %v1566 = vadd.f32 %v1466, %v1565
    %v1567 = vpop.f32.mrb[0].mxu0
    %1568 = vmatprep.mubr.bf16.mxu0 0
    %1569 = vmatmul.mubr.bf16.gmra.mrb[0].mxu0 %v1515
    %v1570 = vpop.f32.mrb[0].mxu0
    %v1571 = vadd.f32 %v1471, %v1570
    %v1572 = vpop.f32.mrb[0].mxu0
    %v1573 = vpop.f32.mrb[0].mxu0
    %v1574 = vadd.f32 %v1476, %v1573
    %v1575 = vpop.f32.mrb[0].mxu0
    %1576 = vmatprep.mubr.bf16.mxu0 0
    %1577 = vmatmul.mubr.bf16.gmra.mrb[0].mxu0 %v1518
    %v1578 = vpop.f32.mrb[0].mxu0
    %v1579 = vadd.f32 %v1481, %v1578
    %v1580 = vpop.f32.mrb[0].mxu0
    %v1581 = vpop.f32.mrb[0].mxu0
    %v1582 = vadd.f32 %v1486, %v1581
    %v1583 = vpop.f32.mrb[0].mxu0
    %1584 = vdwg.mxu0
    %v1585 = vmax.f32 %v1555, 0.0
    %v1586 = vmax.f32 %v1558, 0.0
    %v1587 = vmax.f32 %v1563, 0.0
    %v1588 = vmax.f32 %v1566, 0.0
    %v1589 = vmax.f32 %v1571, 0.0
    %v1590 = vmax.f32 %v1574, 0.0
    %v1591 = vmax.f32 %v1579, 0.0
    %v1592 = vmax.f32 %v1582, 0.0
    %s1593 = scalar_lea.vmem %s4, 64
    %v1594 = vld [vmem:[%s1593] sm:$0xf]
    %v1595 = vld [vmem:[%s1593 + $0x4] sm:$0xf]
    %v1596 = vld [vmem:[%s1593 + $0x8] sm:$0xf]
    %v1597 = vld [vmem:[%s1593 + $0xc] sm:$0xf]
    %v1598 = vld [vmem:[%s1593 + $0x10] sm:$0xf]
    %v1599 = vld [vmem:[%s1593 + $0x14] sm:$0xf]
    %v1600 = vld [vmem:[%s1593 + $0x18] sm:$0xf]
    %v1601 = vld [vmem:[%s1593 + $0x1c] sm:$0xf]
    %v1602 = vpack.c.bf16 %v1586, %v1585
    %v1603 = vpack.c.bf16 %v1588, %v1587
    %v1604 = vpack.c.bf16 %v1590, %v1589
    %v1605 = vpack.c.bf16 %v1592, %v1591
    %s1606 = scalar_lea.vmem %s5, 128
    %v1607 = vld [vmem:[%s1606] sm:$0xff]
    %v1608 = vld [vmem:[%s1606 + $0x8] sm:$0xff]
    %v1609 = vld [vmem:[%s1606 + $0x10] sm:$0xff]
    %v1610 = vld [vmem:[%s1606 + $0x18] sm:$0xff]
    %v1611 = vld [vmem:[%s1606 + $0x20] sm:$0xff]
    %v1612 = vld [vmem:[%s1606 + $0x28] sm:$0xff]
    %v1613 = vld [vmem:[%s1606 + $0x30] sm:$0xff]
    %v1614 = vld [vmem:[%s1606 + $0x38] sm:$0xff]
    %1616 = vset.pattern.permute.xlu0 0
    %1617 = vperm.xlu0 %1616, %v1607
    %v1618 = vpop.permute.xlu0 %1617
    %1621 = vset.pattern.permute.xlu0 0
    %1622 = vperm.xlu0 %1621, %v1608
    %v1623 = vpop.permute.xlu0 %1622
    %1626 = vset.pattern.permute.xlu0 0
    %1627 = vperm.xlu0 %1626, %v1609
    %v1628 = vpop.permute.xlu0 %1627
    %1631 = vset.pattern.permute.xlu0 0
    %1632 = vperm.xlu0 %1631, %v1610
    %v1633 = vpop.permute.xlu0 %1632
    %1636 = vset.pattern.permute.xlu0 0
    %1637 = vperm.xlu0 %1636, %v1611
    %v1638 = vpop.permute.xlu0 %1637
    %1641 = vset.pattern.permute.xlu0 0
    %1642 = vperm.xlu0 %1641, %v1612
    %v1643 = vpop.permute.xlu0 %1642
    %1646 = vset.pattern.permute.xlu0 0
    %1647 = vperm.xlu0 %1646, %v1613
    %v1648 = vpop.permute.xlu0 %1647
    %1651 = vset.pattern.permute.xlu0 0
    %1652 = vperm.xlu0 %1651, %v1614
    %v1653 = vpop.permute.xlu0 %1652
    %v1663 = vunpack.c.l.b16 %v1594
    %v1664 = vunpack.c.l.b16 %v1595
    %v1665 = vunpack.c.l.b16 %v1596
    %v1666 = vunpack.c.l.b16 %v1597
    %v1667 = vunpack.c.l.b16 %v1598
    %v1668 = vunpack.c.l.b16 %v1599
    %v1669 = vunpack.c.l.b16 %v1600
    %v1670 = vunpack.c.l.b16 %v1601
    %v1671 = vpack.c.b16 %v1664, %v1663
    %v1672 = vpack.c.b16 %v1666, %v1665
    %v1673 = vpack.c.b16 %v1668, %v1667
    %v1674 = vpack.c.b16 %v1670, %v1669
    %v1676 = vsel %vm286, %v1671, 0
    %v1679 = vsel %vm286, %v1672, 0
    %v1682 = vsel %vm286, %v1673, 0
    %v1685 = vsel %vm286, %v1674, 0
    %1687 = vmatprep.subr.bf16.mxu0 0
    %1688 = vmatpush1.bf16.msra.mxu0 %v1602
    %1689 = vmatprep.subr.bf16.mxu0 0
    %1690 = vmatpush1.bf16.msra.mxu0 %v1603
    %1691 = vmatprep.subr.bf16.mxu0 0
    %1692 = vmatpush1.bf16.msra.mxu0 %v1604
    %1693 = vmatprep.subr.bf16.mxu0 0
    %1694 = vmatpush1.bf16.msra.mxu0 %v1605
    %1695 = vmatprep.subr.bf16.mxu0 0
    %1696 = vmatpush1.bf16.msra.mxu0 0
    %1697 = vmatprep.subr.bf16.mxu0 0
    %1698 = vmatpush1.bf16.msra.mxu0 0
    %1699 = vmatprep.subr.bf16.mxu0 0
    %1700 = vmatpush1.bf16.msra.mxu0 0
    %1701 = vmatprep.subr.bf16.mxu0 0
    %1702 = vmatpush1.bf16.msra.mxu0 0
    %1703 = vmatprep.subr.bf16.mxu0 0
    %1704 = vmatpush1.bf16.msra.mxu0 0
    %1705 = vmatprep.subr.bf16.mxu0 0
    %1706 = vmatpush1.bf16.msra.mxu0 0
    %1707 = vmatprep.subr.bf16.mxu0 0
    %1708 = vmatpush1.bf16.msra.mxu0 0
    %1709 = vmatprep.subr.bf16.mxu0 0
    %1710 = vmatpush1.bf16.msra.mxu0 0
    %1711 = vmatprep.subr.bf16.mxu0 0
    %1712 = vmatpush1.bf16.msra.mxu0 0
    %1713 = vmatprep.subr.bf16.mxu0 0
    %1714 = vmatpush1.bf16.msra.mxu0 0
    %1715 = vmatprep.subr.bf16.mxu0 0
    %1716 = vmatpush1.bf16.msra.mxu0 0
    %1717 = vmatprep.subr.bf16.mxu0 0
    %1718 = vmatpush1.bf16.msra.mxu0 0
    %1719 = vmatprep.mubr.bf16.mxu0 0
    %1720 = vmatmul.mubr.bf16.gmra.mrb[0].mxu0 %v1676
    %v1721 = vpop.f32.mrb[0].mxu0
    %v1722 = vadd.f32 %v1618, %v1721
    %v1723 = vpop.f32.mrb[0].mxu0
    %v1724 = vpop.f32.mrb[0].mxu0
    %v1725 = vadd.f32 %v1623, %v1724
    %v1726 = vpop.f32.mrb[0].mxu0
    %1727 = vmatprep.mubr.bf16.mxu0 0
    %1728 = vmatmul.mubr.bf16.gmra.mrb[0].mxu0 %v1679
    %v1729 = vpop.f32.mrb[0].mxu0
    %v1730 = vadd.f32 %v1628, %v1729
    %v1731 = vpop.f32.mrb[0].mxu0
    %v1732 = vpop.f32.mrb[0].mxu0
    %v1733 = vadd.f32 %v1633, %v1732
    %v1734 = vpop.f32.mrb[0].mxu0
    %1735 = vmatprep.mubr.bf16.mxu0 0
    %1736 = vmatmul.mubr.bf16.gmra.mrb[0].mxu0 %v1682
    %v1737 = vpop.f32.mrb[0].mxu0
    %v1738 = vadd.f32 %v1638, %v1737
    %v1739 = vpop.f32.mrb[0].mxu0
    %v1740 = vpop.f32.mrb[0].mxu0
    %v1741 = vadd.f32 %v1643, %v1740
    %v1742 = vpop.f32.mrb[0].mxu0
    %1743 = vmatprep.mubr.bf16.mxu0 0
    %1744 = vmatmul.mubr.bf16.gmra.mrb[0].mxu0 %v1685
    %v1745 = vpop.f32.mrb[0].mxu0
    %v1746 = vadd.f32 %v1648, %v1745
    %v1747 = vpop.f32.mrb[0].mxu0
    %v1748 = vpop.f32.mrb[0].mxu0
    %v1749 = vadd.f32 %v1653, %v1748
    %v1750 = vpop.f32.mrb[0].mxu0
    %1751 = vdwg.mxu0
    %v1752 = vmax.f32 %v1722, 0.0
    %v1753 = vmax.f32 %v1725, 0.0
    %v1754 = vmax.f32 %v1730, 0.0
    %v1755 = vmax.f32 %v1733, 0.0
    %v1756 = vmax.f32 %v1738, 0.0
    %v1757 = vmax.f32 %v1741, 0.0
    %v1758 = vmax.f32 %v1746, 0.0
    %v1759 = vmax.f32 %v1749, 0.0
    %s1760 = scalar_lea.vmem %s6, 64
    %v1761 = vld [vmem:[%s1760] sm:$0xf]
    %v1762 = vld [vmem:[%s1760 + $0x4] sm:$0xf]
    %v1763 = vld [vmem:[%s1760 + $0x8] sm:$0xf]
    %v1764 = vld [vmem:[%s1760 + $0xc] sm:$0xf]
    %v1765 = vld [vmem:[%s1760 + $0x10] sm:$0xf]
    %v1766 = vld [vmem:[%s1760 + $0x14] sm:$0xf]
    %v1767 = vld [vmem:[%s1760 + $0x18] sm:$0xf]
    %v1768 = vld [vmem:[%s1760 + $0x1c] sm:$0xf]
    %v1769 = vpack.c.bf16 %v1753, %v1752
    %v1770 = vpack.c.bf16 %v1755, %v1754
    %v1771 = vpack.c.bf16 %v1757, %v1756
    %v1772 = vpack.c.bf16 %v1759, %v1758
    %s1773 = scalar_lea.vmem %s7, 128
    %v1774 = vld [vmem:[%s1773] sm:$0xff]
    %v1775 = vld [vmem:[%s1773 + $0x8] sm:$0xff]
    %v1776 = vld [vmem:[%s1773 + $0x10] sm:$0xff]
    %v1777 = vld [vmem:[%s1773 + $0x18] sm:$0xff]
    %v1778 = vld [vmem:[%s1773 + $0x20] sm:$0xff]
    %v1779 = vld [vmem:[%s1773 + $0x28] sm:$0xff]
    %v1780 = vld [vmem:[%s1773 + $0x30] sm:$0xff]
    %v1781 = vld [vmem:[%s1773 + $0x38] sm:$0xff]
    %1783 = vset.pattern.permute.xlu0 0
    %1784 = vperm.xlu0 %1783, %v1774
    %v1785 = vpop.permute.xlu0 %1784
    %1788 = vset.pattern.permute.xlu0 0
    %1789 = vperm.xlu0 %1788, %v1775
    %v1790 = vpop.permute.xlu0 %1789
    %1793 = vset.pattern.permute.xlu0 0
    %1794 = vperm.xlu0 %1793, %v1776
    %v1795 = vpop.permute.xlu0 %1794
    %1798 = vset.pattern.permute.xlu0 0
    %1799 = vperm.xlu0 %1798, %v1777
    %v1800 = vpop.permute.xlu0 %1799
    %1803 = vset.pattern.permute.xlu0 0
    %1804 = vperm.xlu0 %1803, %v1778
    %v1805 = vpop.permute.xlu0 %1804
    %1808 = vset.pattern.permute.xlu0 0
    %1809 = vperm.xlu0 %1808, %v1779
    %v1810 = vpop.permute.xlu0 %1809
    %1813 = vset.pattern.permute.xlu0 0
    %1814 = vperm.xlu0 %1813, %v1780
    %v1815 = vpop.permute.xlu0 %1814
    %1818 = vset.pattern.permute.xlu0 0
    %1819 = vperm.xlu0 %1818, %v1781
    %v1820 = vpop.permute.xlu0 %1819
    %v1830 = vunpack.c.l.b16 %v1761
    %v1831 = vunpack.c.l.b16 %v1762
    %v1832 = vunpack.c.l.b16 %v1763
    %v1833 = vunpack.c.l.b16 %v1764
    %v1834 = vunpack.c.l.b16 %v1765
    %v1835 = vunpack.c.l.b16 %v1766
    %v1836 = vunpack.c.l.b16 %v1767
    %v1837 = vunpack.c.l.b16 %v1768
    %v1838 = vpack.c.b16 %v1831, %v1830
    %v1839 = vpack.c.b16 %v1833, %v1832
    %v1840 = vpack.c.b16 %v1835, %v1834
    %v1841 = vpack.c.b16 %v1837, %v1836
    %v1843 = vsel %vm286, %v1838, 0
    %v1846 = vsel %vm286, %v1839, 0
    %v1849 = vsel %vm286, %v1840, 0
    %v1852 = vsel %vm286, %v1841, 0
    %1854 = vmatprep.subr.bf16.mxu0 0
    %1855 = vmatpush1.bf16.msra.mxu0 %v1769
    %1856 = vmatprep.subr.bf16.mxu0 0
    %1857 = vmatpush1.bf16.msra.mxu0 %v1770
    %1858 = vmatprep.subr.bf16.mxu0 0
    %1859 = vmatpush1.bf16.msra.mxu0 %v1771
    %1860 = vmatprep.subr.bf16.mxu0 0
    %1861 = vmatpush1.bf16.msra.mxu0 %v1772
    %1862 = vmatprep.subr.bf16.mxu0 0
    %1863 = vmatpush1.bf16.msra.mxu0 0
    %1864 = vmatprep.subr.bf16.mxu0 0
    %1865 = vmatpush1.bf16.msra.mxu0 0
    %1866 = vmatprep.subr.bf16.mxu0 0
    %1867 = vmatpush1.bf16.msra.mxu0 0
    %1868 = vmatprep.subr.bf16.mxu0 0
    %1869 = vmatpush1.bf16.msra.mxu0 0
    %1870 = vmatprep.subr.bf16.mxu0 0
    %1871 = vmatpush1.bf16.msra.mxu0 0
    %1872 = vmatprep.subr.bf16.mxu0 0
    %1873 = vmatpush1.bf16.msra.mxu0 0
    %1874 = vmatprep.subr.bf16.mxu0 0
    %1875 = vmatpush1.bf16.msra.mxu0 0
    %1876 = vmatprep.subr.bf16.mxu0 0
    %1877 = vmatpush1.bf16.msra.mxu0 0
    %1878 = vmatprep.subr.bf16.mxu0 0
    %1879 = vmatpush1.bf16.msra.mxu0 0
    %1880 = vmatprep.subr.bf16.mxu0 0
    %1881 = vmatpush1.bf16.msra.mxu0 0
    %1882 = vmatprep.subr.bf16.mxu0 0
    %1883 = vmatpush1.bf16.msra.mxu0 0
    %1884 = vmatprep.subr.bf16.mxu0 0
    %1885 = vmatpush1.bf16.msra.mxu0 0
    %1886 = vmatprep.mubr.bf16.mxu0 0
    %1887 = vmatmul.mubr.bf16.gmra.mrb[0].mxu0 %v1843
    %v1888 = vpop.f32.mrb[0].mxu0
    %v1889 = vadd.f32 %v1785, %v1888
    %v1890 = vpop.f32.mrb[0].mxu0
    %v1891 = vpop.f32.mrb[0].mxu0
    %v1892 = vadd.f32 %v1790, %v1891
    %v1893 = vpop.f32.mrb[0].mxu0
    %1894 = vmatprep.mubr.bf16.mxu0 0
    %1895 = vmatmul.mubr.bf16.gmra.mrb[0].mxu0 %v1846
    %v1896 = vpop.f32.mrb[0].mxu0
    %v1897 = vadd.f32 %v1795, %v1896
    %v1898 = vpop.f32.mrb[0].mxu0
    %v1899 = vpop.f32.mrb[0].mxu0
    %v1900 = vadd.f32 %v1800, %v1899
    %v1901 = vpop.f32.mrb[0].mxu0
    %1902 = vmatprep.mubr.bf16.mxu0 0
    %1903 = vmatmul.mubr.bf16.gmra.mrb[0].mxu0 %v1849
    %v1904 = vpop.f32.mrb[0].mxu0
    %v1905 = vadd.f32 %v1805, %v1904
    %v1906 = vpop.f32.mrb[0].mxu0
    %v1907 = vpop.f32.mrb[0].mxu0
    %v1908 = vadd.f32 %v1810, %v1907
    %v1909 = vpop.f32.mrb[0].mxu0
    %1910 = vmatprep.mubr.bf16.mxu0 0
    %1911 = vmatmul.mubr.bf16.gmra.mrb[0].mxu0 %v1852
    %v1912 = vpop.f32.mrb[0].mxu0
    %v1913 = vadd.f32 %v1815, %v1912
    %v1914 = vpop.f32.mrb[0].mxu0
    %v1915 = vpop.f32.mrb[0].mxu0
    %v1916 = vadd.f32 %v1820, %v1915
    %v1917 = vpop.f32.mrb[0].mxu0
    %1918 = vdwg.mxu0
    %v1919 = vmax.f32 %v1889, 0.0
    %v1920 = vmax.f32 %v1892, 0.0
    %v1921 = vmax.f32 %v1897, 0.0
    %v1922 = vmax.f32 %v1900, 0.0
    %v1923 = vmax.f32 %v1905, 0.0
    %v1924 = vmax.f32 %v1908, 0.0
    %v1925 = vmax.f32 %v1913, 0.0
    %v1926 = vmax.f32 %v1916, 0.0
    %s1927 = scalar_lea.vmem %s8, 32
    %v1928 = vld [vmem:[%s1927] sm:$0xf]
    %v1929 = vld [vmem:[%s1927 + $0x4] sm:$0xf]
    %v1930 = vld [vmem:[%s1927 + $0x8] sm:$0xf]
    %v1931 = vld [vmem:[%s1927 + $0xc] sm:$0xf]
    %v1932 = vpack.c.bf16 %v1920, %v1919
    %v1933 = vpack.c.bf16 %v1922, %v1921
    %v1934 = vpack.c.bf16 %v1924, %v1923
    %v1935 = vpack.c.bf16 %v1926, %v1925
    %s1936 = scalar_lea.vmem %s9, 64
    %v1937 = vld [vmem:[%s1936] sm:$0xff]
    %v1938 = vld [vmem:[%s1936 + $0x8] sm:$0xff]
    %v1939 = vld [vmem:[%s1936 + $0x10] sm:$0xff]
    %v1940 = vld [vmem:[%s1936 + $0x18] sm:$0xff]
    %1942 = vset.pattern.permute.xlu0 0
    %1943 = vperm.xlu0 %1942, %v1937
    %v1944 = vpop.permute.xlu0 %1943
    %1947 = vset.pattern.permute.xlu0 0
    %1948 = vperm.xlu0 %1947, %v1938
    %v1949 = vpop.permute.xlu0 %1948
    %1952 = vset.pattern.permute.xlu0 0
    %1953 = vperm.xlu0 %1952, %v1939
    %v1954 = vpop.permute.xlu0 %1953
    %1957 = vset.pattern.permute.xlu0 0
    %1958 = vperm.xlu0 %1957, %v1940
    %v1959 = vpop.permute.xlu0 %1958
    %v1965 = vunpack.c.l.b16 %v1928
    %v1966 = vunpack.c.l.b16 %v1929
    %v1967 = vunpack.c.l.b16 %v1930
    %v1968 = vunpack.c.l.b16 %v1931
    %v1969 = vpack.c.b16 %v1966, %v1965
    %v1970 = vpack.c.b16 %v1968, %v1967
    %v1972 = vsel %vm286, %v1969, 0
    %v1975 = vsel %vm286, %v1970, 0
    %1977 = vmatprep.subr.bf16.mxu0 0
    %1978 = vmatpush1.bf16.msra.mxu0 %v1932
    %1979 = vmatprep.subr.bf16.mxu0 0
    %1980 = vmatpush1.bf16.msra.mxu0 %v1933
    %1981 = vmatprep.subr.bf16.mxu0 0
    %1982 = vmatpush1.bf16.msra.mxu0 %v1934
    %1983 = vmatprep.subr.bf16.mxu0 0
    %1984 = vmatpush1.bf16.msra.mxu0 %v1935
    %1985 = vmatprep.subr.bf16.mxu0 0
    %1986 = vmatpush1.bf16.msra.mxu0 0
    %1987 = vmatprep.subr.bf16.mxu0 0
    %1988 = vmatpush1.bf16.msra.mxu0 0
    %1989 = vmatprep.subr.bf16.mxu0 0
    %1990 = vmatpush1.bf16.msra.mxu0 0
    %1991 = vmatprep.subr.bf16.mxu0 0
    %1992 = vmatpush1.bf16.msra.mxu0 0
    %1993 = vmatprep.subr.bf16.mxu0 0
    %1994 = vmatpush1.bf16.msra.mxu0 0
    %1995 = vmatprep.subr.bf16.mxu0 0
    %1996 = vmatpush1.bf16.msra.mxu0 0
    %1997 = vmatprep.subr.bf16.mxu0 0
    %1998 = vmatpush1.bf16.msra.mxu0 0
    %1999 = vmatprep.subr.bf16.mxu0 0
    %2000 = vmatpush1.bf16.msra.mxu0 0
    %2001 = vmatprep.subr.bf16.mxu0 0
    %2002 = vmatpush1.bf16.msra.mxu0 0
    %2003 = vmatprep.subr.bf16.mxu0 0
    %2004 = vmatpush1.bf16.msra.mxu0 0
    %2005 = vmatprep.subr.bf16.mxu0 0
    %2006 = vmatpush1.bf16.msra.mxu0 0
    %2007 = vmatprep.subr.bf16.mxu0 0
    %2008 = vmatpush1.bf16.msra.mxu0 0
    %2009 = vmatprep.mubr.bf16.mxu0 0
    %2010 = vmatmul.mubr.bf16.gmra.mrb[0].mxu0 %v1972
    %v2011 = vpop.f32.mrb[0].mxu0
    %v2012 = vadd.f32 %v1944, %v2011
    %v2013 = vpop.f32.mrb[0].mxu0
    %v2014 = vpop.f32.mrb[0].mxu0
    %v2015 = vadd.f32 %v1949, %v2014
    %v2016 = vpop.f32.mrb[0].mxu0
    %2017 = vmatprep.mubr.bf16.mxu0 0
    %2018 = vmatmul.mubr.bf16.gmra.mrb[0].mxu0 %v1975
    %v2019 = vpop.f32.mrb[0].mxu0
    %v2020 = vadd.f32 %v1954, %v2019
    %v2021 = vpop.f32.mrb[0].mxu0
    %v2022 = vpop.f32.mrb[0].mxu0
    %v2023 = vadd.f32 %v1959, %v2022
    %v2024 = vpop.f32.mrb[0].mxu0
    %2025 = vdwg.mxu0
    %2026 = vmatprep.subr.mxu0 0.0
    %2027 = vmatpush1.msra.mxu0 %v1414
    %2028 = vmatprep.subr.mxu0 0.0
    %2029 = vmatpush1.msra.mxu0 %v1415
    %2030 = vmatprep.subr.mxu0 0.0
    %2031 = vmatpush1.msra.mxu0 0.0
    %2032 = vmatprep.subr.mxu0 0.0
    %2033 = vmatpush1.msra.mxu0 0.0
    %2034 = vmatprep.subr.mxu0 0.0
    %2035 = vmatpush1.msra.mxu0 0.0
    %2036 = vmatprep.subr.mxu0 0.0
    %2037 = vmatpush1.msra.mxu0 0.0
    %2038 = vmatprep.subr.mxu0 0.0
    %2039 = vmatpush1.msra.mxu0 0.0
    %2040 = vmatprep.subr.mxu0 0.0
    %2041 = vmatpush1.msra.mxu0 0.0
    %2042 = vmatprep.subr.mxu0 0.0
    %2043 = vmatpush1.msra.mxu0 0.0
    %2044 = vmatprep.subr.mxu0 0.0
    %2045 = vmatpush1.msra.mxu0 0.0
    %2046 = vmatprep.subr.mxu0 0.0
    %2047 = vmatpush1.msra.mxu0 0.0
    %2048 = vmatprep.subr.mxu0 0.0
    %2049 = vmatpush1.msra.mxu0 0.0
    %2050 = vmatprep.subr.mxu0 0.0
    %2051 = vmatpush1.msra.mxu0 0.0
    %2052 = vmatprep.subr.mxu0 0.0
    %2053 = vmatpush1.msra.mxu0 0.0
    %2054 = vmatprep.subr.mxu0 0.0
    %2055 = vmatpush1.msra.mxu0 0.0
    %2056 = vmatprep.subr.mxu0 0.0
    %2057 = vmatpush1.msra.mxu0 0.0
    %2058 = vmatprep.subr.mxu0 0.0
    %2059 = vmatpush1.msra.mxu0 0.0
    %2060 = vmatprep.subr.mxu0 0.0
    %2061 = vmatpush1.msra.mxu0 0.0
    %2062 = vmatprep.subr.mxu0 0.0
    %2063 = vmatpush1.msra.mxu0 0.0
    %2064 = vmatprep.subr.mxu0 0.0
    %2065 = vmatpush1.msra.mxu0 0.0
    %2066 = vmatprep.subr.mxu0 0.0
    %2067 = vmatpush1.msra.mxu0 0.0
    %2068 = vmatprep.subr.mxu0 0.0
    %2069 = vmatpush1.msra.mxu0 0.0
    %2070 = vmatprep.subr.mxu0 0.0
    %2071 = vmatpush1.msra.mxu0 0.0
    %2072 = vmatprep.subr.mxu0 0.0
    %2073 = vmatpush1.msra.mxu0 0.0
    %2074 = vmatprep.subr.mxu0 0.0
    %2075 = vmatpush1.msra.mxu0 0.0
    %2076 = vmatprep.subr.mxu0 0.0
    %2077 = vmatpush1.msra.mxu0 0.0
    %2078 = vmatprep.subr.mxu0 0.0
    %2079 = vmatpush1.msra.mxu0 0.0
    %2080 = vmatprep.subr.mxu0 0.0
    %2081 = vmatpush1.msra.mxu0 0.0
    %2082 = vmatprep.subr.mxu0 0.0
    %2083 = vmatpush1.msra.mxu0 0.0
    %2084 = vmatprep.subr.mxu0 0.0
    %2085 = vmatpush1.msra.mxu0 0.0
    %2086 = vmatprep.subr.mxu0 0.0
    %2087 = vmatpush1.msra.mxu0 0.0
    %2088 = vmatprep.subr.mxu0 0.0
    %2089 = vmatpush1.msra.mxu0 0.0
    %2090 = vmatprep.mubr.f32.mxu0 0.0
    %2091 = vmatmul.mubr.f32.gmra.mrb[0].mxu0 %v635
    %v2092 = vpop.f32.mrb[0].mxu0
    %v2093 = vadd.f32 0.0, %v2092
    %v2094 = vpop.f32.mrb[0].mxu0
    %2095 = vmatprep.mubr.f32.mxu0 0.0
    %2096 = vmatmul.mubr.f32.gmra.mrb[0].mxu0 %v638
    %v2097 = vpop.f32.mrb[0].mxu0
    %v2098 = vadd.f32 0.0, %v2097
    %v2099 = vpop.f32.mrb[0].mxu0
    %2100 = vdwg.mxu0
    %v2101 = vmul.f32 %v2012, 1.442695
    %v2102 = vpow.pop %v2101
    %v2103 = vmul.f32 %v2015, 1.442695
    %v2104 = vpow.pop %v2103
    %v2105 = vmul.f32 %v2093, %v2102
    %v2106 = vmul.f32 %v2098, %v2104
    %v2107 = vadd.f32 %v2105, %v2020
    %v2108 = vadd.f32 %v2106, %v2023
    %v2109 = vsel %vm723, %v2012, 0.0
    %v2110 = vsel %vm723, %v2015, 0.0
    %v2111 = vadd.f32 %v2109, %v2110
    %v2112 = vrot.slane %v2111, 4
    %v2113 = vadd.f32 %v2111, %v2112
    %v2114 = vrot.slane %v2113, 2
    %v2115 = vadd.f32 %v2113, %v2114
    %v2116 = vrot.slane %v2115, 1
    %v2117 = vadd.f32 %v2115, %v2116
    %v2118 = vadd.f32 %v1425, %v2117
    %s2119 = scalar_lea.vmem %s10, 32
    %2120 = vst.msk [vmem:[%s2119] sm:$0xff] %vm723, %v2107
    %2121 = vst.msk [vmem:[%s2119 + $0x8] sm:$0xff] %vm723, %v2108
    %v2122 = vpack.c.bf16 %v2108, %v2107
    %s2123 = scalar_lea.vmem %s2, 96
    %v2124 = vld [vmem:[%s2123] sm:$0xf]
    %v2125 = vld [vmem:[%s2123 + $0x4] sm:$0xf]
    %v2126 = vld [vmem:[%s2123 + $0x8] sm:$0xf]
    %v2127 = vld [vmem:[%s2123 + $0xc] sm:$0xf]
    %v2128 = vld [vmem:[%s2123 + $0x10] sm:$0xf]
    %v2129 = vld [vmem:[%s2123 + $0x14] sm:$0xf]
    %v2130 = vld [vmem:[%s2123 + $0x18] sm:$0xf]
    %v2131 = vld [vmem:[%s2123 + $0x1c] sm:$0xf]
    %s2132 = scalar_lea.vmem %s3, 192
    %v2133 = vld [vmem:[%s2132] sm:$0xff]
    %v2134 = vld [vmem:[%s2132 + $0x8] sm:$0xff]
    %v2135 = vld [vmem:[%s2132 + $0x10] sm:$0xff]
    %v2136 = vld [vmem:[%s2132 + $0x18] sm:$0xff]
    %v2137 = vld [vmem:[%s2132 + $0x20] sm:$0xff]
    %v2138 = vld [vmem:[%s2132 + $0x28] sm:$0xff]
    %v2139 = vld [vmem:[%s2132 + $0x30] sm:$0xff]
    %v2140 = vld [vmem:[%s2132 + $0x38] sm:$0xff]
    %2142 = vset.pattern.permute.xlu0 0
    %2143 = vperm.xlu0 %2142, %v2133
    %v2144 = vpop.permute.xlu0 %2143
    %2147 = vset.pattern.permute.xlu0 0
    %2148 = vperm.xlu0 %2147, %v2134
    %v2149 = vpop.permute.xlu0 %2148
    %2152 = vset.pattern.permute.xlu0 0
    %2153 = vperm.xlu0 %2152, %v2135
    %v2154 = vpop.permute.xlu0 %2153
    %2157 = vset.pattern.permute.xlu0 0
    %2158 = vperm.xlu0 %2157, %v2136
    %v2159 = vpop.permute.xlu0 %2158
    %2162 = vset.pattern.permute.xlu0 0
    %2163 = vperm.xlu0 %2162, %v2137
    %v2164 = vpop.permute.xlu0 %2163
    %2167 = vset.pattern.permute.xlu0 0
    %2168 = vperm.xlu0 %2167, %v2138
    %v2169 = vpop.permute.xlu0 %2168
    %2172 = vset.pattern.permute.xlu0 0
    %2173 = vperm.xlu0 %2172, %v2139
    %v2174 = vpop.permute.xlu0 %2173
    %2177 = vset.pattern.permute.xlu0 0
    %2178 = vperm.xlu0 %2177, %v2140
    %v2179 = vpop.permute.xlu0 %2178
    %v2189 = vunpack.c.l.b16 %v2124
    %v2190 = vunpack.c.l.b16 %v2125
    %v2191 = vunpack.c.l.b16 %v2126
    %v2192 = vunpack.c.l.b16 %v2127
    %v2193 = vunpack.c.l.b16 %v2128
    %v2194 = vunpack.c.l.b16 %v2129
    %v2195 = vunpack.c.l.b16 %v2130
    %v2196 = vunpack.c.l.b16 %v2131
    %v2197 = vpack.c.b16 %v2190, %v2189
    %v2198 = vpack.c.b16 %v2192, %v2191
    %v2199 = vpack.c.b16 %v2194, %v2193
    %v2200 = vpack.c.b16 %v2196, %v2195
    %v2202 = vsel %vm120, %v2197, 0
    %v2205 = vsel %vm120, %v2198, 0
    %v2208 = vsel %vm120, %v2199, 0
    %v2211 = vsel %vm120, %v2200, 0
    %2213 = vmatprep.subr.bf16.mxu0 0
    %2214 = vmatpush1.bf16.msra.mxu0 %v2122
    %2215 = vmatprep.subr.bf16.mxu0 0
    %2216 = vmatpush1.bf16.msra.mxu0 0
    %2217 = vmatprep.subr.bf16.mxu0 0
    %2218 = vmatpush1.bf16.msra.mxu0 0
    %2219 = vmatprep.subr.bf16.mxu0 0
    %2220 = vmatpush1.bf16.msra.mxu0 0
    %2221 = vmatprep.subr.bf16.mxu0 0
    %2222 = vmatpush1.bf16.msra.mxu0 0
    %2223 = vmatprep.subr.bf16.mxu0 0
    %2224 = vmatpush1.bf16.msra.mxu0 0
    %2225 = vmatprep.subr.bf16.mxu0 0
    %2226 = vmatpush1.bf16.msra.mxu0 0
    %2227 = vmatprep.subr.bf16.mxu0 0
    %2228 = vmatpush1.bf16.msra.mxu0 0
    %2229 = vmatprep.subr.bf16.mxu0 0
    %2230 = vmatpush1.bf16.msra.mxu0 0
    %2231 = vmatprep.subr.bf16.mxu0 0
    %2232 = vmatpush1.bf16.msra.mxu0 0
    %2233 = vmatprep.subr.bf16.mxu0 0
    %2234 = vmatpush1.bf16.msra.mxu0 0
    %2235 = vmatprep.subr.bf16.mxu0 0
    %2236 = vmatpush1.bf16.msra.mxu0 0
    %2237 = vmatprep.subr.bf16.mxu0 0
    %2238 = vmatpush1.bf16.msra.mxu0 0
    %2239 = vmatprep.subr.bf16.mxu0 0
    %2240 = vmatpush1.bf16.msra.mxu0 0
    %2241 = vmatprep.subr.bf16.mxu0 0
    %2242 = vmatpush1.bf16.msra.mxu0 0
    %2243 = vmatprep.subr.bf16.mxu0 0
    %2244 = vmatpush1.bf16.msra.mxu0 0
    %2245 = vmatprep.mubr.bf16.mxu0 0
    %2246 = vmatmul.mubr.bf16.gmra.mrb[0].mxu0 %v2202
    %v2247 = vpop.f32.mrb[0].mxu0
    %v2248 = vadd.f32 %v2144, %v2247
    %v2249 = vpop.f32.mrb[0].mxu0
    %v2250 = vpop.f32.mrb[0].mxu0
    %v2251 = vadd.f32 %v2149, %v2250
    %v2252 = vpop.f32.mrb[0].mxu0
    %2253 = vmatprep.mubr.bf16.mxu0 0
    %2254 = vmatmul.mubr.bf16.gmra.mrb[0].mxu0 %v2205
    %v2255 = vpop.f32.mrb[0].mxu0
    %v2256 = vadd.f32 %v2154, %v2255
    %v2257 = vpop.f32.mrb[0].mxu0
    %v2258 = vpop.f32.mrb[0].mxu0
    %v2259 = vadd.f32 %v2159, %v2258
    %v2260 = vpop.f32.mrb[0].mxu0
    %2261 = vmatprep.mubr.bf16.mxu0 0
    %2262 = vmatmul.mubr.bf16.gmra.mrb[0].mxu0 %v2208
    %v2263 = vpop.f32.mrb[0].mxu0
    %v2264 = vadd.f32 %v2164, %v2263
    %v2265 = vpop.f32.mrb[0].mxu0
    %v2266 = vpop.f32.mrb[0].mxu0
    %v2267 = vadd.f32 %v2169, %v2266
    %v2268 = vpop.f32.mrb[0].mxu0
    %2269 = vmatprep.mubr.bf16.mxu0 0
    %2270 = vmatmul.mubr.bf16.gmra.mrb[0].mxu0 %v2211
    %v2271 = vpop.f32.mrb[0].mxu0
    %v2272 = vadd.f32 %v2174, %v2271
    %v2273 = vpop.f32.mrb[0].mxu0
    %v2274 = vpop.f32.mrb[0].mxu0
    %v2275 = vadd.f32 %v2179, %v2274
    %v2276 = vpop.f32.mrb[0].mxu0
    %2277 = vdwg.mxu0
    %v2278 = vmax.f32 %v2248, 0.0
    %v2279 = vmax.f32 %v2251, 0.0
    %v2280 = vmax.f32 %v2256, 0.0
    %v2281 = vmax.f32 %v2259, 0.0
    %v2282 = vmax.f32 %v2264, 0.0
    %v2283 = vmax.f32 %v2267, 0.0
    %v2284 = vmax.f32 %v2272, 0.0
    %v2285 = vmax.f32 %v2275, 0.0
    %s2286 = scalar_lea.vmem %s4, 96
    %v2287 = vld [vmem:[%s2286] sm:$0xf]
    %v2288 = vld [vmem:[%s2286 + $0x4] sm:$0xf]
    %v2289 = vld [vmem:[%s2286 + $0x8] sm:$0xf]
    %v2290 = vld [vmem:[%s2286 + $0xc] sm:$0xf]
    %v2291 = vld [vmem:[%s2286 + $0x10] sm:$0xf]
    %v2292 = vld [vmem:[%s2286 + $0x14] sm:$0xf]
    %v2293 = vld [vmem:[%s2286 + $0x18] sm:$0xf]
    %v2294 = vld [vmem:[%s2286 + $0x1c] sm:$0xf]
    %v2295 = vpack.c.bf16 %v2279, %v2278
    %v2296 = vpack.c.bf16 %v2281, %v2280
    %v2297 = vpack.c.bf16 %v2283, %v2282
    %v2298 = vpack.c.bf16 %v2285, %v2284
    %s2299 = scalar_lea.vmem %s5, 192
    %v2300 = vld [vmem:[%s2299] sm:$0xff]
    %v2301 = vld [vmem:[%s2299 + $0x8] sm:$0xff]
    %v2302 = vld [vmem:[%s2299 + $0x10] sm:$0xff]
    %v2303 = vld [vmem:[%s2299 + $0x18] sm:$0xff]
    %v2304 = vld [vmem:[%s2299 + $0x20] sm:$0xff]
    %v2305 = vld [vmem:[%s2299 + $0x28] sm:$0xff]
    %v2306 = vld [vmem:[%s2299 + $0x30] sm:$0xff]
    %v2307 = vld [vmem:[%s2299 + $0x38] sm:$0xff]
    %2309 = vset.pattern.permute.xlu0 0
    %2310 = vperm.xlu0 %2309, %v2300
    %v2311 = vpop.permute.xlu0 %2310
    %2314 = vset.pattern.permute.xlu0 0
    %2315 = vperm.xlu0 %2314, %v2301
    %v2316 = vpop.permute.xlu0 %2315
    %2319 = vset.pattern.permute.xlu0 0
    %2320 = vperm.xlu0 %2319, %v2302
    %v2321 = vpop.permute.xlu0 %2320
    %2324 = vset.pattern.permute.xlu0 0
    %2325 = vperm.xlu0 %2324, %v2303
    %v2326 = vpop.permute.xlu0 %2325
    %2329 = vset.pattern.permute.xlu0 0
    %2330 = vperm.xlu0 %2329, %v2304
    %v2331 = vpop.permute.xlu0 %2330
    %2334 = vset.pattern.permute.xlu0 0
    %2335 = vperm.xlu0 %2334, %v2305
    %v2336 = vpop.permute.xlu0 %2335
    %2339 = vset.pattern.permute.xlu0 0
    %2340 = vperm.xlu0 %2339, %v2306
    %v2341 = vpop.permute.xlu0 %2340
    %2344 = vset.pattern.permute.xlu0 0
    %2345 = vperm.xlu0 %2344, %v2307
    %v2346 = vpop.permute.xlu0 %2345
    %v2356 = vunpack.c.l.b16 %v2287
    %v2357 = vunpack.c.l.b16 %v2288
    %v2358 = vunpack.c.l.b16 %v2289
    %v2359 = vunpack.c.l.b16 %v2290
    %v2360 = vunpack.c.l.b16 %v2291
    %v2361 = vunpack.c.l.b16 %v2292
    %v2362 = vunpack.c.l.b16 %v2293
    %v2363 = vunpack.c.l.b16 %v2294
    %v2364 = vpack.c.b16 %v2357, %v2356
    %v2365 = vpack.c.b16 %v2359, %v2358
    %v2366 = vpack.c.b16 %v2361, %v2360
    %v2367 = vpack.c.b16 %v2363, %v2362
    %v2369 = vsel %vm286, %v2364, 0
    %v2372 = vsel %vm286, %v2365, 0
    %v2375 = vsel %vm286, %v2366, 0
    %v2378 = vsel %vm286, %v2367, 0
    %2380 = vmatprep.subr.bf16.mxu0 0
    %2381 = vmatpush1.bf16.msra.mxu0 %v2295
    %2382 = vmatprep.subr.bf16.mxu0 0
    %2383 = vmatpush1.bf16.msra.mxu0 %v2296
    %2384 = vmatprep.subr.bf16.mxu0 0
    %2385 = vmatpush1.bf16.msra.mxu0 %v2297
    %2386 = vmatprep.subr.bf16.mxu0 0
    %2387 = vmatpush1.bf16.msra.mxu0 %v2298
    %2388 = vmatprep.subr.bf16.mxu0 0
    %2389 = vmatpush1.bf16.msra.mxu0 0
    %2390 = vmatprep.subr.bf16.mxu0 0
    %2391 = vmatpush1.bf16.msra.mxu0 0
    %2392 = vmatprep.subr.bf16.mxu0 0
    %2393 = vmatpush1.bf16.msra.mxu0 0
    %2394 = vmatprep.subr.bf16.mxu0 0
    %2395 = vmatpush1.bf16.msra.mxu0 0
    %2396 = vmatprep.subr.bf16.mxu0 0
    %2397 = vmatpush1.bf16.msra.mxu0 0
    %2398 = vmatprep.subr.bf16.mxu0 0
    %2399 = vmatpush1.bf16.msra.mxu0 0
    %2400 = vmatprep.subr.bf16.mxu0 0
    %2401 = vmatpush1.bf16.msra.mxu0 0
    %2402 = vmatprep.subr.bf16.mxu0 0
    %2403 = vmatpush1.bf16.msra.mxu0 0
    %2404 = vmatprep.subr.bf16.mxu0 0
    %2405 = vmatpush1.bf16.msra.mxu0 0
    %2406 = vmatprep.subr.bf16.mxu0 0
    %2407 = vmatpush1.bf16.msra.mxu0 0
    %2408 = vmatprep.subr.bf16.mxu0 0
    %2409 = vmatpush1.bf16.msra.mxu0 0
    %2410 = vmatprep.subr.bf16.mxu0 0
    %2411 = vmatpush1.bf16.msra.mxu0 0
    %2412 = vmatprep.mubr.bf16.mxu0 0
    %2413 = vmatmul.mubr.bf16.gmra.mrb[0].mxu0 %v2369
    %v2414 = vpop.f32.mrb[0].mxu0
    %v2415 = vadd.f32 %v2311, %v2414
    %v2416 = vpop.f32.mrb[0].mxu0
    %v2417 = vpop.f32.mrb[0].mxu0
    %v2418 = vadd.f32 %v2316, %v2417
    %v2419 = vpop.f32.mrb[0].mxu0
    %2420 = vmatprep.mubr.bf16.mxu0 0
    %2421 = vmatmul.mubr.bf16.gmra.mrb[0].mxu0 %v2372
    %v2422 = vpop.f32.mrb[0].mxu0
    %v2423 = vadd.f32 %v2321, %v2422
    %v2424 = vpop.f32.mrb[0].mxu0
    %v2425 = vpop.f32.mrb[0].mxu0
    %v2426 = vadd.f32 %v2326, %v2425
    %v2427 = vpop.f32.mrb[0].mxu0
    %2428 = vmatprep.mubr.bf16.mxu0 0
    %2429 = vmatmul.mubr.bf16.gmra.mrb[0].mxu0 %v2375
    %v2430 = vpop.f32.mrb[0].mxu0
    %v2431 = vadd.f32 %v2331, %v2430
    %v2432 = vpop.f32.mrb[0].mxu0
    %v2433 = vpop.f32.mrb[0].mxu0
    %v2434 = vadd.f32 %v2336, %v2433
    %v2435 = vpop.f32.mrb[0].mxu0
    %2436 = vmatprep.mubr.bf16.mxu0 0
    %2437 = vmatmul.mubr.bf16.gmra.mrb[0].mxu0 %v2378
    %v2438 = vpop.f32.mrb[0].mxu0
    %v2439 = vadd.f32 %v2341, %v2438
    %v2440 = vpop.f32.mrb[0].mxu0
    %v2441 = vpop.f32.mrb[0].mxu0
    %v2442 = vadd.f32 %v2346, %v2441
    %v2443 = vpop.f32.mrb[0].mxu0
    %2444 = vdwg.mxu0
    %v2445 = vmax.f32 %v2415, 0.0
    %v2446 = vmax.f32 %v2418, 0.0
    %v2447 = vmax.f32 %v2423, 0.0
    %v2448 = vmax.f32 %v2426, 0.0
    %v2449 = vmax.f32 %v2431, 0.0
    %v2450 = vmax.f32 %v2434, 0.0
    %v2451 = vmax.f32 %v2439, 0.0
    %v2452 = vmax.f32 %v2442, 0.0
    %s2453 = scalar_lea.vmem %s6, 96
    %v2454 = vld [vmem:[%s2453] sm:$0xf]
    %v2455 = vld [vmem:[%s2453 + $0x4] sm:$0xf]
    %v2456 = vld [vmem:[%s2453 + $0x8] sm:$0xf]
    %v2457 = vld [vmem:[%s2453 + $0xc] sm:$0xf]
    %v2458 = vld [vmem:[%s2453 + $0x10] sm:$0xf]
    %v2459 = vld [vmem:[%s2453 + $0x14] sm:$0xf]
    %v2460 = vld [vmem:[%s2453 + $0x18] sm:$0xf]
    %v2461 = vld [vmem:[%s2453 + $0x1c] sm:$0xf]
    %v2462 = vpack.c.bf16 %v2446, %v2445
    %v2463 = vpack.c.bf16 %v2448, %v2447
    %v2464 = vpack.c.bf16 %v2450, %v2449
    %v2465 = vpack.c.bf16 %v2452, %v2451
    %s2466 = scalar_lea.vmem %s7, 192
    %v2467 = vld [vmem:[%s2466] sm:$0xff]
    %v2468 = vld [vmem:[%s2466 + $0x8] sm:$0xff]
    %v2469 = vld [vmem:[%s2466 + $0x10] sm:$0xff]
    %v2470 = vld [vmem:[%s2466 + $0x18] sm:$0xff]
    %v2471 = vld [vmem:[%s2466 + $0x20] sm:$0xff]
    %v2472 = vld [vmem:[%s2466 + $0x28] sm:$0xff]
    %v2473 = vld [vmem:[%s2466 + $0x30] sm:$0xff]
    %v2474 = vld [vmem:[%s2466 + $0x38] sm:$0xff]
    %2476 = vset.pattern.permute.xlu0 0
    %2477 = vperm.xlu0 %2476, %v2467
    %v2478 = vpop.permute.xlu0 %2477
    %2481 = vset.pattern.permute.xlu0 0
    %2482 = vperm.xlu0 %2481, %v2468
    %v2483 = vpop.permute.xlu0 %2482
    %2486 = vset.pattern.permute.xlu0 0
    %2487 = vperm.xlu0 %2486, %v2469
    %v2488 = vpop.permute.xlu0 %2487
    %2491 = vset.pattern.permute.xlu0 0
    %2492 = vperm.xlu0 %2491, %v2470
    %v2493 = vpop.permute.xlu0 %2492
    %2496 = vset.pattern.permute.xlu0 0
    %2497 = vperm.xlu0 %2496, %v2471
    %v2498 = vpop.permute.xlu0 %2497
    %2501 = vset.pattern.permute.xlu0 0
    %2502 = vperm.xlu0 %2501, %v2472
    %v2503 = vpop.permute.xlu0 %2502
    %2506 = vset.pattern.permute.xlu0 0
    %2507 = vperm.xlu0 %2506, %v2473
    %v2508 = vpop.permute.xlu0 %2507
    %2511 = vset.pattern.permute.xlu0 0
    %2512 = vperm.xlu0 %2511, %v2474
    %v2513 = vpop.permute.xlu0 %2512
    %v2523 = vunpack.c.l.b16 %v2454
    %v2524 = vunpack.c.l.b16 %v2455
    %v2525 = vunpack.c.l.b16 %v2456
    %v2526 = vunpack.c.l.b16 %v2457
    %v2527 = vunpack.c.l.b16 %v2458
    %v2528 = vunpack.c.l.b16 %v2459
    %v2529 = vunpack.c.l.b16 %v2460
    %v2530 = vunpack.c.l.b16 %v2461
    %v2531 = vpack.c.b16 %v2524, %v2523
    %v2532 = vpack.c.b16 %v2526, %v2525
    %v2533 = vpack.c.b16 %v2528, %v2527
    %v2534 = vpack.c.b16 %v2530, %v2529
    %v2536 = vsel %vm286, %v2531, 0
    %v2539 = vsel %vm286, %v2532, 0
    %v2542 = vsel %vm286, %v2533, 0
    %v2545 = vsel %vm286, %v2534, 0
    %2547 = vmatprep.subr.bf16.mxu0 0
    %2548 = vmatpush1.bf16.msra.mxu0 %v2462
    %2549 = vmatprep.subr.bf16.mxu0 0
    %2550 = vmatpush1.bf16.msra.mxu0 %v2463
    %2551 = vmatprep.subr.bf16.mxu0 0
    %2552 = vmatpush1.bf16.msra.mxu0 %v2464
    %2553 = vmatprep.subr.bf16.mxu0 0
    %2554 = vmatpush1.bf16.msra.mxu0 %v2465
    %2555 = vmatprep.subr.bf16.mxu0 0
    %2556 = vmatpush1.bf16.msra.mxu0 0
    %2557 = vmatprep.subr.bf16.mxu0 0
    %2558 = vmatpush1.bf16.msra.mxu0 0
    %2559 = vmatprep.subr.bf16.mxu0 0
    %2560 = vmatpush1.bf16.msra.mxu0 0
    %2561 = vmatprep.subr.bf16.mxu0 0
    %2562 = vmatpush1.bf16.msra.mxu0 0
    %2563 = vmatprep.subr.bf16.mxu0 0
    %2564 = vmatpush1.bf16.msra.mxu0 0
    %2565 = vmatprep.subr.bf16.mxu0 0
    %2566 = vmatpush1.bf16.msra.mxu0 0
    %2567 = vmatprep.subr.bf16.mxu0 0
    %2568 = vmatpush1.bf16.msra.mxu0 0
    %2569 = vmatprep.subr.bf16.mxu0 0
    %2570 = vmatpush1.bf16.msra.mxu0 0
    %2571 = vmatprep.subr.bf16.mxu0 0
    %2572 = vmatpush1.bf16.msra.mxu0 0
    %2573 = vmatprep.subr.bf16.mxu0 0
    %2574 = vmatpush1.bf16.msra.mxu0 0
    %2575 = vmatprep.subr.bf16.mxu0 0
    %2576 = vmatpush1.bf16.msra.mxu0 0
    %2577 = vmatprep.subr.bf16.mxu0 0
    %2578 = vmatpush1.bf16.msra.mxu0 0
    %2579 = vmatprep.mubr.bf16.mxu0 0
    %2580 = vmatmul.mubr.bf16.gmra.mrb[0].mxu0 %v2536
    %v2581 = vpop.f32.mrb[0].mxu0
    %v2582 = vadd.f32 %v2478, %v2581
    %v2583 = vpop.f32.mrb[0].mxu0
    %v2584 = vpop.f32.mrb[0].mxu0
    %v2585 = vadd.f32 %v2483, %v2584
    %v2586 = vpop.f32.mrb[0].mxu0
    %2587 = vmatprep.mubr.bf16.mxu0 0
    %2588 = vmatmul.mubr.bf16.gmra.mrb[0].mxu0 %v2539
    %v2589 = vpop.f32.mrb[0].mxu0
    %v2590 = vadd.f32 %v2488, %v2589
    %v2591 = vpop.f32.mrb[0].mxu0
    %v2592 = vpop.f32.mrb[0].mxu0
    %v2593 = vadd.f32 %v2493, %v2592
    %v2594 = vpop.f32.mrb[0].mxu0
    %2595 = vmatprep.mubr.bf16.mxu0 0
    %2596 = vmatmul.mubr.bf16.gmra.mrb[0].mxu0 %v2542
    %v2597 = vpop.f32.mrb[0].mxu0
    %v2598 = vadd.f32 %v2498, %v2597
    %v2599 = vpop.f32.mrb[0].mxu0
    %v2600 = vpop.f32.mrb[0].mxu0
    %v2601 = vadd.f32 %v2503, %v2600
    %v2602 = vpop.f32.mrb[0].mxu0
    %2603 = vmatprep.mubr.bf16.mxu0 0
    %2604 = vmatmul.mubr.bf16.gmra.mrb[0].mxu0 %v2545
    %v2605 = vpop.f32.mrb[0].mxu0
    %v2606 = vadd.f32 %v2508, %v2605
    %v2607 = vpop.f32.mrb[0].mxu0
    %v2608 = vpop.f32.mrb[0].mxu0
    %v2609 = vadd.f32 %v2513, %v2608
    %v2610 = vpop.f32.mrb[0].mxu0
    %2611 = vdwg.mxu0
    %v2612 = vmax.f32 %v2582, 0.0
    %v2613 = vmax.f32 %v2585, 0.0
    %v2614 = vmax.f32 %v2590, 0.0
    %v2615 = vmax.f32 %v2593, 0.0
    %v2616 = vmax.f32 %v2598, 0.0
    %v2617 = vmax.f32 %v2601, 0.0
    %v2618 = vmax.f32 %v2606, 0.0
    %v2619 = vmax.f32 %v2609, 0.0
    %s2620 = scalar_lea.vmem %s8, 48
    %v2621 = vld [vmem:[%s2620] sm:$0xf]
    %v2622 = vld [vmem:[%s2620 + $0x4] sm:$0xf]
    %v2623 = vld [vmem:[%s2620 + $0x8] sm:$0xf]
    %v2624 = vld [vmem:[%s2620 + $0xc] sm:$0xf]
    %v2625 = vpack.c.bf16 %v2613, %v2612
    %v2626 = vpack.c.bf16 %v2615, %v2614
    %v2627 = vpack.c.bf16 %v2617, %v2616
    %v2628 = vpack.c.bf16 %v2619, %v2618
    %s2629 = scalar_lea.vmem %s9, 96
    %v2630 = vld [vmem:[%s2629] sm:$0xff]
    %v2631 = vld [vmem:[%s2629 + $0x8] sm:$0xff]
    %v2632 = vld [vmem:[%s2629 + $0x10] sm:$0xff]
    %v2633 = vld [vmem:[%s2629 + $0x18] sm:$0xff]
    %2635 = vset.pattern.permute.xlu0 0
    %2636 = vperm.xlu0 %2635, %v2630
    %v2637 = vpop.permute.xlu0 %2636
    %2640 = vset.pattern.permute.xlu0 0
    %2641 = vperm.xlu0 %2640, %v2631
    %v2642 = vpop.permute.xlu0 %2641
    %2645 = vset.pattern.permute.xlu0 0
    %2646 = vperm.xlu0 %2645, %v2632
    %v2647 = vpop.permute.xlu0 %2646
    %2650 = vset.pattern.permute.xlu0 0
    %2651 = vperm.xlu0 %2650, %v2633
    %v2652 = vpop.permute.xlu0 %2651
    %v2658 = vunpack.c.l.b16 %v2621
    %v2659 = vunpack.c.l.b16 %v2622
    %v2660 = vunpack.c.l.b16 %v2623
    %v2661 = vunpack.c.l.b16 %v2624
    %v2662 = vpack.c.b16 %v2659, %v2658
    %v2663 = vpack.c.b16 %v2661, %v2660
    %v2665 = vsel %vm286, %v2662, 0
    %v2668 = vsel %vm286, %v2663, 0
    %2670 = vmatprep.subr.bf16.mxu0 0
    %2671 = vmatpush1.bf16.msra.mxu0 %v2625
    %2672 = vmatprep.subr.bf16.mxu0 0
    %2673 = vmatpush1.bf16.msra.mxu0 %v2626
    %2674 = vmatprep.subr.bf16.mxu0 0
    %2675 = vmatpush1.bf16.msra.mxu0 %v2627
    %2676 = vmatprep.subr.bf16.mxu0 0
    %2677 = vmatpush1.bf16.msra.mxu0 %v2628
    %2678 = vmatprep.subr.bf16.mxu0 0
    %2679 = vmatpush1.bf16.msra.mxu0 0
    %2680 = vmatprep.subr.bf16.mxu0 0
    %2681 = vmatpush1.bf16.msra.mxu0 0
    %2682 = vmatprep.subr.bf16.mxu0 0
    %2683 = vmatpush1.bf16.msra.mxu0 0
    %2684 = vmatprep.subr.bf16.mxu0 0
    %2685 = vmatpush1.bf16.msra.mxu0 0
    %2686 = vmatprep.subr.bf16.mxu0 0
    %2687 = vmatpush1.bf16.msra.mxu0 0
    %2688 = vmatprep.subr.bf16.mxu0 0
    %2689 = vmatpush1.bf16.msra.mxu0 0
    %2690 = vmatprep.subr.bf16.mxu0 0
    %2691 = vmatpush1.bf16.msra.mxu0 0
    %2692 = vmatprep.subr.bf16.mxu0 0
    %2693 = vmatpush1.bf16.msra.mxu0 0
    %2694 = vmatprep.subr.bf16.mxu0 0
    %2695 = vmatpush1.bf16.msra.mxu0 0
    %2696 = vmatprep.subr.bf16.mxu0 0
    %2697 = vmatpush1.bf16.msra.mxu0 0
    %2698 = vmatprep.subr.bf16.mxu0 0
    %2699 = vmatpush1.bf16.msra.mxu0 0
    %2700 = vmatprep.subr.bf16.mxu0 0
    %2701 = vmatpush1.bf16.msra.mxu0 0
    %2702 = vmatprep.mubr.bf16.mxu0 0
    %2703 = vmatmul.mubr.bf16.gmra.mrb[0].mxu0 %v2665
    %v2704 = vpop.f32.mrb[0].mxu0
    %v2705 = vadd.f32 %v2637, %v2704
    %v2706 = vpop.f32.mrb[0].mxu0
    %v2707 = vpop.f32.mrb[0].mxu0
    %v2708 = vadd.f32 %v2642, %v2707
    %v2709 = vpop.f32.mrb[0].mxu0
    %2710 = vmatprep.mubr.bf16.mxu0 0
    %2711 = vmatmul.mubr.bf16.gmra.mrb[0].mxu0 %v2668
    %v2712 = vpop.f32.mrb[0].mxu0
    %v2713 = vadd.f32 %v2647, %v2712
    %v2714 = vpop.f32.mrb[0].mxu0
    %v2715 = vpop.f32.mrb[0].mxu0
    %v2716 = vadd.f32 %v2652, %v2715
    %v2717 = vpop.f32.mrb[0].mxu0
    %2718 = vdwg.mxu0
    %2719 = vmatprep.subr.mxu0 0.0
    %2720 = vmatpush1.msra.mxu0 %v2107
    %2721 = vmatprep.subr.mxu0 0.0
    %2722 = vmatpush1.msra.mxu0 %v2108
    %2723 = vmatprep.subr.mxu0 0.0
    %2724 = vmatpush1.msra.mxu0 0.0
    %2725 = vmatprep.subr.mxu0 0.0
    %2726 = vmatpush1.msra.mxu0 0.0
    %2727 = vmatprep.subr.mxu0 0.0
    %2728 = vmatpush1.msra.mxu0 0.0
    %2729 = vmatprep.subr.mxu0 0.0
    %2730 = vmatpush1.msra.mxu0 0.0
    %2731 = vmatprep.subr.mxu0 0.0
    %2732 = vmatpush1.msra.mxu0 0.0
    %2733 = vmatprep.subr.mxu0 0.0
    %2734 = vmatpush1.msra.mxu0 0.0
    %2735 = vmatprep.subr.mxu0 0.0
    %2736 = vmatpush1.msra.mxu0 0.0
    %2737 = vmatprep.subr.mxu0 0.0
    %2738 = vmatpush1.msra.mxu0 0.0
    %2739 = vmatprep.subr.mxu0 0.0
    %2740 = vmatpush1.msra.mxu0 0.0
    %2741 = vmatprep.subr.mxu0 0.0
    %2742 = vmatpush1.msra.mxu0 0.0
    %2743 = vmatprep.subr.mxu0 0.0
    %2744 = vmatpush1.msra.mxu0 0.0
    %2745 = vmatprep.subr.mxu0 0.0
    %2746 = vmatpush1.msra.mxu0 0.0
    %2747 = vmatprep.subr.mxu0 0.0
    %2748 = vmatpush1.msra.mxu0 0.0
    %2749 = vmatprep.subr.mxu0 0.0
    %2750 = vmatpush1.msra.mxu0 0.0
    %2751 = vmatprep.subr.mxu0 0.0
    %2752 = vmatpush1.msra.mxu0 0.0
    %2753 = vmatprep.subr.mxu0 0.0
    %2754 = vmatpush1.msra.mxu0 0.0
    %2755 = vmatprep.subr.mxu0 0.0
    %2756 = vmatpush1.msra.mxu0 0.0
    %2757 = vmatprep.subr.mxu0 0.0
    %2758 = vmatpush1.msra.mxu0 0.0
    %2759 = vmatprep.subr.mxu0 0.0
    %2760 = vmatpush1.msra.mxu0 0.0
    %2761 = vmatprep.subr.mxu0 0.0
    %2762 = vmatpush1.msra.mxu0 0.0
    %2763 = vmatprep.subr.mxu0 0.0
    %2764 = vmatpush1.msra.mxu0 0.0
    %2765 = vmatprep.subr.mxu0 0.0
    %2766 = vmatpush1.msra.mxu0 0.0
    %2767 = vmatprep.subr.mxu0 0.0
    %2768 = vmatpush1.msra.mxu0 0.0
    %2769 = vmatprep.subr.mxu0 0.0
    %2770 = vmatpush1.msra.mxu0 0.0
    %2771 = vmatprep.subr.mxu0 0.0
    %2772 = vmatpush1.msra.mxu0 0.0
    %2773 = vmatprep.subr.mxu0 0.0
    %2774 = vmatpush1.msra.mxu0 0.0
    %2775 = vmatprep.subr.mxu0 0.0
    %2776 = vmatpush1.msra.mxu0 0.0
    %2777 = vmatprep.subr.mxu0 0.0
    %2778 = vmatpush1.msra.mxu0 0.0
    %2779 = vmatprep.subr.mxu0 0.0
    %2780 = vmatpush1.msra.mxu0 0.0
    %2781 = vmatprep.subr.mxu0 0.0
    %2782 = vmatpush1.msra.mxu0 0.0
    %2783 = vmatprep.mubr.f32.mxu0 0.0
    %2784 = vmatmul.mubr.f32.gmra.mrb[0].mxu0 %v635
    %v2785 = vpop.f32.mrb[0].mxu0
    %v2786 = vadd.f32 0.0, %v2785
    %v2787 = vpop.f32.mrb[0].mxu0
    %2788 = vmatprep.mubr.f32.mxu0 0.0
    %2789 = vmatmul.mubr.f32.gmra.mrb[0].mxu0 %v638
    %v2790 = vpop.f32.mrb[0].mxu0
    %v2791 = vadd.f32 0.0, %v2790
    %v2792 = vpop.f32.mrb[0].mxu0
    %2793 = vdwg.mxu0
    %v2794 = vmul.f32 %v2705, 1.442695
    %v2795 = vpow.pop %v2794
    %v2796 = vmul.f32 %v2708, 1.442695
    %v2797 = vpow.pop %v2796
    %v2798 = vmul.f32 %v2786, %v2795
    %v2799 = vmul.f32 %v2791, %v2797
    %v2800 = vadd.f32 %v2798, %v2713
    %v2801 = vadd.f32 %v2799, %v2716
    %v2802 = vsel %vm723, %v2705, 0.0
    %v2803 = vsel %vm723, %v2708, 0.0
    %v2804 = vadd.f32 %v2802, %v2803
    %v2805 = vrot.slane %v2804, 4
    %v2806 = vadd.f32 %v2804, %v2805
    %v2807 = vrot.slane %v2806, 2
    %v2808 = vadd.f32 %v2806, %v2807
    %v2809 = vrot.slane %v2808, 1
    %v2810 = vadd.f32 %v2808, %v2809
    %v2811 = vadd.f32 %v2118, %v2810
    %s2812 = scalar_lea.vmem %s10, 48
    %2813 = vst.msk [vmem:[%s2812] sm:$0xff] %vm723, %v2800
    %2814 = vst.msk [vmem:[%s2812 + $0x8] sm:$0xff] %vm723, %v2801
    %v2815 = vpack.c.bf16 %v2801, %v2800
    %s2816 = scalar_lea.vmem %s2, 128
    %v2817 = vld [vmem:[%s2816] sm:$0xf]
    %v2818 = vld [vmem:[%s2816 + $0x4] sm:$0xf]
    %v2819 = vld [vmem:[%s2816 + $0x8] sm:$0xf]
    %v2820 = vld [vmem:[%s2816 + $0xc] sm:$0xf]
    %v2821 = vld [vmem:[%s2816 + $0x10] sm:$0xf]
    %v2822 = vld [vmem:[%s2816 + $0x14] sm:$0xf]
    %v2823 = vld [vmem:[%s2816 + $0x18] sm:$0xf]
    %v2824 = vld [vmem:[%s2816 + $0x1c] sm:$0xf]
    %s2825 = scalar_lea.vmem %s3, 256
    %v2826 = vld [vmem:[%s2825] sm:$0xff]
    %v2827 = vld [vmem:[%s2825 + $0x8] sm:$0xff]
    %v2828 = vld [vmem:[%s2825 + $0x10] sm:$0xff]
    %v2829 = vld [vmem:[%s2825 + $0x18] sm:$0xff]
    %v2830 = vld [vmem:[%s2825 + $0x20] sm:$0xff]
    %v2831 = vld [vmem:[%s2825 + $0x28] sm:$0xff]
    %v2832 = vld [vmem:[%s2825 + $0x30] sm:$0xff]
    %v2833 = vld [vmem:[%s2825 + $0x38] sm:$0xff]
    %2835 = vset.pattern.permute.xlu0 0
    %2836 = vperm.xlu0 %2835, %v2826
    %v2837 = vpop.permute.xlu0 %2836
    %2840 = vset.pattern.permute.xlu0 0
    %2841 = vperm.xlu0 %2840, %v2827
    %v2842 = vpop.permute.xlu0 %2841
    %2845 = vset.pattern.permute.xlu0 0
    %2846 = vperm.xlu0 %2845, %v2828
    %v2847 = vpop.permute.xlu0 %2846
    %2850 = vset.pattern.permute.xlu0 0
    %2851 = vperm.xlu0 %2850, %v2829
    %v2852 = vpop.permute.xlu0 %2851
    %2855 = vset.pattern.permute.xlu0 0
    %2856 = vperm.xlu0 %2855, %v2830
    %v2857 = vpop.permute.xlu0 %2856
    %2860 = vset.pattern.permute.xlu0 0
    %2861 = vperm.xlu0 %2860, %v2831
    %v2862 = vpop.permute.xlu0 %2861
    %2865 = vset.pattern.permute.xlu0 0
    %2866 = vperm.xlu0 %2865, %v2832
    %v2867 = vpop.permute.xlu0 %2866
    %2870 = vset.pattern.permute.xlu0 0
    %2871 = vperm.xlu0 %2870, %v2833
    %v2872 = vpop.permute.xlu0 %2871
    %v2882 = vunpack.c.l.b16 %v2817
    %v2883 = vunpack.c.l.b16 %v2818
    %v2884 = vunpack.c.l.b16 %v2819
    %v2885 = vunpack.c.l.b16 %v2820
    %v2886 = vunpack.c.l.b16 %v2821
    %v2887 = vunpack.c.l.b16 %v2822
    %v2888 = vunpack.c.l.b16 %v2823
    %v2889 = vunpack.c.l.b16 %v2824
    %v2890 = vpack.c.b16 %v2883, %v2882
    %v2891 = vpack.c.b16 %v2885, %v2884
    %v2892 = vpack.c.b16 %v2887, %v2886
    %v2893 = vpack.c.b16 %v2889, %v2888
    %v2895 = vsel %vm120, %v2890, 0
    %v2898 = vsel %vm120, %v2891, 0
    %v2901 = vsel %vm120, %v2892, 0
    %v2904 = vsel %vm120, %v2893, 0
    %2906 = vmatprep.subr.bf16.mxu0 0
    %2907 = vmatpush1.bf16.msra.mxu0 %v2815
    %2908 = vmatprep.subr.bf16.mxu0 0
    %2909 = vmatpush1.bf16.msra.mxu0 0
    %2910 = vmatprep.subr.bf16.mxu0 0
    %2911 = vmatpush1.bf16.msra.mxu0 0
    %2912 = vmatprep.subr.bf16.mxu0 0
    %2913 = vmatpush1.bf16.msra.mxu0 0
    %2914 = vmatprep.subr.bf16.mxu0 0
    %2915 = vmatpush1.bf16.msra.mxu0 0
    %2916 = vmatprep.subr.bf16.mxu0 0
    %2917 = vmatpush1.bf16.msra.mxu0 0
    %2918 = vmatprep.subr.bf16.mxu0 0
    %2919 = vmatpush1.bf16.msra.mxu0 0
    %2920 = vmatprep.subr.bf16.mxu0 0
    %2921 = vmatpush1.bf16.msra.mxu0 0
    %2922 = vmatprep.subr.bf16.mxu0 0
    %2923 = vmatpush1.bf16.msra.mxu0 0
    %2924 = vmatprep.subr.bf16.mxu0 0
    %2925 = vmatpush1.bf16.msra.mxu0 0
    %2926 = vmatprep.subr.bf16.mxu0 0
    %2927 = vmatpush1.bf16.msra.mxu0 0
    %2928 = vmatprep.subr.bf16.mxu0 0
    %2929 = vmatpush1.bf16.msra.mxu0 0
    %2930 = vmatprep.subr.bf16.mxu0 0
    %2931 = vmatpush1.bf16.msra.mxu0 0
    %2932 = vmatprep.subr.bf16.mxu0 0
    %2933 = vmatpush1.bf16.msra.mxu0 0
    %2934 = vmatprep.subr.bf16.mxu0 0
    %2935 = vmatpush1.bf16.msra.mxu0 0
    %2936 = vmatprep.subr.bf16.mxu0 0
    %2937 = vmatpush1.bf16.msra.mxu0 0
    %2938 = vmatprep.mubr.bf16.mxu0 0
    %2939 = vmatmul.mubr.bf16.gmra.mrb[0].mxu0 %v2895
    %v2940 = vpop.f32.mrb[0].mxu0
    %v2941 = vadd.f32 %v2837, %v2940
    %v2942 = vpop.f32.mrb[0].mxu0
    %v2943 = vpop.f32.mrb[0].mxu0
    %v2944 = vadd.f32 %v2842, %v2943
    %v2945 = vpop.f32.mrb[0].mxu0
    %2946 = vmatprep.mubr.bf16.mxu0 0
    %2947 = vmatmul.mubr.bf16.gmra.mrb[0].mxu0 %v2898
    %v2948 = vpop.f32.mrb[0].mxu0
    %v2949 = vadd.f32 %v2847, %v2948
    %v2950 = vpop.f32.mrb[0].mxu0
    %v2951 = vpop.f32.mrb[0].mxu0
    %v2952 = vadd.f32 %v2852, %v2951
    %v2953 = vpop.f32.mrb[0].mxu0
    %2954 = vmatprep.mubr.bf16.mxu0 0
    %2955 = vmatmul.mubr.bf16.gmra.mrb[0].mxu0 %v2901
    %v2956 = vpop.f32.mrb[0].mxu0
    %v2957 = vadd.f32 %v2857, %v2956
    %v2958 = vpop.f32.mrb[0].mxu0
    %v2959 = vpop.f32.mrb[0].mxu0
    %v2960 = vadd.f32 %v2862, %v2959
    %v2961 = vpop.f32.mrb[0].mxu0
    %2962 = vmatprep.mubr.bf16.mxu0 0
    %2963 = vmatmul.mubr.bf16.gmra.mrb[0].mxu0 %v2904
    %v2964 = vpop.f32.mrb[0].mxu0
    %v2965 = vadd.f32 %v2867, %v2964
    %v2966 = vpop.f32.mrb[0].mxu0
    %v2967 = vpop.f32.mrb[0].mxu0
    %v2968 = vadd.f32 %v2872, %v2967
    %v2969 = vpop.f32.mrb[0].mxu0
    %2970 = vdwg.mxu0
    %v2971 = vmax.f32 %v2941, 0.0
    %v2972 = vmax.f32 %v2944, 0.0
    %v2973 = vmax.f32 %v2949, 0.0
    %v2974 = vmax.f32 %v2952, 0.0
    %v2975 = vmax.f32 %v2957, 0.0
    %v2976 = vmax.f32 %v2960, 0.0
    %v2977 = vmax.f32 %v2965, 0.0
    %v2978 = vmax.f32 %v2968, 0.0
    %s2979 = scalar_lea.vmem %s4, 128
    %v2980 = vld [vmem:[%s2979] sm:$0xf]
    %v2981 = vld [vmem:[%s2979 + $0x4] sm:$0xf]
    %v2982 = vld [vmem:[%s2979 + $0x8] sm:$0xf]
    %v2983 = vld [vmem:[%s2979 + $0xc] sm:$0xf]
    %v2984 = vld [vmem:[%s2979 + $0x10] sm:$0xf]
    %v2985 = vld [vmem:[%s2979 + $0x14] sm:$0xf]
    %v2986 = vld [vmem:[%s2979 + $0x18] sm:$0xf]
    %v2987 = vld [vmem:[%s2979 + $0x1c] sm:$0xf]
    %v2988 = vpack.c.bf16 %v2972, %v2971
    %v2989 = vpack.c.bf16 %v2974, %v2973
    %v2990 = vpack.c.bf16 %v2976, %v2975
    %v2991 = vpack.c.bf16 %v2978, %v2977
    %s2992 = scalar_lea.vmem %s5, 256
    %v2993 = vld [vmem:[%s2992] sm:$0xff]
    %v2994 = vld [vmem:[%s2992 + $0x8] sm:$0xff]
    %v2995 = vld [vmem:[%s2992 + $0x10] sm:$0xff]
    %v2996 = vld [vmem:[%s2992 + $0x18] sm:$0xff]
    %v2997 = vld [vmem:[%s2992 + $0x20] sm:$0xff]
    %v2998 = vld [vmem:[%s2992 + $0x28] sm:$0xff]
    %v2999 = vld [vmem:[%s2992 + $0x30] sm:$0xff]
    %v3000 = vld [vmem:[%s2992 + $0x38] sm:$0xff]
    %3002 = vset.pattern.permute.xlu0 0
    %3003 = vperm.xlu0 %3002, %v2993
    %v3004 = vpop.permute.xlu0 %3003
    %3007 = vset.pattern.permute.xlu0 0
    %3008 = vperm.xlu0 %3007, %v2994
    %v3009 = vpop.permute.xlu0 %3008
    %3012 = vset.pattern.permute.xlu0 0
    %3013 = vperm.xlu0 %3012, %v2995
    %v3014 = vpop.permute.xlu0 %3013
    %3017 = vset.pattern.permute.xlu0 0
    %3018 = vperm.xlu0 %3017, %v2996
    %v3019 = vpop.permute.xlu0 %3018
    %3022 = vset.pattern.permute.xlu0 0
    %3023 = vperm.xlu0 %3022, %v2997
    %v3024 = vpop.permute.xlu0 %3023
    %3027 = vset.pattern.permute.xlu0 0
    %3028 = vperm.xlu0 %3027, %v2998
    %v3029 = vpop.permute.xlu0 %3028
    %3032 = vset.pattern.permute.xlu0 0
    %3033 = vperm.xlu0 %3032, %v2999
    %v3034 = vpop.permute.xlu0 %3033
    %3037 = vset.pattern.permute.xlu0 0
    %3038 = vperm.xlu0 %3037, %v3000
    %v3039 = vpop.permute.xlu0 %3038
    %v3049 = vunpack.c.l.b16 %v2980
    %v3050 = vunpack.c.l.b16 %v2981
    %v3051 = vunpack.c.l.b16 %v2982
    %v3052 = vunpack.c.l.b16 %v2983
    %v3053 = vunpack.c.l.b16 %v2984
    %v3054 = vunpack.c.l.b16 %v2985
    %v3055 = vunpack.c.l.b16 %v2986
    %v3056 = vunpack.c.l.b16 %v2987
    %v3057 = vpack.c.b16 %v3050, %v3049
    %v3058 = vpack.c.b16 %v3052, %v3051
    %v3059 = vpack.c.b16 %v3054, %v3053
    %v3060 = vpack.c.b16 %v3056, %v3055
    %v3062 = vsel %vm286, %v3057, 0
    %v3065 = vsel %vm286, %v3058, 0
    %v3068 = vsel %vm286, %v3059, 0
    %v3071 = vsel %vm286, %v3060, 0
    %3073 = vmatprep.subr.bf16.mxu0 0
    %3074 = vmatpush1.bf16.msra.mxu0 %v2988
    %3075 = vmatprep.subr.bf16.mxu0 0
    %3076 = vmatpush1.bf16.msra.mxu0 %v2989
    %3077 = vmatprep.subr.bf16.mxu0 0
    %3078 = vmatpush1.bf16.msra.mxu0 %v2990
    %3079 = vmatprep.subr.bf16.mxu0 0
    %3080 = vmatpush1.bf16.msra.mxu0 %v2991
    %3081 = vmatprep.subr.bf16.mxu0 0
    %3082 = vmatpush1.bf16.msra.mxu0 0
    %3083 = vmatprep.subr.bf16.mxu0 0
    %3084 = vmatpush1.bf16.msra.mxu0 0
    %3085 = vmatprep.subr.bf16.mxu0 0
    %3086 = vmatpush1.bf16.msra.mxu0 0
    %3087 = vmatprep.subr.bf16.mxu0 0
    %3088 = vmatpush1.bf16.msra.mxu0 0
    %3089 = vmatprep.subr.bf16.mxu0 0
    %3090 = vmatpush1.bf16.msra.mxu0 0
    %3091 = vmatprep.subr.bf16.mxu0 0
    %3092 = vmatpush1.bf16.msra.mxu0 0
    %3093 = vmatprep.subr.bf16.mxu0 0
    %3094 = vmatpush1.bf16.msra.mxu0 0
    %3095 = vmatprep.subr.bf16.mxu0 0
    %3096 = vmatpush1.bf16.msra.mxu0 0
    %3097 = vmatprep.subr.bf16.mxu0 0
    %3098 = vmatpush1.bf16.msra.mxu0 0
    %3099 = vmatprep.subr.bf16.mxu0 0
    %3100 = vmatpush1.bf16.msra.mxu0 0
    %3101 = vmatprep.subr.bf16.mxu0 0
    %3102 = vmatpush1.bf16.msra.mxu0 0
    %3103 = vmatprep.subr.bf16.mxu0 0
    %3104 = vmatpush1.bf16.msra.mxu0 0
    %3105 = vmatprep.mubr.bf16.mxu0 0
    %3106 = vmatmul.mubr.bf16.gmra.mrb[0].mxu0 %v3062
    %v3107 = vpop.f32.mrb[0].mxu0
    %v3108 = vadd.f32 %v3004, %v3107
    %v3109 = vpop.f32.mrb[0].mxu0
    %v3110 = vpop.f32.mrb[0].mxu0
    %v3111 = vadd.f32 %v3009, %v3110
    %v3112 = vpop.f32.mrb[0].mxu0
    %3113 = vmatprep.mubr.bf16.mxu0 0
    %3114 = vmatmul.mubr.bf16.gmra.mrb[0].mxu0 %v3065
    %v3115 = vpop.f32.mrb[0].mxu0
    %v3116 = vadd.f32 %v3014, %v3115
    %v3117 = vpop.f32.mrb[0].mxu0
    %v3118 = vpop.f32.mrb[0].mxu0
    %v3119 = vadd.f32 %v3019, %v3118
    %v3120 = vpop.f32.mrb[0].mxu0
    %3121 = vmatprep.mubr.bf16.mxu0 0
    %3122 = vmatmul.mubr.bf16.gmra.mrb[0].mxu0 %v3068
    %v3123 = vpop.f32.mrb[0].mxu0
    %v3124 = vadd.f32 %v3024, %v3123
    %v3125 = vpop.f32.mrb[0].mxu0
    %v3126 = vpop.f32.mrb[0].mxu0
    %v3127 = vadd.f32 %v3029, %v3126
    %v3128 = vpop.f32.mrb[0].mxu0
    %3129 = vmatprep.mubr.bf16.mxu0 0
    %3130 = vmatmul.mubr.bf16.gmra.mrb[0].mxu0 %v3071
    %v3131 = vpop.f32.mrb[0].mxu0
    %v3132 = vadd.f32 %v3034, %v3131
    %v3133 = vpop.f32.mrb[0].mxu0
    %v3134 = vpop.f32.mrb[0].mxu0
    %v3135 = vadd.f32 %v3039, %v3134
    %v3136 = vpop.f32.mrb[0].mxu0
    %3137 = vdwg.mxu0
    %v3138 = vmax.f32 %v3108, 0.0
    %v3139 = vmax.f32 %v3111, 0.0
    %v3140 = vmax.f32 %v3116, 0.0
    %v3141 = vmax.f32 %v3119, 0.0
    %v3142 = vmax.f32 %v3124, 0.0
    %v3143 = vmax.f32 %v3127, 0.0
    %v3144 = vmax.f32 %v3132, 0.0
    %v3145 = vmax.f32 %v3135, 0.0
    %s3146 = scalar_lea.vmem %s6, 128
    %v3147 = vld [vmem:[%s3146] sm:$0xf]
    %v3148 = vld [vmem:[%s3146 + $0x4] sm:$0xf]
    %v3149 = vld [vmem:[%s3146 + $0x8] sm:$0xf]
    %v3150 = vld [vmem:[%s3146 + $0xc] sm:$0xf]
    %v3151 = vld [vmem:[%s3146 + $0x10] sm:$0xf]
    %v3152 = vld [vmem:[%s3146 + $0x14] sm:$0xf]
    %v3153 = vld [vmem:[%s3146 + $0x18] sm:$0xf]
    %v3154 = vld [vmem:[%s3146 + $0x1c] sm:$0xf]
    %v3155 = vpack.c.bf16 %v3139, %v3138
    %v3156 = vpack.c.bf16 %v3141, %v3140
    %v3157 = vpack.c.bf16 %v3143, %v3142
    %v3158 = vpack.c.bf16 %v3145, %v3144
    %s3159 = scalar_lea.vmem %s7, 256
    %v3160 = vld [vmem:[%s3159] sm:$0xff]
    %v3161 = vld [vmem:[%s3159 + $0x8] sm:$0xff]
    %v3162 = vld [vmem:[%s3159 + $0x10] sm:$0xff]
    %v3163 = vld [vmem:[%s3159 + $0x18] sm:$0xff]
    %v3164 = vld [vmem:[%s3159 + $0x20] sm:$0xff]
    %v3165 = vld [vmem:[%s3159 + $0x28] sm:$0xff]
    %v3166 = vld [vmem:[%s3159 + $0x30] sm:$0xff]
    %v3167 = vld [vmem:[%s3159 + $0x38] sm:$0xff]
    %3169 = vset.pattern.permute.xlu0 0
    %3170 = vperm.xlu0 %3169, %v3160
    %v3171 = vpop.permute.xlu0 %3170
    %3174 = vset.pattern.permute.xlu0 0
    %3175 = vperm.xlu0 %3174, %v3161
    %v3176 = vpop.permute.xlu0 %3175
    %3179 = vset.pattern.permute.xlu0 0
    %3180 = vperm.xlu0 %3179, %v3162
    %v3181 = vpop.permute.xlu0 %3180
    %3184 = vset.pattern.permute.xlu0 0
    %3185 = vperm.xlu0 %3184, %v3163
    %v3186 = vpop.permute.xlu0 %3185
    %3189 = vset.pattern.permute.xlu0 0
    %3190 = vperm.xlu0 %3189, %v3164
    %v3191 = vpop.permute.xlu0 %3190
    %3194 = vset.pattern.permute.xlu0 0
    %3195 = vperm.xlu0 %3194, %v3165
    %v3196 = vpop.permute.xlu0 %3195
    %3199 = vset.pattern.permute.xlu0 0
    %3200 = vperm.xlu0 %3199, %v3166
    %v3201 = vpop.permute.xlu0 %3200
    %3204 = vset.pattern.permute.xlu0 0
    %3205 = vperm.xlu0 %3204, %v3167
    %v3206 = vpop.permute.xlu0 %3205
    %v3216 = vunpack.c.l.b16 %v3147
    %v3217 = vunpack.c.l.b16 %v3148
    %v3218 = vunpack.c.l.b16 %v3149
    %v3219 = vunpack.c.l.b16 %v3150
    %v3220 = vunpack.c.l.b16 %v3151
    %v3221 = vunpack.c.l.b16 %v3152
    %v3222 = vunpack.c.l.b16 %v3153
    %v3223 = vunpack.c.l.b16 %v3154
    %v3224 = vpack.c.b16 %v3217, %v3216
    %v3225 = vpack.c.b16 %v3219, %v3218
    %v3226 = vpack.c.b16 %v3221, %v3220
    %v3227 = vpack.c.b16 %v3223, %v3222
    %v3229 = vsel %vm286, %v3224, 0
    %v3232 = vsel %vm286, %v3225, 0
    %v3235 = vsel %vm286, %v3226, 0
    %v3238 = vsel %vm286, %v3227, 0
    %3240 = vmatprep.subr.bf16.mxu0 0
    %3241 = vmatpush1.bf16.msra.mxu0 %v3155
    %3242 = vmatprep.subr.bf16.mxu0 0
    %3243 = vmatpush1.bf16.msra.mxu0 %v3156
    %3244 = vmatprep.subr.bf16.mxu0 0
    %3245 = vmatpush1.bf16.msra.mxu0 %v3157
    %3246 = vmatprep.subr.bf16.mxu0 0
    %3247 = vmatpush1.bf16.msra.mxu0 %v3158
    %3248 = vmatprep.subr.bf16.mxu0 0
    %3249 = vmatpush1.bf16.msra.mxu0 0
    %3250 = vmatprep.subr.bf16.mxu0 0
    %3251 = vmatpush1.bf16.msra.mxu0 0
    %3252 = vmatprep.subr.bf16.mxu0 0
    %3253 = vmatpush1.bf16.msra.mxu0 0
    %3254 = vmatprep.subr.bf16.mxu0 0
    %3255 = vmatpush1.bf16.msra.mxu0 0
    %3256 = vmatprep.subr.bf16.mxu0 0
    %3257 = vmatpush1.bf16.msra.mxu0 0
    %3258 = vmatprep.subr.bf16.mxu0 0
    %3259 = vmatpush1.bf16.msra.mxu0 0
    %3260 = vmatprep.subr.bf16.mxu0 0
    %3261 = vmatpush1.bf16.msra.mxu0 0
    %3262 = vmatprep.subr.bf16.mxu0 0
    %3263 = vmatpush1.bf16.msra.mxu0 0
    %3264 = vmatprep.subr.bf16.mxu0 0
    %3265 = vmatpush1.bf16.msra.mxu0 0
    %3266 = vmatprep.subr.bf16.mxu0 0
    %3267 = vmatpush1.bf16.msra.mxu0 0
    %3268 = vmatprep.subr.bf16.mxu0 0
    %3269 = vmatpush1.bf16.msra.mxu0 0
    %3270 = vmatprep.subr.bf16.mxu0 0
    %3271 = vmatpush1.bf16.msra.mxu0 0
    %3272 = vmatprep.mubr.bf16.mxu0 0
    %3273 = vmatmul.mubr.bf16.gmra.mrb[0].mxu0 %v3229
    %v3274 = vpop.f32.mrb[0].mxu0
    %v3275 = vadd.f32 %v3171, %v3274
    %v3276 = vpop.f32.mrb[0].mxu0
    %v3277 = vpop.f32.mrb[0].mxu0
    %v3278 = vadd.f32 %v3176, %v3277
    %v3279 = vpop.f32.mrb[0].mxu0
    %3280 = vmatprep.mubr.bf16.mxu0 0
    %3281 = vmatmul.mubr.bf16.gmra.mrb[0].mxu0 %v3232
    %v3282 = vpop.f32.mrb[0].mxu0
    %v3283 = vadd.f32 %v3181, %v3282
    %v3284 = vpop.f32.mrb[0].mxu0
    %v3285 = vpop.f32.mrb[0].mxu0
    %v3286 = vadd.f32 %v3186, %v3285
    %v3287 = vpop.f32.mrb[0].mxu0
    %3288 = vmatprep.mubr.bf16.mxu0 0
    %3289 = vmatmul.mubr.bf16.gmra.mrb[0].mxu0 %v3235
    %v3290 = vpop.f32.mrb[0].mxu0
    %v3291 = vadd.f32 %v3191, %v3290
    %v3292 = vpop.f32.mrb[0].mxu0
    %v3293 = vpop.f32.mrb[0].mxu0
    %v3294 = vadd.f32 %v3196, %v3293
    %v3295 = vpop.f32.mrb[0].mxu0
    %3296 = vmatprep.mubr.bf16.mxu0 0
    %3297 = vmatmul.mubr.bf16.gmra.mrb[0].mxu0 %v3238
    %v3298 = vpop.f32.mrb[0].mxu0
    %v3299 = vadd.f32 %v3201, %v3298
    %v3300 = vpop.f32.mrb[0].mxu0
    %v3301 = vpop.f32.mrb[0].mxu0
    %v3302 = vadd.f32 %v3206, %v3301
    %v3303 = vpop.f32.mrb[0].mxu0
    %3304 = vdwg.mxu0
    %v3305 = vmax.f32 %v3275, 0.0
    %v3306 = vmax.f32 %v3278, 0.0
    %v3307 = vmax.f32 %v3283, 0.0
    %v3308 = vmax.f32 %v3286, 0.0
    %v3309 = vmax.f32 %v3291, 0.0
    %v3310 = vmax.f32 %v3294, 0.0
    %v3311 = vmax.f32 %v3299, 0.0
    %v3312 = vmax.f32 %v3302, 0.0
    %s3313 = scalar_lea.vmem %s8, 64
    %v3314 = vld [vmem:[%s3313] sm:$0xf]
    %v3315 = vld [vmem:[%s3313 + $0x4] sm:$0xf]
    %v3316 = vld [vmem:[%s3313 + $0x8] sm:$0xf]
    %v3317 = vld [vmem:[%s3313 + $0xc] sm:$0xf]
    %v3318 = vpack.c.bf16 %v3306, %v3305
    %v3319 = vpack.c.bf16 %v3308, %v3307
    %v3320 = vpack.c.bf16 %v3310, %v3309
    %v3321 = vpack.c.bf16 %v3312, %v3311
    %s3322 = scalar_lea.vmem %s9, 128
    %v3323 = vld [vmem:[%s3322] sm:$0xff]
    %v3324 = vld [vmem:[%s3322 + $0x8] sm:$0xff]
    %v3325 = vld [vmem:[%s3322 + $0x10] sm:$0xff]
    %v3326 = vld [vmem:[%s3322 + $0x18] sm:$0xff]
    %3328 = vset.pattern.permute.xlu0 0
    %3329 = vperm.xlu0 %3328, %v3323
    %v3330 = vpop.permute.xlu0 %3329
    %3333 = vset.pattern.permute.xlu0 0
    %3334 = vperm.xlu0 %3333, %v3324
    %v3335 = vpop.permute.xlu0 %3334
    %3338 = vset.pattern.permute.xlu0 0
    %3339 = vperm.xlu0 %3338, %v3325
    %v3340 = vpop.permute.xlu0 %3339
    %3343 = vset.pattern.permute.xlu0 0
    %3344 = vperm.xlu0 %3343, %v3326
    %v3345 = vpop.permute.xlu0 %3344
    %v3351 = vunpack.c.l.b16 %v3314
    %v3352 = vunpack.c.l.b16 %v3315
    %v3353 = vunpack.c.l.b16 %v3316
    %v3354 = vunpack.c.l.b16 %v3317
    %v3355 = vpack.c.b16 %v3352, %v3351
    %v3356 = vpack.c.b16 %v3354, %v3353
    %v3358 = vsel %vm286, %v3355, 0
    %v3361 = vsel %vm286, %v3356, 0
    %3363 = vmatprep.subr.bf16.mxu0 0
    %3364 = vmatpush1.bf16.msra.mxu0 %v3318
    %3365 = vmatprep.subr.bf16.mxu0 0
    %3366 = vmatpush1.bf16.msra.mxu0 %v3319
    %3367 = vmatprep.subr.bf16.mxu0 0
    %3368 = vmatpush1.bf16.msra.mxu0 %v3320
    %3369 = vmatprep.subr.bf16.mxu0 0
    %3370 = vmatpush1.bf16.msra.mxu0 %v3321
    %3371 = vmatprep.subr.bf16.mxu0 0
    %3372 = vmatpush1.bf16.msra.mxu0 0
    %3373 = vmatprep.subr.bf16.mxu0 0
    %3374 = vmatpush1.bf16.msra.mxu0 0
    %3375 = vmatprep.subr.bf16.mxu0 0
    %3376 = vmatpush1.bf16.msra.mxu0 0
    %3377 = vmatprep.subr.bf16.mxu0 0
    %3378 = vmatpush1.bf16.msra.mxu0 0
    %3379 = vmatprep.subr.bf16.mxu0 0
    %3380 = vmatpush1.bf16.msra.mxu0 0
    %3381 = vmatprep.subr.bf16.mxu0 0
    %3382 = vmatpush1.bf16.msra.mxu0 0
    %3383 = vmatprep.subr.bf16.mxu0 0
    %3384 = vmatpush1.bf16.msra.mxu0 0
    %3385 = vmatprep.subr.bf16.mxu0 0
    %3386 = vmatpush1.bf16.msra.mxu0 0
    %3387 = vmatprep.subr.bf16.mxu0 0
    %3388 = vmatpush1.bf16.msra.mxu0 0
    %3389 = vmatprep.subr.bf16.mxu0 0
    %3390 = vmatpush1.bf16.msra.mxu0 0
    %3391 = vmatprep.subr.bf16.mxu0 0
    %3392 = vmatpush1.bf16.msra.mxu0 0
    %3393 = vmatprep.subr.bf16.mxu0 0
    %3394 = vmatpush1.bf16.msra.mxu0 0
    %3395 = vmatprep.mubr.bf16.mxu0 0
    %3396 = vmatmul.mubr.bf16.gmra.mrb[0].mxu0 %v3358
    %v3397 = vpop.f32.mrb[0].mxu0
    %v3398 = vadd.f32 %v3330, %v3397
    %v3399 = vpop.f32.mrb[0].mxu0
    %v3400 = vpop.f32.mrb[0].mxu0
    %v3401 = vadd.f32 %v3335, %v3400
    %v3402 = vpop.f32.mrb[0].mxu0
    %3403 = vmatprep.mubr.bf16.mxu0 0
    %3404 = vmatmul.mubr.bf16.gmra.mrb[0].mxu0 %v3361
    %v3405 = vpop.f32.mrb[0].mxu0
    %v3406 = vadd.f32 %v3340, %v3405
    %v3407 = vpop.f32.mrb[0].mxu0
    %v3408 = vpop.f32.mrb[0].mxu0
    %v3409 = vadd.f32 %v3345, %v3408
    %v3410 = vpop.f32.mrb[0].mxu0
    %3411 = vdwg.mxu0
    %3412 = vmatprep.subr.mxu0 0.0
    %3413 = vmatpush1.msra.mxu0 %v2800
    %3414 = vmatprep.subr.mxu0 0.0
    %3415 = vmatpush1.msra.mxu0 %v2801
    %3416 = vmatprep.subr.mxu0 0.0
    %3417 = vmatpush1.msra.mxu0 0.0
    %3418 = vmatprep.subr.mxu0 0.0
    %3419 = vmatpush1.msra.mxu0 0.0
    %3420 = vmatprep.subr.mxu0 0.0
    %3421 = vmatpush1.msra.mxu0 0.0
    %3422 = vmatprep.subr.mxu0 0.0
    %3423 = vmatpush1.msra.mxu0 0.0
    %3424 = vmatprep.subr.mxu0 0.0
    %3425 = vmatpush1.msra.mxu0 0.0
    %3426 = vmatprep.subr.mxu0 0.0
    %3427 = vmatpush1.msra.mxu0 0.0
    %3428 = vmatprep.subr.mxu0 0.0
    %3429 = vmatpush1.msra.mxu0 0.0
    %3430 = vmatprep.subr.mxu0 0.0
    %3431 = vmatpush1.msra.mxu0 0.0
    %3432 = vmatprep.subr.mxu0 0.0
    %3433 = vmatpush1.msra.mxu0 0.0
    %3434 = vmatprep.subr.mxu0 0.0
    %3435 = vmatpush1.msra.mxu0 0.0
    %3436 = vmatprep.subr.mxu0 0.0
    %3437 = vmatpush1.msra.mxu0 0.0
    %3438 = vmatprep.subr.mxu0 0.0
    %3439 = vmatpush1.msra.mxu0 0.0
    %3440 = vmatprep.subr.mxu0 0.0
    %3441 = vmatpush1.msra.mxu0 0.0
    %3442 = vmatprep.subr.mxu0 0.0
    %3443 = vmatpush1.msra.mxu0 0.0
    %3444 = vmatprep.subr.mxu0 0.0
    %3445 = vmatpush1.msra.mxu0 0.0
    %3446 = vmatprep.subr.mxu0 0.0
    %3447 = vmatpush1.msra.mxu0 0.0
    %3448 = vmatprep.subr.mxu0 0.0
    %3449 = vmatpush1.msra.mxu0 0.0
    %3450 = vmatprep.subr.mxu0 0.0
    %3451 = vmatpush1.msra.mxu0 0.0
    %3452 = vmatprep.subr.mxu0 0.0
    %3453 = vmatpush1.msra.mxu0 0.0
    %3454 = vmatprep.subr.mxu0 0.0
    %3455 = vmatpush1.msra.mxu0 0.0
    %3456 = vmatprep.subr.mxu0 0.0
    %3457 = vmatpush1.msra.mxu0 0.0
    %3458 = vmatprep.subr.mxu0 0.0
    %3459 = vmatpush1.msra.mxu0 0.0
    %3460 = vmatprep.subr.mxu0 0.0
    %3461 = vmatpush1.msra.mxu0 0.0
    %3462 = vmatprep.subr.mxu0 0.0
    %3463 = vmatpush1.msra.mxu0 0.0
    %3464 = vmatprep.subr.mxu0 0.0
    %3465 = vmatpush1.msra.mxu0 0.0
    %3466 = vmatprep.subr.mxu0 0.0
    %3467 = vmatpush1.msra.mxu0 0.0
    %3468 = vmatprep.subr.mxu0 0.0
    %3469 = vmatpush1.msra.mxu0 0.0
    %3470 = vmatprep.subr.mxu0 0.0
    %3471 = vmatpush1.msra.mxu0 0.0
    %3472 = vmatprep.subr.mxu0 0.0
    %3473 = vmatpush1.msra.mxu0 0.0
    %3474 = vmatprep.subr.mxu0 0.0
    %3475 = vmatpush1.msra.mxu0 0.0
    %3476 = vmatprep.mubr.f32.mxu0 0.0
    %3477 = vmatmul.mubr.f32.gmra.mrb[0].mxu0 %v635
    %v3478 = vpop.f32.mrb[0].mxu0
    %v3479 = vadd.f32 0.0, %v3478
    %v3480 = vpop.f32.mrb[0].mxu0
    %3481 = vmatprep.mubr.f32.mxu0 0.0
    %3482 = vmatmul.mubr.f32.gmra.mrb[0].mxu0 %v638
    %v3483 = vpop.f32.mrb[0].mxu0
    %v3484 = vadd.f32 0.0, %v3483
    %v3485 = vpop.f32.mrb[0].mxu0
    %3486 = vdwg.mxu0
    %v3487 = vmul.f32 %v3398, 1.442695
    %v3488 = vpow.pop %v3487
    %v3489 = vmul.f32 %v3401, 1.442695
    %v3490 = vpow.pop %v3489
    %v3491 = vmul.f32 %v3479, %v3488
    %v3492 = vmul.f32 %v3484, %v3490
    %v3493 = vadd.f32 %v3491, %v3406
    %v3494 = vadd.f32 %v3492, %v3409
    %v3495 = vsel %vm723, %v3398, 0.0
    %v3496 = vsel %vm723, %v3401, 0.0
    %v3497 = vadd.f32 %v3495, %v3496
    %v3498 = vrot.slane %v3497, 4
    %v3499 = vadd.f32 %v3497, %v3498
    %v3500 = vrot.slane %v3499, 2
    %v3501 = vadd.f32 %v3499, %v3500
    %v3502 = vrot.slane %v3501, 1
    %v3503 = vadd.f32 %v3501, %v3502
    %v3504 = vadd.f32 %v2811, %v3503
    %s3505 = scalar_lea.vmem %s10, 64
    %3506 = vst.msk [vmem:[%s3505] sm:$0xff] %vm723, %v3493
    %3507 = vst.msk [vmem:[%s3505 + $0x8] sm:$0xff] %vm723, %v3494
    %v3508 = vmul.f32 %v3493, %v3493
    %v3509 = vmul.f32 %v3494, %v3494
    %v3510 = vsel %vm723, %v3508, 0.0
    %v3511 = vsel %vm723, %v3509, 0.0
    %v3512 = vadd.f32 %v3510, %v3511
    %v3513 = vrot.slane %v3512, 4
    %v3514 = vadd.f32 %v3512, %v3513
    %v3515 = vrot.slane %v3514, 2
    %v3516 = vadd.f32 %v3514, %v3515
    %v3517 = vrot.slane %v3516, 1
    %v3518 = vadd.f32 %v3516, %v3517
    %v3519 = vmul.f32 %v3518, -0.5
    %v3520 = vsub.f32 %v3519, 14.703016
    %vm3521 = vcmask 57344
    %3522 = vst.msk [vmem:[#allocation2] sm:$0x1] %vm3521, %v3504
    %3523 = vst.msk [vmem:[#allocation2 + $0x1] sm:$0x1] %vm3521, %v3520
    // Predicated region
    $region42: #{tpu_custom_call.1} parent=1 // pred_check
      _
    $region43: #{tpu_custom_call.1} parent=1 // pred_check_branch
      %3525 = sbr.rel (0) target = $region45
    $region44: #{tpu_custom_call.1} parent=1 // pred_region
      _
    $region45: #{tpu_custom_call.1} parent=1 // pred_fallthru
      _
    // Predicated region
    $region46: #{tpu_custom_call.1} parent=1 // pred_check
      _
    $region47: #{tpu_custom_call.1} parent=1 // pred_check_branch
      %3527 = sbr.rel (0) target = $region49
    $region48: #{tpu_custom_call.1} parent=1 // pred_region
      %s3529 = ssub.s32 32, 32
      %3530 = vsyncadd [#allocation3], %s3529
      %s3532 = sshll.u32 [#allocation2], 4
      %s3533 = int_to_ptr.vmem [resolvable:$true] %s3532
      %3535 = dma.vmem_to_hbm [thread:$0]  %s3533, 32, %s11, [#allocation3]
    $region49: #{tpu_custom_call.1} parent=1 // pred_fallthru
      _
    // Predicated region
    $region50: #{tpu_custom_call.1} parent=1 // pred_check
      _
    $region51: #{tpu_custom_call.1} parent=1 // pred_check_branch
      %3537 = sbr.rel (0) target = $region53
    $region52: #{tpu_custom_call.1} parent=1 // pred_region
      _
    $region53: #{tpu_custom_call.1} parent=1 // pred_fallthru
      _
    // Predicated region
    $region54: #{tpu_custom_call.1} parent=1 // pred_check
      _
    $region55: #{tpu_custom_call.1} parent=1 // pred_check_branch
      %3539 = sbr.rel (0) target = $region57
    $region56: #{tpu_custom_call.1} parent=1 // pred_region
      %3540 = dma.done [#allocation3], 32
    $region57: #{tpu_custom_call.1} parent=1 // pred_fallthru
      _
    %3541 = vsyncpa [#allocation3], 1

</llo_original>
